<compile_context>
chip_gen: v7x
topology: tpu7x:2x2x1
jax: 0.10.0
libtpu: 0.0.40
codegen_flags: <defaults>
</compile_context>

<pallas_src>
import jax
import jax.numpy as jnp
from jax.experimental import pallas as pl
from jax.experimental.pallas import tpu as pltpu


# ----------------------------------------------------------------------------
# Kernel 1: all n-gram encoders fused (conv+ReLU, 2x conv+ReLU transform, skip).
# Grid = (B,).  Output layout: (B, n_enc, S, H)  (== torch.cat(..., -1) after reshape,
# but the concat is never materialized -- the head kernel concatenates in registers).
# ----------------------------------------------------------------------------
def _make_encoder_kernel(S, ngrams, Lmax):
    n_enc = len(ngrams)

    def kernel(*refs):
        x_ref = refs[0]                               # (1, S, E)
        w_refs = refs[1:1 + 6 * n_enc]                # per-encoder: w1,b1,wt1,bt1,wt2,bt2
        o_ref = refs[1 + 6 * n_enc]                   # (1, n_enc, S, H)
        xpad_ref = refs[2 + 6 * n_enc]                # VMEM (S+Kmax-1, E)
        hpad_ref = refs[3 + 6 * n_enc]                # VMEM (S+Kmax-1, H)

        # Zero halos (scratch is uninitialized/persistent), place input in the middle.
        xpad_ref[...] = jnp.zeros_like(xpad_ref)
        hpad_ref[...] = jnp.zeros_like(hpad_ref)
        xpad_ref[Lmax:Lmax + S, :] = x_ref[0].astype(jnp.float32)

        def conv_same_relu(pad_ref, K, off, w, b):
            # im2col: lane-concat of the K shifted windows -> one full-depth MXU matmul.
            cols = jnp.concatenate(
                [pad_ref[off + k: off + k + S, :] for k in range(K)], axis=-1)
            acc = jnp.dot(cols, w, preferred_element_type=jnp.float32)
            return jnp.maximum(acc + b, 0.0)

        for e, K in enumerate(ngrams):
            L = (K - 1) // 2                          # PyTorch 'same': left pad
            off = Lmax - L                            # window offset inside padded scratch
            w1, b1, wt1, bt1, wt2, bt2 = w_refs[6 * e: 6 * e + 6]

            # conv1d(E->H, K, 'same') + ReLU
            c1 = conv_same_relu(xpad_ref, K, off, w1[...], b1[...])
            # transform = mlc(H, H, K, 2): two [conv 'same' + ReLU] layers
            hpad_ref[Lmax:Lmax + S, :] = c1
            t = conv_same_relu(hpad_ref, K, off, wt1[...], bt1[...])
            hpad_ref[Lmax:Lmax + S, :] = t
            t = conv_same_relu(hpad_ref, K, off, wt2[...], bt2[...])
            # skip connection: ngram_embeddings + transformed
            o_ref[0, e] = (c1 + t).astype(o_ref.dtype)

    return kernel


# ----------------------------------------------------------------------------
# Kernel 2: fused head -- downsample + 2-layer transform + residual + LayerNorm
#           + prediction MLP.  Grid = (B, S-tiles).
# ----------------------------------------------------------------------------
def _head_kernel(enc_ref, dw_ref, db_ref, w1_ref, b1_ref, w2_ref, b2_ref,
                 g_ref, be_ref, pw1_ref, pb1_ref, pw2_ref, pb2_ref, o_ref):
    n_enc = enc_ref.shape[1]
    # torch.cat(ngram_embeddings, dim=-1), done as an in-register lane concat.
    x = jnp.concatenate(
        [enc_ref[0, e].astype(jnp.float32) for e in range(n_enc)], axis=-1)

    # ngram_downsample: Linear((M-1)*H -> H) + ReLU
    down = jnp.maximum(
        jnp.dot(x, dw_ref[...], preferred_element_type=jnp.float32) + db_ref[...], 0.0)
    # transform: 2 x [Linear(H->H) + ReLU]
    t = jnp.maximum(
        jnp.dot(down, w1_ref[...], preferred_element_type=jnp.float32) + b1_ref[...], 0.0)
    t = jnp.maximum(
        jnp.dot(t, w2_ref[...], preferred_element_type=jnp.float32) + b2_ref[...], 0.0)
    # residual + LayerNorm (eps = 1e-5, PyTorch default)
    z = down + t
    mu = jnp.mean(z, axis=-1, keepdims=True)
    d = z - mu
    var = jnp.mean(d * d, axis=-1, keepdims=True)
    zn = d * jax.lax.rsqrt(var + 1e-5) * g_ref[...] + be_ref[...]
    # predictions: Linear(H->H) + ReLU, then Linear(H->C)
    h = jnp.maximum(
        jnp.dot(zn, pw1_ref[...], preferred_element_type=jnp.float32) + pb1_ref[...], 0.0)
    out = jnp.dot(h, pw2_ref[...], preferred_element_type=jnp.float32) + pb2_ref[...]
    o_ref[0] = out.astype(o_ref.dtype)


# ----------------------------------------------------------------------------
# Parameter init (deterministic, synthetic -- shapes follow the module __init__).
# ----------------------------------------------------------------------------
def init_params(key, vocab, num_classes, E, H, max_ngram):
    keys = iter(jax.random.split(key, 64))

    def dense(shape, fan_in):
        return jax.random.normal(next(keys), shape, jnp.float32) / jnp.sqrt(float(fan_in))

    params = {"embedding": dense((vocab, E), E).at[0].set(0.0)}   # padding_idx=0 -> zero row

    encoders = []
    for n in range(2, max_ngram + 1):
        encoders.append({
            "w1": dense((n, E, H), E * n), "b1": dense((H,), E * n),
            "wt1": dense((n, H, H), H * n), "bt1": dense((H,), H * n),
            "wt2": dense((n, H, H), H * n), "bt2": dense((H,), H * n),
        })
    params["encoders"] = encoders

    Hin = (max_ngram - 1) * H
    params["down_w"] = dense((Hin, H), Hin)
    params["down_b"] = dense((H,), Hin)
    params["tr_w1"] = dense((H, H), H)
    params["tr_b1"] = dense((H,), H)
    params["tr_w2"] = dense((H, H), H)
    params["tr_b2"] = dense((H,), H)
    params["ln_g"] = jnp.ones((H,), jnp.float32)
    params["ln_b"] = jnp.zeros((H,), jnp.float32)
    params["pred_w1"] = dense((H, H), H)
    params["pred_b1"] = dense((H,), H)
    params["pred_w2"] = dense((H, num_classes), H)
    params["pred_b2"] = dense((num_classes,), H)
    return params


# ----------------------------------------------------------------------------
# Full forward pass (eval mode: dropout = identity; use_lstm = False).
# ----------------------------------------------------------------------------
def segmenter_forward(params, source):
    emb = params["embedding"]
    encs = params["encoders"]
    ngrams = tuple(int(e["w1"].shape[0]) for e in encs)   # kernel sizes 2..max_ngram
    n_enc = len(encs)
    Kmax = max(ngrams)
    Lmax = (Kmax - 1) // 2
    B, S = source.shape
    E = emb.shape[1]
    H = params["down_w"].shape[1]
    C = params["pred_w2"].shape[1]

    # Embedding: real gather (padding_idx=0 row is zero in the table).
    # TODO(synk): could fuse into the encoder kernel via scalar-prefetched ids + row DMA.
    char_emb = jnp.take(emb, source, axis=0)               # (B, S, E)

    # ---------------- kernel 1: fused n-gram encoders ----------------
    w_args, w_specs = [], []
    for enc, K in zip(encs, ngrams):
        for name, shape in (("w1", (K * E, H)), ("b1", (1, H)),
                            ("wt1", (K * H, H)), ("bt1", (1, H)),
                            ("wt2", (K * H, H)), ("bt2", (1, H))):
            w_args.append(enc[name].reshape(shape))        # im2col-matching layout
            w_specs.append(pl.BlockSpec(shape, lambda b: (0, 0)))

    enc_out = pl.pallas_call(
        _make_encoder_kernel(S, ngrams, Lmax),
        out_shape=jax.ShapeDtypeStruct((B, n_enc, S, H), char_emb.dtype),
        grid=(B,),
        in_specs=[pl.BlockSpec((1, S, E), lambda b: (b, 0, 0))] + w_specs,
        out_specs=pl.BlockSpec((1, n_enc, S, H), lambda b: (b, 0, 0, 0)),
        scratch_shapes=[pltpu.VMEM((S + Kmax - 1, E), jnp.float32),
                        pltpu.VMEM((S + Kmax - 1, H), jnp.float32)],
        compiler_params=pltpu.CompilerParams(
            dimension_semantics=("parallel",),
            vmem_limit_bytes=32 * 1024 * 1024),
    )(char_emb, *w_args)

    # ---------------- kernel 2: fused head ----------------
    TILE_S = S if S <= 512 else 512
    grid = (B, pl.cdiv(S, TILE_S))

    head_weights = [
        params["down_w"], params["down_b"].reshape(1, H),
        params["tr_w1"], params["tr_b1"].reshape(1, H),
        params["tr_w2"], params["tr_b2"].reshape(1, H),
        params["ln_g"].reshape(1, H), params["ln_b"].reshape(1, H),
        params["pred_w1"], params["pred_b1"].reshape(1, H),
        params["pred_w2"], params["pred_b2"].reshape(1, C),
    ]
    head_specs = [pl.BlockSpec(w.shape, lambda b, i: (0, 0)) for w in head_weights]

    scores = pl.pallas_call(
        _head_kernel,
        out_shape=jax.ShapeDtypeStruct((B, S, C), char_emb.dtype),
        grid=grid,
        in_specs=[pl.BlockSpec((1, n_enc, TILE_S, H), lambda b, i: (b, 0, i, 0))]
                 + head_specs,
        out_specs=pl.BlockSpec((1, TILE_S, C), lambda b, i: (b, i, 0)),
        compiler_params=pltpu.CompilerParams(
            dimension_semantics=("parallel", "parallel"),
            vmem_limit_bytes=32 * 1024 * 1024),
    )(enc_out, *head_weights)
    return scores


if __name__ == "__main__":
    VOCAB, NUM_CLASSES = 20, 3
    EMB_DIM, HIDDEN_DIM, MAX_NGRAM = 16, 32, 4
    B, S = 2, 8

    key = jax.random.PRNGKey(0)
    pkey, dkey = jax.random.split(key)
    params = init_params(pkey, VOCAB, NUM_CLASSES, EMB_DIM, HIDDEN_DIM, MAX_NGRAM)

    source = jax.random.randint(dkey, (B, S), 0, VOCAB, dtype=jnp.int32)
    source = source.at[:, -2:].set(0)   # some padding tokens (padding_idx=0)

    fwd = jax.jit(segmenter_forward)
    scores = fwd(params, source)
    jax.block_until_ready(scores)
    assert scores.shape == (B, S, NUM_CLASSES)
    print("KERNEL_OK")
</pallas_src>

<mosaic_0001>
module attributes {stable_mosaic.version = 11 : i64} {
  func.func @kernel(%arg0: i32, %arg1: memref<1x8x16xf32, #tpu.memory_space<vmem>>, %arg2: memref<32x32xf32, #tpu.memory_space<vmem>>, %arg3: memref<1x32xf32, #tpu.memory_space<vmem>>, %arg4: memref<64x32xf32, #tpu.memory_space<vmem>>, %arg5: memref<1x32xf32, #tpu.memory_space<vmem>>, %arg6: memref<64x32xf32, #tpu.memory_space<vmem>>, %arg7: memref<1x32xf32, #tpu.memory_space<vmem>>, %arg8: memref<48x32xf32, #tpu.memory_space<vmem>>, %arg9: memref<1x32xf32, #tpu.memory_space<vmem>>, %arg10: memref<96x32xf32, #tpu.memory_space<vmem>>, %arg11: memref<1x32xf32, #tpu.memory_space<vmem>>, %arg12: memref<96x32xf32, #tpu.memory_space<vmem>>, %arg13: memref<1x32xf32, #tpu.memory_space<vmem>>, %arg14: memref<64x32xf32, #tpu.memory_space<vmem>>, %arg15: memref<1x32xf32, #tpu.memory_space<vmem>>, %arg16: memref<128x32xf32, #tpu.memory_space<vmem>>, %arg17: memref<1x32xf32, #tpu.memory_space<vmem>>, %arg18: memref<128x32xf32, #tpu.memory_space<vmem>>, %arg19: memref<1x32xf32, #tpu.memory_space<vmem>>, %arg20: memref<1x3x8x32xf32, #tpu.memory_space<vmem>>, %arg21: memref<11x16xf32, #tpu.memory_space<vmem>>, %arg22: memref<11x32xf32, #tpu.memory_space<vmem>>) attributes {dimension_semantics = [#tpu.dimension_semantics<parallel>], iteration_bounds = array<i64: 2>, scalar_prefetch = 0 : i64, scratch_operands = 2 : i64, tpu.core_type = #tpu.core_type<tc>, window_params = [{transform_indices = @transform_0, window_bounds = array<i64: 1, 8, 16>}, {pipeline_mode = #tpu.pipeline_mode<synchronous>, transform_indices = @transform_1, window_bounds = array<i64: 32, 32>}, {pipeline_mode = #tpu.pipeline_mode<synchronous>, transform_indices = @transform_2, window_bounds = array<i64: 1, 32>}, {pipeline_mode = #tpu.pipeline_mode<synchronous>, transform_indices = @transform_3, window_bounds = array<i64: 64, 32>}, {pipeline_mode = #tpu.pipeline_mode<synchronous>, transform_indices = @transform_4, window_bounds = array<i64: 1, 32>}, {pipeline_mode = #tpu.pipeline_mode<synchronous>, transform_indices = @transform_5, window_bounds = array<i64: 64, 32>}, {pipeline_mode = #tpu.pipeline_mode<synchronous>, transform_indices = @transform_6, window_bounds = array<i64: 1, 32>}, {pipeline_mode = #tpu.pipeline_mode<synchronous>, transform_indices = @transform_7, window_bounds = array<i64: 48, 32>}, {pipeline_mode = #tpu.pipeline_mode<synchronous>, transform_indices = @transform_8, window_bounds = array<i64: 1, 32>}, {pipeline_mode = #tpu.pipeline_mode<synchronous>, transform_indices = @transform_9, window_bounds = array<i64: 96, 32>}, {pipeline_mode = #tpu.pipeline_mode<synchronous>, transform_indices = @transform_10, window_bounds = array<i64: 1, 32>}, {pipeline_mode = #tpu.pipeline_mode<synchronous>, transform_indices = @transform_11, window_bounds = array<i64: 96, 32>}, {pipeline_mode = #tpu.pipeline_mode<synchronous>, transform_indices = @transform_12, window_bounds = array<i64: 1, 32>}, {pipeline_mode = #tpu.pipeline_mode<synchronous>, transform_indices = @transform_13, window_bounds = array<i64: 64, 32>}, {pipeline_mode = #tpu.pipeline_mode<synchronous>, transform_indices = @transform_14, window_bounds = array<i64: 1, 32>}, {pipeline_mode = #tpu.pipeline_mode<synchronous>, transform_indices = @transform_15, window_bounds = array<i64: 128, 32>}, {pipeline_mode = #tpu.pipeline_mode<synchronous>, transform_indices = @transform_16, window_bounds = array<i64: 1, 32>}, {pipeline_mode = #tpu.pipeline_mode<synchronous>, transform_indices = @transform_17, window_bounds = array<i64: 128, 32>}, {pipeline_mode = #tpu.pipeline_mode<synchronous>, transform_indices = @transform_18, window_bounds = array<i64: 1, 32>}, {transform_indices = @transform_19, window_bounds = array<i64: 1, 3, 8, 32>}]} {
    %cst = arith.constant 0.000000e+00 : f32
    %0 = vector.broadcast %cst : f32 to vector<11x16xf32>
    %c0 = arith.constant 0 : index
    %c0_0 = arith.constant 0 : index
    %1 = vector.load %arg21[%c0, %c0_0] : memref<11x16xf32, #tpu.memory_space<vmem>>, vector<11x16xf32>
    tpu.vector_store %arg21[%c0, %c0_0], %0 {strides = array<i32>} : memref<11x16xf32, #tpu.memory_space<vmem>>, vector<11x16xf32>,
    %cst_1 = arith.constant 0.000000e+00 : f32
    %2 = vector.broadcast %cst_1 : f32 to vector<11x32xf32>
    %c0_2 = arith.constant 0 : index
    %c0_3 = arith.constant 0 : index
    %3 = vector.load %arg22[%c0_2, %c0_3] : memref<11x32xf32, #tpu.memory_space<vmem>>, vector<11x32xf32>
    tpu.vector_store %arg22[%c0_2, %c0_3], %2 {strides = array<i32>} : memref<11x32xf32, #tpu.memory_space<vmem>>, vector<11x32xf32>,
    %c0_4 = arith.constant 0 : index
    %c0_5 = arith.constant 0 : index
    %c0_6 = arith.constant 0 : index
    %4 = vector.load %arg1[%c0_4, %c0_5, %c0_6] : memref<1x8x16xf32, #tpu.memory_space<vmem>>, vector<1x8x16xf32>
    %5 = vector.shape_cast %4 : vector<1x8x16xf32> to vector<8x16xf32>
    %c1 = arith.constant 1 : index
    %c0_7 = arith.constant 0 : index
    %6 = vector.load %arg21[%c1, %c0_7] : memref<11x16xf32, #tpu.memory_space<vmem>>, vector<8x16xf32>
    tpu.vector_store %arg21[%c1, %c0_7], %5 {strides = array<i32>} : memref<11x16xf32, #tpu.memory_space<vmem>>, vector<8x16xf32>,
    %c0_8 = arith.constant 0 : index
    %c0_9 = arith.constant 0 : index
    %7 = vector.load %arg2[%c0_8, %c0_9] : memref<32x32xf32, #tpu.memory_space<vmem>>, vector<32x32xf32>
    %c0_10 = arith.constant 0 : index
    %c0_11 = arith.constant 0 : index
    %8 = vector.load %arg3[%c0_10, %c0_11] : memref<1x32xf32, #tpu.memory_space<vmem>>, vector<1x32xf32>
    %c1_12 = arith.constant 1 : index
    %c0_13 = arith.constant 0 : index
    %9 = vector.load %arg21[%c1_12, %c0_13] : memref<11x16xf32, #tpu.memory_space<vmem>>, vector<8x16xf32>
    %c2 = arith.constant 2 : index
    %c0_14 = arith.constant 0 : index
    %10 = vector.load %arg21[%c2, %c0_14] : memref<11x16xf32, #tpu.memory_space<vmem>>, vector<8x16xf32>
    %11 = tpu.concatenate %9, %10 in 1 : vector<8x16xf32>, vector<8x16xf32> -> vector<8x32xf32>
    %cst_15 = arith.constant dense<0.000000e+00> : vector<8x32xf32>
    %12 = tpu.matmul %11, %7, %cst_15 {dimension_numbers = #tpu.dot_dimension_numbers<[1], [0], [0], [1], [0, 0, 1, 1], [], []>} : vector<8x32xf32>, vector<32x32xf32>, vector<8x32xf32> -> vector<8x32xf32>
    %13 = vector.broadcast %8 : vector<1x32xf32> to vector<8x32xf32>
    %14 = arith.addf %12, %13 : vector<8x32xf32>
    %cst_16 = arith.constant 0.000000e+00 : f32
    %15 = vector.broadcast %cst_16 : f32 to vector<8x32xf32>
    %16 = arith.maximumf %14, %15 : vector<8x32xf32>
    %c1_17 = arith.constant 1 : index
    %c0_18 = arith.constant 0 : index
    %17 = vector.load %arg22[%c1_17, %c0_18] : memref<11x32xf32, #tpu.memory_space<vmem>>, vector<8x32xf32>
    tpu.vector_store %arg22[%c1_17, %c0_18], %16 {strides = array<i32>} : memref<11x32xf32, #tpu.memory_space<vmem>>, vector<8x32xf32>,
    %c0_19 = arith.constant 0 : index
    %c0_20 = arith.constant 0 : index
    %18 = vector.load %arg4[%c0_19, %c0_20] : memref<64x32xf32, #tpu.memory_space<vmem>>, vector<64x32xf32>
    %c0_21 = arith.constant 0 : index
    %c0_22 = arith.constant 0 : index
    %19 = vector.load %arg5[%c0_21, %c0_22] : memref<1x32xf32, #tpu.memory_space<vmem>>, vector<1x32xf32>
    %c1_23 = arith.constant 1 : index
    %c0_24 = arith.constant 0 : index
    %20 = vector.load %arg22[%c1_23, %c0_24] : memref<11x32xf32, #tpu.memory_space<vmem>>, vector<8x32xf32>
    %c2_25 = arith.constant 2 : index
    %c0_26 = arith.constant 0 : index
    %21 = vector.load %arg22[%c2_25, %c0_26] : memref<11x32xf32, #tpu.memory_space<vmem>>, vector<8x32xf32>
    %22 = tpu.concatenate %20, %21 in 1 : vector<8x32xf32>, vector<8x32xf32> -> vector<8x64xf32>
    %cst_27 = arith.constant dense<0.000000e+00> : vector<8x32xf32>
    %23 = tpu.matmul %22, %18, %cst_27 {dimension_numbers = #tpu.dot_dimension_numbers<[1], [0], [0], [1], [0, 0, 1, 1], [], []>} : vector<8x64xf32>, vector<64x32xf32>, vector<8x32xf32> -> vector<8x32xf32>
    %24 = vector.broadcast %19 : vector<1x32xf32> to vector<8x32xf32>
    %25 = arith.addf %23, %24 : vector<8x32xf32>
    %cst_28 = arith.constant 0.000000e+00 : f32
    %26 = vector.broadcast %cst_28 : f32 to vector<8x32xf32>
    %27 = arith.maximumf %25, %26 : vector<8x32xf32>
    %c1_29 = arith.constant 1 : index
    %c0_30 = arith.constant 0 : index
    %28 = vector.load %arg22[%c1_29, %c0_30] : memref<11x32xf32, #tpu.memory_space<vmem>>, vector<8x32xf32>
    tpu.vector_store %arg22[%c1_29, %c0_30], %27 {strides = array<i32>} : memref<11x32xf32, #tpu.memory_space<vmem>>, vector<8x32xf32>,
    %c0_31 = arith.constant 0 : index
    %c0_32 = arith.constant 0 : index
    %29 = vector.load %arg6[%c0_31, %c0_32] : memref<64x32xf32, #tpu.memory_space<vmem>>, vector<64x32xf32>
    %c0_33 = arith.constant 0 : index
    %c0_34 = arith.constant 0 : index
    %30 = vector.load %arg7[%c0_33, %c0_34] : memref<1x32xf32, #tpu.memory_space<vmem>>, vector<1x32xf32>
    %c1_35 = arith.constant 1 : index
    %c0_36 = arith.constant 0 : index
    %31 = vector.load %arg22[%c1_35, %c0_36] : memref<11x32xf32, #tpu.memory_space<vmem>>, vector<8x32xf32>
    %c2_37 = arith.constant 2 : index
    %c0_38 = arith.constant 0 : index
    %32 = vector.load %arg22[%c2_37, %c0_38] : memref<11x32xf32, #tpu.memory_space<vmem>>, vector<8x32xf32>
    %33 = tpu.concatenate %31, %32 in 1 : vector<8x32xf32>, vector<8x32xf32> -> vector<8x64xf32>
    %cst_39 = arith.constant dense<0.000000e+00> : vector<8x32xf32>
    %34 = tpu.matmul %33, %29, %cst_39 {dimension_numbers = #tpu.dot_dimension_numbers<[1], [0], [0], [1], [0, 0, 1, 1], [], []>} : vector<8x64xf32>, vector<64x32xf32>, vector<8x32xf32> -> vector<8x32xf32>
    %35 = vector.broadcast %30 : vector<1x32xf32> to vector<8x32xf32>
    %36 = arith.addf %34, %35 : vector<8x32xf32>
    %cst_40 = arith.constant 0.000000e+00 : f32
    %37 = vector.broadcast %cst_40 : f32 to vector<8x32xf32>
    %38 = arith.maximumf %36, %37 : vector<8x32xf32>
    %39 = arith.addf %16, %38 : vector<8x32xf32>
    %c0_41 = arith.constant 0 : index
    %c0_42 = arith.constant 0 : index
    %c0_43 = arith.constant 0 : index
    %c0_44 = arith.constant 0 : index
    %40 = vector.load %arg20[%c0_41, %c0_42, %c0_43, %c0_44] : memref<1x3x8x32xf32, #tpu.memory_space<vmem>>, vector<1x1x8x32xf32>
    %41 = vector.shape_cast %40 : vector<1x1x8x32xf32> to vector<8x32xf32>
    %42 = vector.shape_cast %39 : vector<8x32xf32> to vector<1x1x8x32xf32>
    tpu.vector_store %arg20[%c0_41, %c0_42, %c0_43, %c0_44], %42 {strides = array<i32>} : memref<1x3x8x32xf32, #tpu.memory_space<vmem>>, vector<1x1x8x32xf32>,
    %c0_45 = arith.constant 0 : index
    %c0_46 = arith.constant 0 : index
    %43 = vector.load %arg8[%c0_45, %c0_46] : memref<48x32xf32, #tpu.memory_space<vmem>>, vector<48x32xf32>
    %c0_47 = arith.constant 0 : index
    %c0_48 = arith.constant 0 : index
    %44 = vector.load %arg9[%c0_47, %c0_48] : memref<1x32xf32, #tpu.memory_space<vmem>>, vector<1x32xf32>
    %c0_49 = arith.constant 0 : index
    %c0_50 = arith.constant 0 : index
    %45 = vector.load %arg21[%c0_49, %c0_50] : memref<11x16xf32, #tpu.memory_space<vmem>>, vector<8x16xf32>
    %c1_51 = arith.constant 1 : index
    %c0_52 = arith.constant 0 : index
    %46 = vector.load %arg21[%c1_51, %c0_52] : memref<11x16xf32, #tpu.memory_space<vmem>>, vector<8x16xf32>
    %c2_53 = arith.constant 2 : index
    %c0_54 = arith.constant 0 : index
    %47 = vector.load %arg21[%c2_53, %c0_54] : memref<11x16xf32, #tpu.memory_space<vmem>>, vector<8x16xf32>
    %48 = tpu.concatenate %45, %46, %47 in 1 : vector<8x16xf32>, vector<8x16xf32>, vector<8x16xf32> -> vector<8x48xf32>
    %cst_55 = arith.constant dense<0.000000e+00> : vector<8x32xf32>
    %49 = tpu.matmul %48, %43, %cst_55 {dimension_numbers = #tpu.dot_dimension_numbers<[1], [0], [0], [1], [0, 0, 1, 1], [], []>} : vector<8x48xf32>, vector<48x32xf32>, vector<8x32xf32> -> vector<8x32xf32>
    %50 = vector.broadcast %44 : vector<1x32xf32> to vector<8x32xf32>
    %51 = arith.addf %49, %50 : vector<8x32xf32>
    %cst_56 = arith.constant 0.000000e+00 : f32
    %52 = vector.broadcast %cst_56 : f32 to vector<8x32xf32>
    %53 = arith.maximumf %51, %52 : vector<8x32xf32>
    %c1_57 = arith.constant 1 : index
    %c0_58 = arith.constant 0 : index
    %54 = vector.load %arg22[%c1_57, %c0_58] : memref<11x32xf32, #tpu.memory_space<vmem>>, vector<8x32xf32>
    tpu.vector_store %arg22[%c1_57, %c0_58], %53 {strides = array<i32>} : memref<11x32xf32, #tpu.memory_space<vmem>>, vector<8x32xf32>,
    %c0_59 = arith.constant 0 : index
    %c0_60 = arith.constant 0 : index
    %55 = vector.load %arg10[%c0_59, %c0_60] : memref<96x32xf32, #tpu.memory_space<vmem>>, vector<96x32xf32>
    %c0_61 = arith.constant 0 : index
    %c0_62 = arith.constant 0 : index
    %56 = vector.load %arg11[%c0_61, %c0_62] : memref<1x32xf32, #tpu.memory_space<vmem>>, vector<1x32xf32>
    %c0_63 = arith.constant 0 : index
    %c0_64 = arith.constant 0 : index
    %57 = vector.load %arg22[%c0_63, %c0_64] : memref<11x32xf32, #tpu.memory_space<vmem>>, vector<8x32xf32>
    %c1_65 = arith.constant 1 : index
    %c0_66 = arith.constant 0 : index
    %58 = vector.load %arg22[%c1_65, %c0_66] : memref<11x32xf32, #tpu.memory_space<vmem>>, vector<8x32xf32>
    %c2_67 = arith.constant 2 : index
    %c0_68 = arith.constant 0 : index
    %59 = vector.load %arg22[%c2_67, %c0_68] : memref<11x32xf32, #tpu.memory_space<vmem>>, vector<8x32xf32>
    %60 = tpu.concatenate %57, %58, %59 in 1 : vector<8x32xf32>, vector<8x32xf32>, vector<8x32xf32> -> vector<8x96xf32>
    %cst_69 = arith.constant dense<0.000000e+00> : vector<8x32xf32>
    %61 = tpu.matmul %60, %55, %cst_69 {dimension_numbers = #tpu.dot_dimension_numbers<[1], [0], [0], [1], [0, 0, 1, 1], [], []>} : vector<8x96xf32>, vector<96x32xf32>, vector<8x32xf32> -> vector<8x32xf32>
    %62 = vector.broadcast %56 : vector<1x32xf32> to vector<8x32xf32>
    %63 = arith.addf %61, %62 : vector<8x32xf32>
    %cst_70 = arith.constant 0.000000e+00 : f32
    %64 = vector.broadcast %cst_70 : f32 to vector<8x32xf32>
    %65 = arith.maximumf %63, %64 : vector<8x32xf32>
    %c1_71 = arith.constant 1 : index
    %c0_72 = arith.constant 0 : index
    %66 = vector.load %arg22[%c1_71, %c0_72] : memref<11x32xf32, #tpu.memory_space<vmem>>, vector<8x32xf32>
    tpu.vector_store %arg22[%c1_71, %c0_72], %65 {strides = array<i32>} : memref<11x32xf32, #tpu.memory_space<vmem>>, vector<8x32xf32>,
    %c0_73 = arith.constant 0 : index
    %c0_74 = arith.constant 0 : index
    %67 = vector.load %arg12[%c0_73, %c0_74] : memref<96x32xf32, #tpu.memory_space<vmem>>, vector<96x32xf32>
    %c0_75 = arith.constant 0 : index
    %c0_76 = arith.constant 0 : index
    %68 = vector.load %arg13[%c0_75, %c0_76] : memref<1x32xf32, #tpu.memory_space<vmem>>, vector<1x32xf32>
    %c0_77 = arith.constant 0 : index
    %c0_78 = arith.constant 0 : index
    %69 = vector.load %arg22[%c0_77, %c0_78] : memref<11x32xf32, #tpu.memory_space<vmem>>, vector<8x32xf32>
    %c1_79 = arith.constant 1 : index
    %c0_80 = arith.constant 0 : index
    %70 = vector.load %arg22[%c1_79, %c0_80] : memref<11x32xf32, #tpu.memory_space<vmem>>, vector<8x32xf32>
    %c2_81 = arith.constant 2 : index
    %c0_82 = arith.constant 0 : index
    %71 = vector.load %arg22[%c2_81, %c0_82] : memref<11x32xf32, #tpu.memory_space<vmem>>, vector<8x32xf32>
    %72 = tpu.concatenate %69, %70, %71 in 1 : vector<8x32xf32>, vector<8x32xf32>, vector<8x32xf32> -> vector<8x96xf32>
    %cst_83 = arith.constant dense<0.000000e+00> : vector<8x32xf32>
    %73 = tpu.matmul %72, %67, %cst_83 {dimension_numbers = #tpu.dot_dimension_numbers<[1], [0], [0], [1], [0, 0, 1, 1], [], []>} : vector<8x96xf32>, vector<96x32xf32>, vector<8x32xf32> -> vector<8x32xf32>
    %74 = vector.broadcast %68 : vector<1x32xf32> to vector<8x32xf32>
    %75 = arith.addf %73, %74 : vector<8x32xf32>
    %cst_84 = arith.constant 0.000000e+00 : f32
    %76 = vector.broadcast %cst_84 : f32 to vector<8x32xf32>
    %77 = arith.maximumf %75, %76 : vector<8x32xf32>
    %78 = arith.addf %53, %77 : vector<8x32xf32>
    %c0_85 = arith.constant 0 : index
    %c1_86 = arith.constant 1 : index
    %c0_87 = arith.constant 0 : index
    %c0_88 = arith.constant 0 : index
    %79 = vector.load %arg20[%c0_85, %c1_86, %c0_87, %c0_88] : memref<1x3x8x32xf32, #tpu.memory_space<vmem>>, vector<1x1x8x32xf32>
    %80 = vector.shape_cast %79 : vector<1x1x8x32xf32> to vector<8x32xf32>
    %81 = vector.shape_cast %78 : vector<8x32xf32> to vector<1x1x8x32xf32>
    tpu.vector_store %arg20[%c0_85, %c1_86, %c0_87, %c0_88], %81 {strides = array<i32>} : memref<1x3x8x32xf32, #tpu.memory_space<vmem>>, vector<1x1x8x32xf32>,
    %c0_89 = arith.constant 0 : index
    %c0_90 = arith.constant 0 : index
    %82 = vector.load %arg14[%c0_89, %c0_90] : memref<64x32xf32, #tpu.memory_space<vmem>>, vector<64x32xf32>
    %c0_91 = arith.constant 0 : index
    %c0_92 = arith.constant 0 : index
    %83 = vector.load %arg15[%c0_91, %c0_92] : memref<1x32xf32, #tpu.memory_space<vmem>>, vector<1x32xf32>
    %c0_93 = arith.constant 0 : index
    %c0_94 = arith.constant 0 : index
    %84 = vector.load %arg21[%c0_93, %c0_94] : memref<11x16xf32, #tpu.memory_space<vmem>>, vector<8x16xf32>
    %c1_95 = arith.constant 1 : index
    %c0_96 = arith.constant 0 : index
    %85 = vector.load %arg21[%c1_95, %c0_96] : memref<11x16xf32, #tpu.memory_space<vmem>>, vector<8x16xf32>
    %c2_97 = arith.constant 2 : index
    %c0_98 = arith.constant 0 : index
    %86 = vector.load %arg21[%c2_97, %c0_98] : memref<11x16xf32, #tpu.memory_space<vmem>>, vector<8x16xf32>
    %c3 = arith.constant 3 : index
    %c0_99 = arith.constant 0 : index
    %87 = vector.load %arg21[%c3, %c0_99] : memref<11x16xf32, #tpu.memory_space<vmem>>, vector<8x16xf32>
    %88 = tpu.concatenate %84, %85, %86, %87 in 1 : vector<8x16xf32>, vector<8x16xf32>, vector<8x16xf32>, vector<8x16xf32> -> vector<8x64xf32>
    %cst_100 = arith.constant dense<0.000000e+00> : vector<8x32xf32>
    %89 = tpu.matmul %88, %82, %cst_100 {dimension_numbers = #tpu.dot_dimension_numbers<[1], [0], [0], [1], [0, 0, 1, 1], [], []>} : vector<8x64xf32>, vector<64x32xf32>, vector<8x32xf32> -> vector<8x32xf32>
    %90 = vector.broadcast %83 : vector<1x32xf32> to vector<8x32xf32>
    %91 = arith.addf %89, %90 : vector<8x32xf32>
    %cst_101 = arith.constant 0.000000e+00 : f32
    %92 = vector.broadcast %cst_101 : f32 to vector<8x32xf32>
    %93 = arith.maximumf %91, %92 : vector<8x32xf32>
    %c1_102 = arith.constant 1 : index
    %c0_103 = arith.constant 0 : index
    %94 = vector.load %arg22[%c1_102, %c0_103] : memref<11x32xf32, #tpu.memory_space<vmem>>, vector<8x32xf32>
    tpu.vector_store %arg22[%c1_102, %c0_103], %93 {strides = array<i32>} : memref<11x32xf32, #tpu.memory_space<vmem>>, vector<8x32xf32>,
    %c0_104 = arith.constant 0 : index
    %c0_105 = arith.constant 0 : index
    %95 = vector.load %arg16[%c0_104, %c0_105] : memref<128x32xf32, #tpu.memory_space<vmem>>, vector<128x32xf32>
    %c0_106 = arith.constant 0 : index
    %c0_107 = arith.constant 0 : index
    %96 = vector.load %arg17[%c0_106, %c0_107] : memref<1x32xf32, #tpu.memory_space<vmem>>, vector<1x32xf32>
    %c0_108 = arith.constant 0 : index
    %c0_109 = arith.constant 0 : index
    %97 = vector.load %arg22[%c0_108, %c0_109] : memref<11x32xf32, #tpu.memory_space<vmem>>, vector<8x32xf32>
    %c1_110 = arith.constant 1 : index
    %c0_111 = arith.constant 0 : index
    %98 = vector.load %arg22[%c1_110, %c0_111] : memref<11x32xf32, #tpu.memory_space<vmem>>, vector<8x32xf32>
    %c2_112 = arith.constant 2 : index
    %c0_113 = arith.constant 0 : index
    %99 = vector.load %arg22[%c2_112, %c0_113] : memref<11x32xf32, #tpu.memory_space<vmem>>, vector<8x32xf32>
    %c3_114 = arith.constant 3 : index
    %c0_115 = arith.constant 0 : index
    %100 = vector.load %arg22[%c3_114, %c0_115] : memref<11x32xf32, #tpu.memory_space<vmem>>, vector<8x32xf32>
    %101 = tpu.concatenate %97, %98, %99, %100 in 1 : vector<8x32xf32>, vector<8x32xf32>, vector<8x32xf32>, vector<8x32xf32> -> vector<8x128xf32>
    %cst_116 = arith.constant dense<0.000000e+00> : vector<8x32xf32>
    %102 = tpu.matmul %101, %95, %cst_116 {dimension_numbers = #tpu.dot_dimension_numbers<[1], [0], [0], [1], [0, 0, 1, 1], [], []>} : vector<8x128xf32>, vector<128x32xf32>, vector<8x32xf32> -> vector<8x32xf32>
    %103 = vector.broadcast %96 : vector<1x32xf32> to vector<8x32xf32>
    %104 = arith.addf %102, %103 : vector<8x32xf32>
    %cst_117 = arith.constant 0.000000e+00 : f32
    %105 = vector.broadcast %cst_117 : f32 to vector<8x32xf32>
    %106 = arith.maximumf %104, %105 : vector<8x32xf32>
    %c1_118 = arith.constant 1 : index
    %c0_119 = arith.constant 0 : index
    %107 = vector.load %arg22[%c1_118, %c0_119] : memref<11x32xf32, #tpu.memory_space<vmem>>, vector<8x32xf32>
    tpu.vector_store %arg22[%c1_118, %c0_119], %106 {strides = array<i32>} : memref<11x32xf32, #tpu.memory_space<vmem>>, vector<8x32xf32>,
    %c0_120 = arith.constant 0 : index
    %c0_121 = arith.constant 0 : index
    %108 = vector.load %arg18[%c0_120, %c0_121] : memref<128x32xf32, #tpu.memory_space<vmem>>, vector<128x32xf32>
    %c0_122 = arith.constant 0 : index
    %c0_123 = arith.constant 0 : index
    %109 = vector.load %arg19[%c0_122, %c0_123] : memref<1x32xf32, #tpu.memory_space<vmem>>, vector<1x32xf32>
    %c0_124 = arith.constant 0 : index
    %c0_125 = arith.constant 0 : index
    %110 = vector.load %arg22[%c0_124, %c0_125] : memref<11x32xf32, #tpu.memory_space<vmem>>, vector<8x32xf32>
    %c1_126 = arith.constant 1 : index
    %c0_127 = arith.constant 0 : index
    %111 = vector.load %arg22[%c1_126, %c0_127] : memref<11x32xf32, #tpu.memory_space<vmem>>, vector<8x32xf32>
    %c2_128 = arith.constant 2 : index
    %c0_129 = arith.constant 0 : index
    %112 = vector.load %arg22[%c2_128, %c0_129] : memref<11x32xf32, #tpu.memory_space<vmem>>, vector<8x32xf32>
    %c3_130 = arith.constant 3 : index
    %c0_131 = arith.constant 0 : index
    %113 = vector.load %arg22[%c3_130, %c0_131] : memref<11x32xf32, #tpu.memory_space<vmem>>, vector<8x32xf32>
    %114 = tpu.concatenate %110, %111, %112, %113 in 1 : vector<8x32xf32>, vector<8x32xf32>, vector<8x32xf32>, vector<8x32xf32> -> vector<8x128xf32>
    %cst_132 = arith.constant dense<0.000000e+00> : vector<8x32xf32>
    %115 = tpu.matmul %114, %108, %cst_132 {dimension_numbers = #tpu.dot_dimension_numbers<[1], [0], [0], [1], [0, 0, 1, 1], [], []>} : vector<8x128xf32>, vector<128x32xf32>, vector<8x32xf32> -> vector<8x32xf32>
    %116 = vector.broadcast %109 : vector<1x32xf32> to vector<8x32xf32>
    %117 = arith.addf %115, %116 : vector<8x32xf32>
    %cst_133 = arith.constant 0.000000e+00 : f32
    %118 = vector.broadcast %cst_133 : f32 to vector<8x32xf32>
    %119 = arith.maximumf %117, %118 : vector<8x32xf32>
    %120 = arith.addf %93, %119 : vector<8x32xf32>
    %c0_134 = arith.constant 0 : index
    %c2_135 = arith.constant 2 : index
    %c0_136 = arith.constant 0 : index
    %c0_137 = arith.constant 0 : index
    %121 = vector.load %arg20[%c0_134, %c2_135, %c0_136, %c0_137] : memref<1x3x8x32xf32, #tpu.memory_space<vmem>>, vector<1x1x8x32xf32>
    %122 = vector.shape_cast %121 : vector<1x1x8x32xf32> to vector<8x32xf32>
    %123 = vector.shape_cast %120 : vector<8x32xf32> to vector<1x1x8x32xf32>
    tpu.vector_store %arg20[%c0_134, %c2_135, %c0_136, %c0_137], %123 {strides = array<i32>} : memref<1x3x8x32xf32, #tpu.memory_space<vmem>>, vector<1x1x8x32xf32>,
    return
  }
  func.func @transform_0(%arg0: i32) -> (i32, i32, i32) {
    %c0_i32 = arith.constant 0 : i32
    %c0_i32_0 = arith.constant 0 : i32
    %c0_i32_1 = arith.constant 0 : i32
    return %arg0, %c0_i32, %c0_i32_0 : i32, i32, i32
  }
  func.func @transform_1(%arg0: i32) -> (i32, i32) {
    %c0_i32 = arith.constant 0 : i32
    %c0_i32_0 = arith.constant 0 : i32
    %c0_i32_1 = arith.constant 0 : i32
    return %c0_i32, %c0_i32_0 : i32, i32
  }
  func.func @transform_2(%arg0: i32) -> (i32, i32) {
    %c0_i32 = arith.constant 0 : i32
    %c0_i32_0 = arith.constant 0 : i32
    %c0_i32_1 = arith.constant 0 : i32
    return %c0_i32, %c0_i32_0 : i32, i32
  }
  func.func @transform_3(%arg0: i32) -> (i32, i32) {
    %c0_i32 = arith.constant 0 : i32
    %c0_i32_0 = arith.constant 0 : i32
    %c0_i32_1 = arith.constant 0 : i32
    return %c0_i32, %c0_i32_0 : i32, i32
  }
  func.func @transform_4(%arg0: i32) -> (i32, i32) {
    %c0_i32 = arith.constant 0 : i32
    %c0_i32_0 = arith.constant 0 : i32
    %c0_i32_1 = arith.constant 0 : i32
    return %c0_i32, %c0_i32_0 : i32, i32
  }
  func.func @transform_5(%arg0: i32) -> (i32, i32) {
    %c0_i32 = arith.constant 0 : i32
    %c0_i32_0 = arith.constant 0 : i32
    %c0_i32_1 = arith.constant 0 : i32
    return %c0_i32, %c0_i32_0 : i32, i32
  }
  func.func @transform_6(%arg0: i32) -> (i32, i32) {
    %c0_i32 = arith.constant 0 : i32
    %c0_i32_0 = arith.constant 0 : i32
    %c0_i32_1 = arith.constant 0 : i32
    return %c0_i32, %c0_i32_0 : i32, i32
  }
  func.func @transform_7(%arg0: i32) -> (i32, i32) {
    %c0_i32 = arith.constant 0 : i32
    %c0_i32_0 = arith.constant 0 : i32
    %c0_i32_1 = arith.constant 0 : i32
    return %c0_i32, %c0_i32_0 : i32, i32
  }
  func.func @transform_8(%arg0: i32) -> (i32, i32) {
    %c0_i32 = arith.constant 0 : i32
    %c0_i32_0 = arith.constant 0 : i32
    %c0_i32_1 = arith.constant 0 : i32
    return %c0_i32, %c0_i32_0 : i32, i32
  }
  func.func @transform_9(%arg0: i32) -> (i32, i32) {
    %c0_i32 = arith.constant 0 : i32
    %c0_i32_0 = arith.constant 0 : i32
    %c0_i32_1 = arith.constant 0 : i32
    return %c0_i32, %c0_i32_0 : i32, i32
  }
  func.func @transform_10(%arg0: i32) -> (i32, i32) {
    %c0_i32 = arith.constant 0 : i32
    %c0_i32_0 = arith.constant 0 : i32
    %c0_i32_1 = arith.constant 0 : i32
    return %c0_i32, %c0_i32_0 : i32, i32
  }
  func.func @transform_11(%arg0: i32) -> (i32, i32) {
    %c0_i32 = arith.constant 0 : i32
    %c0_i32_0 = arith.constant 0 : i32
    %c0_i32_1 = arith.constant 0 : i32
    return %c0_i32, %c0_i32_0 : i32, i32
  }
  func.func @transform_12(%arg0: i32) -> (i32, i32) {
    %c0_i32 = arith.constant 0 : i32
    %c0_i32_0 = arith.constant 0 : i32
    %c0_i32_1 = arith.constant 0 : i32
    return %c0_i32, %c0_i32_0 : i32, i32
  }
  func.func @transform_13(%arg0: i32) -> (i32, i32) {
    %c0_i32 = arith.constant 0 : i32
    %c0_i32_0 = arith.constant 0 : i32
    %c0_i32_1 = arith.constant 0 : i32
    return %c0_i32, %c0_i32_0 : i32, i32
  }
  func.func @transform_14(%arg0: i32) -> (i32, i32) {
    %c0_i32 = arith.constant 0 : i32
    %c0_i32_0 = arith.constant 0 : i32
    %c0_i32_1 = arith.constant 0 : i32
    return %c0_i32, %c0_i32_0 : i32, i32
  }
  func.func @transform_15(%arg0: i32) -> (i32, i32) {
    %c0_i32 = arith.constant 0 : i32
    %c0_i32_0 = arith.constant 0 : i32
    %c0_i32_1 = arith.constant 0 : i32
    return %c0_i32, %c0_i32_0 : i32, i32
  }
  func.func @transform_16(%arg0: i32) -> (i32, i32) {
    %c0_i32 = arith.constant 0 : i32
    %c0_i32_0 = arith.constant 0 : i32
    %c0_i32_1 = arith.constant 0 : i32
    return %c0_i32, %c0_i32_0 : i32, i32
  }
  func.func @transform_17(%arg0: i32) -> (i32, i32) {
    %c0_i32 = arith.constant 0 : i32
    %c0_i32_0 = arith.constant 0 : i32
    %c0_i32_1 = arith.constant 0 : i32
    return %c0_i32, %c0_i32_0 : i32, i32
  }
  func.func @transform_18(%arg0: i32) -> (i32, i32) {
    %c0_i32 = arith.constant 0 : i32
    %c0_i32_0 = arith.constant 0 : i32
    %c0_i32_1 = arith.constant 0 : i32
    return %c0_i32, %c0_i32_0 : i32, i32
  }
  func.func @transform_19(%arg0: i32) -> (i32, i32, i32, i32) {
    %c0_i32 = arith.constant 0 : i32
    %c0_i32_0 = arith.constant 0 : i32
    %c0_i32_1 = arith.constant 0 : i32
    %c0_i32_2 = arith.constant 0 : i32
    return %arg0, %c0_i32, %c0_i32_0, %c0_i32_1 : i32, i32, i32, i32
  }
}

module attributes {stable_mosaic.version = 11 : i64} {
  func.func @_head_kernel(%arg0: i32, %arg1: i32, %arg2: memref<1x3x8x32xf32, #tpu.memory_space<vmem>>, %arg3: memref<96x32xf32, #tpu.memory_space<vmem>>, %arg4: memref<1x32xf32, #tpu.memory_space<vmem>>, %arg5: memref<32x32xf32, #tpu.memory_space<vmem>>, %arg6: memref<1x32xf32, #tpu.memory_space<vmem>>, %arg7: memref<32x32xf32, #tpu.memory_space<vmem>>, %arg8: memref<1x32xf32, #tpu.memory_space<vmem>>, %arg9: memref<1x32xf32, #tpu.memory_space<vmem>>, %arg10: memref<1x32xf32, #tpu.memory_space<vmem>>, %arg11: memref<32x32xf32, #tpu.memory_space<vmem>>, %arg12: memref<1x32xf32, #tpu.memory_space<vmem>>, %arg13: memref<32x3xf32, #tpu.memory_space<vmem>>, %arg14: memref<1x3xf32, #tpu.memory_space<vmem>>, %arg15: memref<1x8x3xf32, #tpu.memory_space<vmem>>) attributes {dimension_semantics = [#tpu.dimension_semantics<parallel>, #tpu.dimension_semantics<parallel>], iteration_bounds = array<i64: 2, 1>, scalar_prefetch = 0 : i64, scratch_operands = 0 : i64, tpu.core_type = #tpu.core_type<tc>, window_params = [{transform_indices = @transform_0, window_bounds = array<i64: 1, 3, 8, 32>}, {pipeline_mode = #tpu.pipeline_mode<synchronous>, transform_indices = @transform_1, window_bounds = array<i64: 96, 32>}, {pipeline_mode = #tpu.pipeline_mode<synchronous>, transform_indices = @transform_2, window_bounds = array<i64: 1, 32>}, {pipeline_mode = #tpu.pipeline_mode<synchronous>, transform_indices = @transform_3, window_bounds = array<i64: 32, 32>}, {pipeline_mode = #tpu.pipeline_mode<synchronous>, transform_indices = @transform_4, window_bounds = array<i64: 1, 32>}, {pipeline_mode = #tpu.pipeline_mode<synchronous>, transform_indices = @transform_5, window_bounds = array<i64: 32, 32>}, {pipeline_mode = #tpu.pipeline_mode<synchronous>, transform_indices = @transform_6, window_bounds = array<i64: 1, 32>}, {pipeline_mode = #tpu.pipeline_mode<synchronous>, transform_indices = @transform_7, window_bounds = array<i64: 1, 32>}, {pipeline_mode = #tpu.pipeline_mode<synchronous>, transform_indices = @transform_8, window_bounds = array<i64: 1, 32>}, {pipeline_mode = #tpu.pipeline_mode<synchronous>, transform_indices = @transform_9, window_bounds = array<i64: 32, 32>}, {pipeline_mode = #tpu.pipeline_mode<synchronous>, transform_indices = @transform_10, window_bounds = array<i64: 1, 32>}, {pipeline_mode = #tpu.pipeline_mode<synchronous>, transform_indices = @transform_11, window_bounds = array<i64: 32, 3>}, {pipeline_mode = #tpu.pipeline_mode<synchronous>, transform_indices = @transform_12, window_bounds = array<i64: 1, 3>}, {transform_indices = @transform_13, window_bounds = array<i64: 1, 8, 3>}]} {
    %c0 = arith.constant 0 : index
    %c0_0 = arith.constant 0 : index
    %c0_1 = arith.constant 0 : index
    %c0_2 = arith.constant 0 : index
    %0 = vector.load %arg2[%c0, %c0_0, %c0_1, %c0_2] : memref<1x3x8x32xf32, #tpu.memory_space<vmem>>, vector<1x1x8x32xf32>
    %1 = vector.shape_cast %0 : vector<1x1x8x32xf32> to vector<8x32xf32>
    %c0_3 = arith.constant 0 : index
    %c1 = arith.constant 1 : index
    %c0_4 = arith.constant 0 : index
    %c0_5 = arith.constant 0 : index
    %2 = vector.load %arg2[%c0_3, %c1, %c0_4, %c0_5] : memref<1x3x8x32xf32, #tpu.memory_space<vmem>>, vector<1x1x8x32xf32>
    %3 = vector.shape_cast %2 : vector<1x1x8x32xf32> to vector<8x32xf32>
    %c0_6 = arith.constant 0 : index
    %c2 = arith.constant 2 : index
    %c0_7 = arith.constant 0 : index
    %c0_8 = arith.constant 0 : index
    %4 = vector.load %arg2[%c0_6, %c2, %c0_7, %c0_8] : memref<1x3x8x32xf32, #tpu.memory_space<vmem>>, vector<1x1x8x32xf32>
    %5 = vector.shape_cast %4 : vector<1x1x8x32xf32> to vector<8x32xf32>
    %6 = tpu.concatenate %1, %3, %5 in 1 : vector<8x32xf32>, vector<8x32xf32>, vector<8x32xf32> -> vector<8x96xf32>
    %c0_9 = arith.constant 0 : index
    %c0_10 = arith.constant 0 : index
    %7 = vector.load %arg3[%c0_9, %c0_10] : memref<96x32xf32, #tpu.memory_space<vmem>>, vector<96x32xf32>
    %cst = arith.constant dense<0.000000e+00> : vector<8x32xf32>
    %8 = tpu.matmul %6, %7, %cst {dimension_numbers = #tpu.dot_dimension_numbers<[1], [0], [0], [1], [0, 0, 1, 1], [], []>} : vector<8x96xf32>, vector<96x32xf32>, vector<8x32xf32> -> vector<8x32xf32>
    %c0_11 = arith.constant 0 : index
    %c0_12 = arith.constant 0 : index
    %9 = vector.load %arg4[%c0_11, %c0_12] : memref<1x32xf32, #tpu.memory_space<vmem>>, vector<1x32xf32>
    %10 = vector.broadcast %9 : vector<1x32xf32> to vector<8x32xf32>
    %11 = arith.addf %8, %10 : vector<8x32xf32>
    %cst_13 = arith.constant 0.000000e+00 : f32
    %12 = vector.broadcast %cst_13 : f32 to vector<8x32xf32>
    %13 = arith.maximumf %11, %12 : vector<8x32xf32>
    %c0_14 = arith.constant 0 : index
    %c0_15 = arith.constant 0 : index
    %14 = vector.load %arg5[%c0_14, %c0_15] : memref<32x32xf32, #tpu.memory_space<vmem>>, vector<32x32xf32>
    %cst_16 = arith.constant dense<0.000000e+00> : vector<8x32xf32>
    %15 = tpu.matmul %13, %14, %cst_16 {dimension_numbers = #tpu.dot_dimension_numbers<[1], [0], [0], [1], [0, 0, 1, 1], [], []>} : vector<8x32xf32>, vector<32x32xf32>, vector<8x32xf32> -> vector<8x32xf32>
    %c0_17 = arith.constant 0 : index
    %c0_18 = arith.constant 0 : index
    %16 = vector.load %arg6[%c0_17, %c0_18] : memref<1x32xf32, #tpu.memory_space<vmem>>, vector<1x32xf32>
    %17 = vector.broadcast %16 : vector<1x32xf32> to vector<8x32xf32>
    %18 = arith.addf %15, %17 : vector<8x32xf32>
    %cst_19 = arith.constant 0.000000e+00 : f32
    %19 = vector.broadcast %cst_19 : f32 to vector<8x32xf32>
    %20 = arith.maximumf %18, %19 : vector<8x32xf32>
    %c0_20 = arith.constant 0 : index
    %c0_21 = arith.constant 0 : index
    %21 = vector.load %arg7[%c0_20, %c0_21] : memref<32x32xf32, #tpu.memory_space<vmem>>, vector<32x32xf32>
    %cst_22 = arith.constant dense<0.000000e+00> : vector<8x32xf32>
    %22 = tpu.matmul %20, %21, %cst_22 {dimension_numbers = #tpu.dot_dimension_numbers<[1], [0], [0], [1], [0, 0, 1, 1], [], []>} : vector<8x32xf32>, vector<32x32xf32>, vector<8x32xf32> -> vector<8x32xf32>
    %c0_23 = arith.constant 0 : index
    %c0_24 = arith.constant 0 : index
    %23 = vector.load %arg8[%c0_23, %c0_24] : memref<1x32xf32, #tpu.memory_space<vmem>>, vector<1x32xf32>
    %24 = vector.broadcast %23 : vector<1x32xf32> to vector<8x32xf32>
    %25 = arith.addf %22, %24 : vector<8x32xf32>
    %cst_25 = arith.constant 0.000000e+00 : f32
    %26 = vector.broadcast %cst_25 : f32 to vector<8x32xf32>
    %27 = arith.maximumf %25, %26 : vector<8x32xf32>
    %28 = arith.addf %13, %27 : vector<8x32xf32>
    %cst_26 = arith.constant dense<0.000000e+00> : vector<8xf32>
    %29 = vector.multi_reduction <add>, %28, %cst_26 [1] : vector<8x32xf32> to vector<8xf32>
    %30 = vector.shape_cast %29 : vector<8xf32> to vector<8x1xf32>
    %cst_27 = arith.constant 3.200000e+01 : f32
    %31 = vector.broadcast %cst_27 : f32 to vector<8x1xf32>
    %32 = arith.divf %30, %31 : vector<8x1xf32>
    %33 = vector.broadcast %32 : vector<8x1xf32> to vector<8x32xf32>
    %34 = arith.subf %28, %33 : vector<8x32xf32>
    %35 = arith.mulf %34, %34 : vector<8x32xf32>
    %cst_28 = arith.constant dense<0.000000e+00> : vector<8xf32>
    %36 = vector.multi_reduction <add>, %35, %cst_28 [1] : vector<8x32xf32> to vector<8xf32>
    %37 = vector.shape_cast %36 : vector<8xf32> to vector<8x1xf32>
    %cst_29 = arith.constant 3.200000e+01 : f32
    %38 = vector.broadcast %cst_29 : f32 to vector<8x1xf32>
    %39 = arith.divf %37, %38 : vector<8x1xf32>
    %cst_30 = arith.constant 9.99999974E-6 : f32
    %40 = vector.broadcast %cst_30 : f32 to vector<8x1xf32>
    %41 = arith.addf %39, %40 : vector<8x1xf32>
    %42 = math.rsqrt %41 : vector<8x1xf32>
    %43 = vector.broadcast %42 : vector<8x1xf32> to vector<8x32xf32>
    %44 = arith.mulf %34, %43 : vector<8x32xf32>
    %c0_31 = arith.constant 0 : index
    %c0_32 = arith.constant 0 : index
    %45 = vector.load %arg9[%c0_31, %c0_32] : memref<1x32xf32, #tpu.memory_space<vmem>>, vector<1x32xf32>
    %46 = vector.broadcast %45 : vector<1x32xf32> to vector<8x32xf32>
    %47 = arith.mulf %44, %46 : vector<8x32xf32>
    %c0_33 = arith.constant 0 : index
    %c0_34 = arith.constant 0 : index
    %48 = vector.load %arg10[%c0_33, %c0_34] : memref<1x32xf32, #tpu.memory_space<vmem>>, vector<1x32xf32>
    %49 = vector.broadcast %48 : vector<1x32xf32> to vector<8x32xf32>
    %50 = arith.addf %47, %49 : vector<8x32xf32>
    %c0_35 = arith.constant 0 : index
    %c0_36 = arith.constant 0 : index
    %51 = vector.load %arg11[%c0_35, %c0_36] : memref<32x32xf32, #tpu.memory_space<vmem>>, vector<32x32xf32>
    %cst_37 = arith.constant dense<0.000000e+00> : vector<8x32xf32>
    %52 = tpu.matmul %50, %51, %cst_37 {dimension_numbers = #tpu.dot_dimension_numbers<[1], [0], [0], [1], [0, 0, 1, 1], [], []>} : vector<8x32xf32>, vector<32x32xf32>, vector<8x32xf32> -> vector<8x32xf32>
    %c0_38 = arith.constant 0 : index
    %c0_39 = arith.constant 0 : index
    %53 = vector.load %arg12[%c0_38, %c0_39] : memref<1x32xf32, #tpu.memory_space<vmem>>, vector<1x32xf32>
    %54 = vector.broadcast %53 : vector<1x32xf32> to vector<8x32xf32>
    %55 = arith.addf %52, %54 : vector<8x32xf32>
    %cst_40 = arith.constant 0.000000e+00 : f32
    %56 = vector.broadcast %cst_40 : f32 to vector<8x32xf32>
    %57 = arith.maximumf %55, %56 : vector<8x32xf32>
    %c0_41 = arith.constant 0 : index
    %c0_42 = arith.constant 0 : index
    %58 = vector.load %arg13[%c0_41, %c0_42] : memref<32x3xf32, #tpu.memory_space<vmem>>, vector<32x3xf32>
    %cst_43 = arith.constant dense<0.000000e+00> : vector<8x3xf32>
    %59 = tpu.matmul %57, %58, %cst_43 {dimension_numbers = #tpu.dot_dimension_numbers<[1], [0], [0], [1], [0, 0, 1, 1], [], []>} : vector<8x32xf32>, vector<32x3xf32>, vector<8x3xf32> -> vector<8x3xf32>
    %c0_44 = arith.constant 0 : index
    %c0_45 = arith.constant 0 : index
    %60 = vector.load %arg14[%c0_44, %c0_45] : memref<1x3xf32, #tpu.memory_space<vmem>>, vector<1x3xf32>
    %61 = vector.broadcast %60 : vector<1x3xf32> to vector<8x3xf32>
    %62 = arith.addf %59, %61 : vector<8x3xf32>
    %c0_46 = arith.constant 0 : index
    %c0_47 = arith.constant 0 : index
    %c0_48 = arith.constant 0 : index
    %63 = vector.load %arg15[%c0_46, %c0_47, %c0_48] : memref<1x8x3xf32, #tpu.memory_space<vmem>>, vector<1x8x3xf32>
    %64 = vector.shape_cast %63 : vector<1x8x3xf32> to vector<8x3xf32>
    %65 = vector.shape_cast %62 : vector<8x3xf32> to vector<1x8x3xf32>
    tpu.vector_store %arg15[%c0_46, %c0_47, %c0_48], %65 {strides = array<i32>} : memref<1x8x3xf32, #tpu.memory_space<vmem>>, vector<1x8x3xf32>,
    return
  }
  func.func @transform_0(%arg0: i32, %arg1: i32) -> (i32, i32, i32, i32) {
    %c0_i32 = arith.constant 0 : i32
    %c0_i32_0 = arith.constant 0 : i32
    %c0_i32_1 = arith.constant 0 : i32
    return %arg0, %c0_i32, %arg1, %c0_i32_0 : i32, i32, i32, i32
  }
  func.func @transform_1(%arg0: i32, %arg1: i32) -> (i32, i32) {
    %c0_i32 = arith.constant 0 : i32
    %c0_i32_0 = arith.constant 0 : i32
    %c0_i32_1 = arith.constant 0 : i32
    return %c0_i32, %c0_i32_0 : i32, i32
  }
  func.func @transform_2(%arg0: i32, %arg1: i32) -> (i32, i32) {
    %c0_i32 = arith.constant 0 : i32
    %c0_i32_0 = arith.constant 0 : i32
    %c0_i32_1 = arith.constant 0 : i32
    return %c0_i32, %c0_i32_0 : i32, i32
  }
  func.func @transform_3(%arg0: i32, %arg1: i32) -> (i32, i32) {
    %c0_i32 = arith.constant 0 : i32
    %c0_i32_0 = arith.constant 0 : i32
    %c0_i32_1 = arith.constant 0 : i32
    return %c0_i32, %c0_i32_0 : i32, i32
  }
  func.func @transform_4(%arg0: i32, %arg1: i32) -> (i32, i32) {
    %c0_i32 = arith.constant 0 : i32
    %c0_i32_0 = arith.constant 0 : i32
    %c0_i32_1 = arith.constant 0 : i32
    return %c0_i32, %c0_i32_0 : i32, i32
  }
  func.func @transform_5(%arg0: i32, %arg1: i32) -> (i32, i32) {
    %c0_i32 = arith.constant 0 : i32
    %c0_i32_0 = arith.constant 0 : i32
    %c0_i32_1 = arith.constant 0 : i32
    return %c0_i32, %c0_i32_0 : i32, i32
  }
  func.func @transform_6(%arg0: i32, %arg1: i32) -> (i32, i32) {
    %c0_i32 = arith.constant 0 : i32
    %c0_i32_0 = arith.constant 0 : i32
    %c0_i32_1 = arith.constant 0 : i32
    return %c0_i32, %c0_i32_0 : i32, i32
  }
  func.func @transform_7(%arg0: i32, %arg1: i32) -> (i32, i32) {
    %c0_i32 = arith.constant 0 : i32
    %c0_i32_0 = arith.constant 0 : i32
    %c0_i32_1 = arith.constant 0 : i32
    return %c0_i32, %c0_i32_0 : i32, i32
  }
  func.func @transform_8(%arg0: i32, %arg1: i32) -> (i32, i32) {
    %c0_i32 = arith.constant 0 : i32
    %c0_i32_0 = arith.constant 0 : i32
    %c0_i32_1 = arith.constant 0 : i32
    return %c0_i32, %c0_i32_0 : i32, i32
  }
  func.func @transform_9(%arg0: i32, %arg1: i32) -> (i32, i32) {
    %c0_i32 = arith.constant 0 : i32
    %c0_i32_0 = arith.constant 0 : i32
    %c0_i32_1 = arith.constant 0 : i32
    return %c0_i32, %c0_i32_0 : i32, i32
  }
  func.func @transform_10(%arg0: i32, %arg1: i32) -> (i32, i32) {
    %c0_i32 = arith.constant 0 : i32
    %c0_i32_0 = arith.constant 0 : i32
    %c0_i32_1 = arith.constant 0 : i32
    return %c0_i32, %c0_i32_0 : i32, i32
  }
  func.func @transform_11(%arg0: i32, %arg1: i32) -> (i32, i32) {
    %c0_i32 = arith.constant 0 : i32
    %c0_i32_0 = arith.constant 0 : i32
    %c0_i32_1 = arith.constant 0 : i32
    return %c0_i32, %c0_i32_0 : i32, i32
  }
  func.func @transform_12(%arg0: i32, %arg1: i32) -> (i32, i32) {
    %c0_i32 = arith.constant 0 : i32
    %c0_i32_0 = arith.constant 0 : i32
    %c0_i32_1 = arith.constant 0 : i32
    return %c0_i32, %c0_i32_0 : i32, i32
  }
  func.func @transform_13(%arg0: i32, %arg1: i32) -> (i32, i32, i32) {
    %c0_i32 = arith.constant 0 : i32
    %c0_i32_0 = arith.constant 0 : i32
    return %arg0, %arg1, %c0_i32 : i32, i32, i32
  }
}

</mosaic_0001>

<llo_original>
// kernel: segmenter_forward.3
$region0: #{segmenter_forward.3}
  #allocation0 [shape = 'u32[]', space=smem, size = 0x4, offset = 0x4, fixed_abs, tag = 'smem constant byte address 0x4 - core index']
  #allocation1 [shape = 'u32[144,128]{1,0:T(1,128)}', space=vmem, size = 0x12000, scoped, tag = 'internal scratch']
  %s0 = inlined_call_operand.vmem [shape: f32[2,3,8,32], index: 0, kind: input, shape index: {}]
  %s1 = inlined_call_operand.vmem [shape: f32[96,32], index: 1, kind: input, shape index: {}]
  %s2 = inlined_call_operand.vmem [shape: f32[1,32], index: 2, kind: input, shape index: {}]
  %s3 = inlined_call_operand.vmem [shape: f32[32,32], index: 3, kind: input, shape index: {}]
  %s4 = inlined_call_operand.vmem [shape: f32[1,32], index: 4, kind: input, shape index: {}]
  %s5 = inlined_call_operand.vmem [shape: f32[32,32], index: 5, kind: input, shape index: {}]
  %s6 = inlined_call_operand.vmem [shape: f32[1,32], index: 6, kind: input, shape index: {}]
  %s7 = inlined_call_operand.vmem [shape: f32[1,32], index: 7, kind: input, shape index: {}]
  %s8 = inlined_call_operand.vmem [shape: f32[1,32], index: 8, kind: input, shape index: {}]
  %s9 = inlined_call_operand.vmem [shape: f32[32,32], index: 9, kind: input, shape index: {}]
  %s10 = inlined_call_operand.vmem [shape: f32[1,32], index: 10, kind: input, shape index: {}]
  %s11 = inlined_call_operand.vmem [shape: f32[32,3], index: 11, kind: input, shape index: {}]
  %s12 = inlined_call_operand.vmem [shape: f32[1,3], index: 12, kind: input, shape index: {}]
  %s13 = inlined_call_operand.vmem [shape: f32[2,8,3], index: 13, kind: output, shape index: {}]
  %s14 = sld [smem:[#allocation0]]
  $region85: #{segmenter_forward.3} parent=0
    _
  %s16 = ssub.s32 1, %s14
  %s17 = scalar_select 0, %s16, %s14
  loop: start=0, step=1, limit=4
  $region2: #{segmenter_forward.3} parent=0 // loop_pre_header
    _
  $region3: #{segmenter_forward.3} parent=0 // loop_header
    %s19 = sphi 0, %s23
    %p20 = scmp.ge.s32.totalorder %s19, 4
    %s26 = sphi 0, %s38
    %s27 = sphi 0, %s34
    %s28 = sphi 0, %s26
    %s29 = sphi 0, %s27
    %s30 = sphi 0, %s28
    %s31 = sphi 0, %s29
    %s43 = sphi 0, %s45
    %s46 = sphi 0, %s43
    %s47 = sphi 0, %s46
    %s63 = sphi 0, %s47
    %s67 = sphi 0, %s67
    %s69 = sphi 0, %s67
    %s70 = sphi 0, %s69
    %s84 = sphi 0, %s70
    %s88 = sphi 0, %s88
    %s90 = sphi 0, %s88
    %s91 = sphi 0, %s90
    %s105 = sphi 0, %s91
    %s109 = sphi 0, %s109
    %s111 = sphi 0, %s109
    %s112 = sphi 0, %s111
    %s126 = sphi 0, %s112
    %s130 = sphi 0, %s130
    %s132 = sphi 0, %s130
    %s133 = sphi 0, %s132
    %s147 = sphi 0, %s133
    %s151 = sphi 0, %s151
    %s153 = sphi 0, %s151
    %s154 = sphi 0, %s153
    %s168 = sphi 0, %s154
    %s172 = sphi 0, %s172
    %s174 = sphi 0, %s172
    %s175 = sphi 0, %s174
    %s189 = sphi 0, %s175
    %s193 = sphi 0, %s193
    %s195 = sphi 0, %s193
    %s196 = sphi 0, %s195
    %s210 = sphi 0, %s196
    %s214 = sphi 0, %s214
    %s216 = sphi 0, %s214
    %s217 = sphi 0, %s216
    %s231 = sphi 0, %s217
    %s235 = sphi 0, %s235
    %s237 = sphi 0, %s235
    %s238 = sphi 0, %s237
    %s252 = sphi 0, %s238
    %s256 = sphi 0, %s256
    %s258 = sphi 0, %s256
    %s259 = sphi 0, %s258
    %s273 = sphi 0, %s259
    %s277 = sphi 0, %s277
    %s279 = sphi 0, %s277
    %s280 = sphi 0, %s279
    %s294 = sphi 0, %s280
    %s298 = sphi 0, %s298
    %s300 = sphi 0, %s298
    %s301 = sphi 0, %s300
    %s315 = sphi 0, %s301
    %s323 = sphi 0, %s325
    %s326 = sphi 0, %s323
    %s327 = sphi 0, %s326
    %s343 = sphi 0, %s327
  $region4: #{segmenter_forward.3} parent=0 // loop_header_branch
    %22 = sbr.rel (%p20) target = $region8
  $region5: #{segmenter_forward.3} parent=0 // loop_body
    %s24 = ssub.s32 %s19, 1
    %s25 = ssub.s32 %s19, 2
    %s32 = sadd.s32 1, %s27
    %p33 = scmp.ge.s32.totalorder %s32, 1
    %s34 = scalar_select %p33, 0, %s32
    %s35 = sadd.s32 1, %s26
    %s36 = scalar_select %p33, %s35, %s26
    %p37 = scmp.ge.s32.totalorder %s36, 2
    %s38 = scalar_select %p37, 0, %s36
    %s39 = ssub.s32 %s26, %s38
    %s40 = ssub.s32 %s27, %s34
    %s41 = sor.u32 %s39, %s40
    %p42 = scmp.eq.s32.totalorder %s41, 0
    %s44 = sadd.s32 %s43, 1
    %s45 = scalar_select %p42, %s43, %s44
    %p48 = pneg %p42
    %p49 = scmp.eq.s32.totalorder %s19, 1
    %p50 = por %p48, %p49
    %p51 = scmp.ne.s32.totalorder %s43, %s46
    %p52 = scmp.eq.s32.totalorder %s19, 0
    %p53 = por %p51, %p52
    %p54 = scmp.ne.s32.totalorder %s43, %s46
    %p55 = scmp.eq.s32.totalorder %s24, 1
    %p56 = por %p54, %p55
    %p57 = scmp.ne.s32.totalorder %s46, %s47
    %p58 = scmp.eq.s32.totalorder %s24, 0
    %p59 = por %p57, %p58
    %p60 = scmp.ne.s32.totalorder %s46, %s47
    %p61 = scmp.eq.s32.totalorder %s25, 1
    %p62 = por %p60, %p61
    %p64 = scmp.ne.s32.totalorder %s47, %s63
    %p65 = scmp.eq.s32.totalorder %s25, 0
    %p66 = por %p64, %p65
    %s68 = sadd.s32 %s67, 1
    %p71 = scmp.eq.s32.totalorder %s19, 1
    %p72 = scmp.ne.s32.totalorder %s67, %s69
    %p73 = scmp.eq.s32.totalorder %s19, 0
    %p74 = por %p72, %p73
    %p75 = scmp.ne.s32.totalorder %s67, %s69
    %p76 = scmp.eq.s32.totalorder %s24, 1
    %p77 = por %p75, %p76
    %p78 = scmp.ne.s32.totalorder %s69, %s70
    %p79 = scmp.eq.s32.totalorder %s24, 0
    %p80 = por %p78, %p79
    %p81 = scmp.ne.s32.totalorder %s69, %s70
    %p82 = scmp.eq.s32.totalorder %s25, 1
    %p83 = por %p81, %p82
    %p85 = scmp.ne.s32.totalorder %s70, %s84
    %p86 = scmp.eq.s32.totalorder %s25, 0
    %p87 = por %p85, %p86
    %s89 = sadd.s32 %s88, 1
    %p92 = scmp.eq.s32.totalorder %s19, 1
    %p93 = scmp.ne.s32.totalorder %s88, %s90
    %p94 = scmp.eq.s32.totalorder %s19, 0
    %p95 = por %p93, %p94
    %p96 = scmp.ne.s32.totalorder %s88, %s90
    %p97 = scmp.eq.s32.totalorder %s24, 1
    %p98 = por %p96, %p97
    %p99 = scmp.ne.s32.totalorder %s90, %s91
    %p100 = scmp.eq.s32.totalorder %s24, 0
    %p101 = por %p99, %p100
    %p102 = scmp.ne.s32.totalorder %s90, %s91
    %p103 = scmp.eq.s32.totalorder %s25, 1
    %p104 = por %p102, %p103
    %p106 = scmp.ne.s32.totalorder %s91, %s105
    %p107 = scmp.eq.s32.totalorder %s25, 0
    %p108 = por %p106, %p107
    %s110 = sadd.s32 %s109, 1
    %p113 = scmp.eq.s32.totalorder %s19, 1
    %p114 = scmp.ne.s32.totalorder %s109, %s111
    %p115 = scmp.eq.s32.totalorder %s19, 0
    %p116 = por %p114, %p115
    %p117 = scmp.ne.s32.totalorder %s109, %s111
    %p118 = scmp.eq.s32.totalorder %s24, 1
    %p119 = por %p117, %p118
    %p120 = scmp.ne.s32.totalorder %s111, %s112
    %p121 = scmp.eq.s32.totalorder %s24, 0
    %p122 = por %p120, %p121
    %p123 = scmp.ne.s32.totalorder %s111, %s112
    %p124 = scmp.eq.s32.totalorder %s25, 1
    %p125 = por %p123, %p124
    %p127 = scmp.ne.s32.totalorder %s112, %s126
    %p128 = scmp.eq.s32.totalorder %s25, 0
    %p129 = por %p127, %p128
    %s131 = sadd.s32 %s130, 1
    %p134 = scmp.eq.s32.totalorder %s19, 1
    %p135 = scmp.ne.s32.totalorder %s130, %s132
    %p136 = scmp.eq.s32.totalorder %s19, 0
    %p137 = por %p135, %p136
    %p138 = scmp.ne.s32.totalorder %s130, %s132
    %p139 = scmp.eq.s32.totalorder %s24, 1
    %p140 = por %p138, %p139
    %p141 = scmp.ne.s32.totalorder %s132, %s133
    %p142 = scmp.eq.s32.totalorder %s24, 0
    %p143 = por %p141, %p142
    %p144 = scmp.ne.s32.totalorder %s132, %s133
    %p145 = scmp.eq.s32.totalorder %s25, 1
    %p146 = por %p144, %p145
    %p148 = scmp.ne.s32.totalorder %s133, %s147
    %p149 = scmp.eq.s32.totalorder %s25, 0
    %p150 = por %p148, %p149
    %s152 = sadd.s32 %s151, 1
    %p155 = scmp.eq.s32.totalorder %s19, 1
    %p156 = scmp.ne.s32.totalorder %s151, %s153
    %p157 = scmp.eq.s32.totalorder %s19, 0
    %p158 = por %p156, %p157
    %p159 = scmp.ne.s32.totalorder %s151, %s153
    %p160 = scmp.eq.s32.totalorder %s24, 1
    %p161 = por %p159, %p160
    %p162 = scmp.ne.s32.totalorder %s153, %s154
    %p163 = scmp.eq.s32.totalorder %s24, 0
    %p164 = por %p162, %p163
    %p165 = scmp.ne.s32.totalorder %s153, %s154
    %p166 = scmp.eq.s32.totalorder %s25, 1
    %p167 = por %p165, %p166
    %p169 = scmp.ne.s32.totalorder %s154, %s168
    %p170 = scmp.eq.s32.totalorder %s25, 0
    %p171 = por %p169, %p170
    %s173 = sadd.s32 %s172, 1
    %p176 = scmp.eq.s32.totalorder %s19, 1
    %p177 = scmp.ne.s32.totalorder %s172, %s174
    %p178 = scmp.eq.s32.totalorder %s19, 0
    %p179 = por %p177, %p178
    %p180 = scmp.ne.s32.totalorder %s172, %s174
    %p181 = scmp.eq.s32.totalorder %s24, 1
    %p182 = por %p180, %p181
    %p183 = scmp.ne.s32.totalorder %s174, %s175
    %p184 = scmp.eq.s32.totalorder %s24, 0
    %p185 = por %p183, %p184
    %p186 = scmp.ne.s32.totalorder %s174, %s175
    %p187 = scmp.eq.s32.totalorder %s25, 1
    %p188 = por %p186, %p187
    %p190 = scmp.ne.s32.totalorder %s175, %s189
    %p191 = scmp.eq.s32.totalorder %s25, 0
    %p192 = por %p190, %p191
    %s194 = sadd.s32 %s193, 1
    %p197 = scmp.eq.s32.totalorder %s19, 1
    %p198 = scmp.ne.s32.totalorder %s193, %s195
    %p199 = scmp.eq.s32.totalorder %s19, 0
    %p200 = por %p198, %p199
    %p201 = scmp.ne.s32.totalorder %s193, %s195
    %p202 = scmp.eq.s32.totalorder %s24, 1
    %p203 = por %p201, %p202
    %p204 = scmp.ne.s32.totalorder %s195, %s196
    %p205 = scmp.eq.s32.totalorder %s24, 0
    %p206 = por %p204, %p205
    %p207 = scmp.ne.s32.totalorder %s195, %s196
    %p208 = scmp.eq.s32.totalorder %s25, 1
    %p209 = por %p207, %p208
    %p211 = scmp.ne.s32.totalorder %s196, %s210
    %p212 = scmp.eq.s32.totalorder %s25, 0
    %p213 = por %p211, %p212
    %s215 = sadd.s32 %s214, 1
    %p218 = scmp.eq.s32.totalorder %s19, 1
    %p219 = scmp.ne.s32.totalorder %s214, %s216
    %p220 = scmp.eq.s32.totalorder %s19, 0
    %p221 = por %p219, %p220
    %p222 = scmp.ne.s32.totalorder %s214, %s216
    %p223 = scmp.eq.s32.totalorder %s24, 1
    %p224 = por %p222, %p223
    %p225 = scmp.ne.s32.totalorder %s216, %s217
    %p226 = scmp.eq.s32.totalorder %s24, 0
    %p227 = por %p225, %p226
    %p228 = scmp.ne.s32.totalorder %s216, %s217
    %p229 = scmp.eq.s32.totalorder %s25, 1
    %p230 = por %p228, %p229
    %p232 = scmp.ne.s32.totalorder %s217, %s231
    %p233 = scmp.eq.s32.totalorder %s25, 0
    %p234 = por %p232, %p233
    %s236 = sadd.s32 %s235, 1
    %p239 = scmp.eq.s32.totalorder %s19, 1
    %p240 = scmp.ne.s32.totalorder %s235, %s237
    %p241 = scmp.eq.s32.totalorder %s19, 0
    %p242 = por %p240, %p241
    %p243 = scmp.ne.s32.totalorder %s235, %s237
    %p244 = scmp.eq.s32.totalorder %s24, 1
    %p245 = por %p243, %p244
    %p246 = scmp.ne.s32.totalorder %s237, %s238
    %p247 = scmp.eq.s32.totalorder %s24, 0
    %p248 = por %p246, %p247
    %p249 = scmp.ne.s32.totalorder %s237, %s238
    %p250 = scmp.eq.s32.totalorder %s25, 1
    %p251 = por %p249, %p250
    %p253 = scmp.ne.s32.totalorder %s238, %s252
    %p254 = scmp.eq.s32.totalorder %s25, 0
    %p255 = por %p253, %p254
    %s257 = sadd.s32 %s256, 1
    %p260 = scmp.eq.s32.totalorder %s19, 1
    %p261 = scmp.ne.s32.totalorder %s256, %s258
    %p262 = scmp.eq.s32.totalorder %s19, 0
    %p263 = por %p261, %p262
    %p264 = scmp.ne.s32.totalorder %s256, %s258
    %p265 = scmp.eq.s32.totalorder %s24, 1
    %p266 = por %p264, %p265
    %p267 = scmp.ne.s32.totalorder %s258, %s259
    %p268 = scmp.eq.s32.totalorder %s24, 0
    %p269 = por %p267, %p268
    %p270 = scmp.ne.s32.totalorder %s258, %s259
    %p271 = scmp.eq.s32.totalorder %s25, 1
    %p272 = por %p270, %p271
    %p274 = scmp.ne.s32.totalorder %s259, %s273
    %p275 = scmp.eq.s32.totalorder %s25, 0
    %p276 = por %p274, %p275
    %s278 = sadd.s32 %s277, 1
    %p281 = scmp.eq.s32.totalorder %s19, 1
    %p282 = scmp.ne.s32.totalorder %s277, %s279
    %p283 = scmp.eq.s32.totalorder %s19, 0
    %p284 = por %p282, %p283
    %p285 = scmp.ne.s32.totalorder %s277, %s279
    %p286 = scmp.eq.s32.totalorder %s24, 1
    %p287 = por %p285, %p286
    %p288 = scmp.ne.s32.totalorder %s279, %s280
    %p289 = scmp.eq.s32.totalorder %s24, 0
    %p290 = por %p288, %p289
    %p291 = scmp.ne.s32.totalorder %s279, %s280
    %p292 = scmp.eq.s32.totalorder %s25, 1
    %p293 = por %p291, %p292
    %p295 = scmp.ne.s32.totalorder %s280, %s294
    %p296 = scmp.eq.s32.totalorder %s25, 0
    %p297 = por %p295, %p296
    %s299 = sadd.s32 %s298, 1
    %p302 = scmp.eq.s32.totalorder %s19, 1
    %p303 = scmp.ne.s32.totalorder %s298, %s300
    %p304 = scmp.eq.s32.totalorder %s19, 0
    %p305 = por %p303, %p304
    %p306 = scmp.ne.s32.totalorder %s298, %s300
    %p307 = scmp.eq.s32.totalorder %s24, 1
    %p308 = por %p306, %p307
    %p309 = scmp.ne.s32.totalorder %s300, %s301
    %p310 = scmp.eq.s32.totalorder %s24, 0
    %p311 = por %p309, %p310
    %p312 = scmp.ne.s32.totalorder %s300, %s301
    %p313 = scmp.eq.s32.totalorder %s25, 1
    %p314 = por %p312, %p313
    %p316 = scmp.ne.s32.totalorder %s301, %s315
    %p317 = scmp.eq.s32.totalorder %s25, 0
    %p318 = por %p316, %p317
    %s319 = ssub.s32 %s26, %s38
    %s320 = ssub.s32 %s27, %s34
    %s321 = sor.u32 %s319, %s320
    %p322 = scmp.eq.s32.totalorder %s321, 0
    %s324 = sadd.s32 %s323, 1
    %s325 = scalar_select %p322, %s323, %s324
    %p328 = pneg %p322
    %p329 = scmp.eq.s32.totalorder %s19, 1
    %p330 = por %p328, %p329
    %p331 = scmp.ne.s32.totalorder %s323, %s326
    %p332 = scmp.eq.s32.totalorder %s19, 0
    %p333 = por %p331, %p332
    %p334 = scmp.ne.s32.totalorder %s323, %s326
    %p335 = scmp.eq.s32.totalorder %s24, 1
    %p336 = por %p334, %p335
    %p337 = scmp.ne.s32.totalorder %s326, %s327
    %p338 = scmp.eq.s32.totalorder %s24, 0
    %p339 = por %p337, %p338
    %p340 = scmp.ne.s32.totalorder %s326, %s327
    %p341 = scmp.eq.s32.totalorder %s25, 1
    %p342 = por %p340, %p341
    %p344 = scmp.ne.s32.totalorder %s327, %s343
    %p345 = scmp.eq.s32.totalorder %s25, 0
    %p346 = por %p344, %p345
    %p347 = scmp.le.s32.totalorder 1, %s19
    %p348 = scmp.lt.s32.totalorder %s19, 3
    %p349 = pnand %p347, %p348
    %p350 = pneg %p349
    // Predicated region
    $region9: #{segmenter_forward.3} parent=5 // pred_check
      _
    $region10: #{segmenter_forward.3} parent=5 // pred_check_branch
      %352 = sbr.rel (%p349) target = $region12
    $region11: #{segmenter_forward.3} parent=5 // pred_region
      %s353 = ssub.s32 %s19, 1
      // Predicated region
      $region13: #{segmenter_forward.3} parent=11 // pred_check
        %p354 = pneg %p80
      $region14: #{segmenter_forward.3} parent=11 // pred_check_branch
        %356 = sbr.rel (%p354) target = $region16
      $region15: #{segmenter_forward.3} parent=11 // pred_region
        _
      $region16: #{segmenter_forward.3} parent=11 // pred_fallthru
        _
      // Predicated region
      $region17: #{segmenter_forward.3} parent=11 // pred_check
        %p357 = pneg %p101
      $region18: #{segmenter_forward.3} parent=11 // pred_check_branch
        %359 = sbr.rel (%p357) target = $region20
      $region19: #{segmenter_forward.3} parent=11 // pred_region
        _
      $region20: #{segmenter_forward.3} parent=11 // pred_fallthru
        _
      // Predicated region
      $region21: #{segmenter_forward.3} parent=11 // pred_check
        %p360 = pneg %p122
      $region22: #{segmenter_forward.3} parent=11 // pred_check_branch
        %362 = sbr.rel (%p360) target = $region24
      $region23: #{segmenter_forward.3} parent=11 // pred_region
        _
      $region24: #{segmenter_forward.3} parent=11 // pred_fallthru
        _
      // Predicated region
      $region25: #{segmenter_forward.3} parent=11 // pred_check
        %p363 = pneg %p143
      $region26: #{segmenter_forward.3} parent=11 // pred_check_branch
        %365 = sbr.rel (%p363) target = $region28
      $region27: #{segmenter_forward.3} parent=11 // pred_region
        _
      $region28: #{segmenter_forward.3} parent=11 // pred_fallthru
        _
      // Predicated region
      $region29: #{segmenter_forward.3} parent=11 // pred_check
        %p366 = pneg %p164
      $region30: #{segmenter_forward.3} parent=11 // pred_check_branch
        %368 = sbr.rel (%p366) target = $region32
      $region31: #{segmenter_forward.3} parent=11 // pred_region
        _
      $region32: #{segmenter_forward.3} parent=11 // pred_fallthru
        _
      // Predicated region
      $region33: #{segmenter_forward.3} parent=11 // pred_check
        %p369 = pneg %p185
      $region34: #{segmenter_forward.3} parent=11 // pred_check_branch
        %371 = sbr.rel (%p369) target = $region36
      $region35: #{segmenter_forward.3} parent=11 // pred_region
        _
      $region36: #{segmenter_forward.3} parent=11 // pred_fallthru
        _
      // Predicated region
      $region37: #{segmenter_forward.3} parent=11 // pred_check
        %p372 = pneg %p206
      $region38: #{segmenter_forward.3} parent=11 // pred_check_branch
        %374 = sbr.rel (%p372) target = $region40
      $region39: #{segmenter_forward.3} parent=11 // pred_region
        _
      $region40: #{segmenter_forward.3} parent=11 // pred_fallthru
        _
      // Predicated region
      $region41: #{segmenter_forward.3} parent=11 // pred_check
        %p375 = pneg %p227
      $region42: #{segmenter_forward.3} parent=11 // pred_check_branch
        %377 = sbr.rel (%p375) target = $region44
      $region43: #{segmenter_forward.3} parent=11 // pred_region
        _
      $region44: #{segmenter_forward.3} parent=11 // pred_fallthru
        _
      // Predicated region
      $region45: #{segmenter_forward.3} parent=11 // pred_check
        %p378 = pneg %p248
      $region46: #{segmenter_forward.3} parent=11 // pred_check_branch
        %380 = sbr.rel (%p378) target = $region48
      $region47: #{segmenter_forward.3} parent=11 // pred_region
        _
      $region48: #{segmenter_forward.3} parent=11 // pred_fallthru
        _
      // Predicated region
      $region49: #{segmenter_forward.3} parent=11 // pred_check
        %p381 = pneg %p269
      $region50: #{segmenter_forward.3} parent=11 // pred_check_branch
        %383 = sbr.rel (%p381) target = $region52
      $region51: #{segmenter_forward.3} parent=11 // pred_region
        _
      $region52: #{segmenter_forward.3} parent=11 // pred_fallthru
        _
      // Predicated region
      $region53: #{segmenter_forward.3} parent=11 // pred_check
        %p384 = pneg %p290
      $region54: #{segmenter_forward.3} parent=11 // pred_check_branch
        %386 = sbr.rel (%p384) target = $region56
      $region55: #{segmenter_forward.3} parent=11 // pred_region
        _
      $region56: #{segmenter_forward.3} parent=11 // pred_fallthru
        _
      // Predicated region
      $region57: #{segmenter_forward.3} parent=11 // pred_check
        %p387 = pneg %p311
      $region58: #{segmenter_forward.3} parent=11 // pred_check_branch
        %389 = sbr.rel (%p387) target = $region60
      $region59: #{segmenter_forward.3} parent=11 // pred_region
        _
      $region60: #{segmenter_forward.3} parent=11 // pred_fallthru
        _
    $region12: #{segmenter_forward.3} parent=5 // pred_fallthru
      _
    %p390 = scmp.lt.s32.totalorder %s19, 2
    // Predicated region
    $region61: #{segmenter_forward.3} parent=5 // pred_check
      %p391 = pneg %p390
    $region62: #{segmenter_forward.3} parent=5 // pred_check_branch
      %393 = sbr.rel (%p391) target = $region64
    $region63: #{segmenter_forward.3} parent=5 // pred_region
      // Predicated region
      $region65: #{segmenter_forward.3} parent=63 // pred_check
        %p394 = pneg %p53
      $region66: #{segmenter_forward.3} parent=63 // pred_check_branch
        %396 = sbr.rel (%p394) target = $region68
      $region67: #{segmenter_forward.3} parent=63 // pred_region
        %p397 = scmp.lt.s32.totalorder %s26, 1
        %s398 = scalar_select %p397, %s26, 1
        %p399 = scmp.lt.s32.totalorder %s27, 0
        %s400 = scalar_select %p399, %s27, 0
        %s401 = smul.addr %s398, 3
        %s402 = sadd.s32 %s400, %s401
        %s403 = smul.addr %s402, 8
        %s404 = scalar_lea.vmem %s0, %s403
      $region68: #{segmenter_forward.3} parent=63 // pred_fallthru
        _
    $region64: #{segmenter_forward.3} parent=5 // pred_fallthru
      _
    %p405 = scmp.le.s32.totalorder 1, %s19
    %p406 = scmp.lt.s32.totalorder %s19, 3
    %p407 = pnand %p405, %p406
    %p408 = pneg %p407
    // Predicated region
    $region69: #{segmenter_forward.3} parent=5 // pred_check
      _
    $region70: #{segmenter_forward.3} parent=5 // pred_check_branch
      %410 = sbr.rel (%p407) target = $region72
    $region71: #{segmenter_forward.3} parent=5 // pred_region
      %s411 = ssub.s32 %s19, 1
      %p412 = scmp.lt.s32.totalorder %s28, 1
      %s413 = scalar_select %p412, %s28, 1
      %p414 = scmp.lt.s32.totalorder %s29, 0
      %s415 = scalar_select %p414, %s29, 0
      %s416 = smul.addr %s413, 3
      %s417 = sadd.s32 %s415, %s416
      %s418 = smul.addr %s417, 8
      %s419 = scalar_lea.vmem %s0, %s418
      %p420 = pneg %p59
      %p421 = pneg %p56
      %p422 = pneg %p80
      %p423 = pneg %p77
      %p424 = pneg %p101
      %p425 = pneg %p98
      %p426 = pneg %p122
      %p427 = pneg %p119
      %p428 = pneg %p143
      %p429 = pneg %p140
      %p430 = pneg %p164
      %p431 = pneg %p161
      %p432 = pneg %p185
      %p433 = pneg %p182
      %p434 = pneg %p206
      %p435 = pneg %p203
      %p436 = pneg %p227
      %p437 = pneg %p224
      %p438 = pneg %p248
      %p439 = pneg %p245
      %p440 = pneg %p269
      %p441 = pneg %p266
      %p442 = pneg %p290
      %p443 = pneg %p287
      %p444 = pneg %p311
      %p445 = pneg %p308
      %p446 = pneg %p339
      %p447 = pneg %p336
      %p448 = scmp.lt.s32.totalorder %s28, 1
      %s449 = scalar_select %p448, %s28, 1
      %p450 = scmp.lt.s32.totalorder %s29, 0
      %s451 = scalar_select %p450, %s29, 0
      %s452 = sadd.s32 %s451, %s449
      %s453 = smul.addr %s452, 8
      %s454 = scalar_lea.vmem %s13, %s453
      %p455 = scmp.lt.s32.totalorder %s28, 1
      %s456 = scalar_select %p455, %s28, 1
      %p457 = scmp.lt.s32.totalorder %s29, 0
      %s458 = scalar_select %p457, %s29, 0
      %s459 = smul.addr %s456, 3
      %s460 = sadd.s32 %s458, %s459
      %s461 = smul.addr %s460, 8
      %s462 = scalar_lea.vmem %s0, %s461
      %p463 = scmp.lt.s32.totalorder %s28, 1
      %s464 = scalar_select %p463, %s28, 1
      %p465 = scmp.lt.s32.totalorder %s29, 0
      %s466 = scalar_select %p465, %s29, 0
      %s467 = sadd.s32 %s466, %s464
      %s468 = smul.addr %s467, 8
      %s469 = scalar_lea.vmem %s13, %s468
      %v470 = vld [vmem:[%s462] sm:$0xff]
      %s471 = scalar_lea.vmem %s462, 8
      %v472 = vld [vmem:[%s471] sm:$0xff]
      %s473 = scalar_lea.vmem %s462, 16
      %v474 = vld [vmem:[%s473] sm:$0xff]
      %476 = vrot.lane.b32.xlu0 %v472, 32
      %v477 = vpop.permute.xlu0 %476
      %480 = vrot.lane.b32.xlu0 %v474, 64
      %v481 = vpop.permute.xlu0 %480
      %vm483 = vcmask 261120
      %v484 = vsel %vm483, %v470, %v477
      %vm485 = vcmask 523264
      %v486 = vsel %vm485, %v484, %v481
      %v487 = vld [vmem:[%s1] sm:$0xff]
      %v488 = vld [vmem:[%s1 + $0x8] sm:$0xff]
      %v489 = vld [vmem:[%s1 + $0x10] sm:$0xff]
      %v490 = vld [vmem:[%s1 + $0x18] sm:$0xff]
      %v491 = vld [vmem:[%s1 + $0x20] sm:$0xff]
      %v492 = vld [vmem:[%s1 + $0x28] sm:$0xff]
      %v493 = vld [vmem:[%s1 + $0x30] sm:$0xff]
      %v494 = vld [vmem:[%s1 + $0x38] sm:$0xff]
      %v495 = vld [vmem:[%s1 + $0x40] sm:$0xff]
      %v496 = vld [vmem:[%s1 + $0x48] sm:$0xff]
      %v497 = vld [vmem:[%s1 + $0x50] sm:$0xff]
      %v498 = vld [vmem:[%s1 + $0x58] sm:$0xff]
      %v499 = vld [vmem:[%s2] sm:$0x1]
      %v501 = vlaneseq
      %v502 = vshrl.u32 %v501, 7
      %v503 = vsub.s32 0, %v502
      %v504 = vrot.slane %v499, %v503
      %vm506 = vcmask 785408
      %v508 = vsel %vm506, %v486, 0
      %510 = vmatprep.subr.mxu0 0.0
      %511 = vmatpush1.msra.mxu0 %v487
      %512 = vmatprep.subr.mxu0 0.0
      %513 = vmatpush1.msra.mxu0 %v488
      %514 = vmatprep.subr.mxu0 0.0
      %515 = vmatpush1.msra.mxu0 %v489
      %516 = vmatprep.subr.mxu0 0.0
      %517 = vmatpush1.msra.mxu0 %v490
      %518 = vmatprep.subr.mxu0 0.0
      %519 = vmatpush1.msra.mxu0 %v491
      %520 = vmatprep.subr.mxu0 0.0
      %521 = vmatpush1.msra.mxu0 %v492
      %522 = vmatprep.subr.mxu0 0.0
      %523 = vmatpush1.msra.mxu0 %v493
      %524 = vmatprep.subr.mxu0 0.0
      %525 = vmatpush1.msra.mxu0 %v494
      %526 = vmatprep.subr.mxu0 0.0
      %527 = vmatpush1.msra.mxu0 %v495
      %528 = vmatprep.subr.mxu0 0.0
      %529 = vmatpush1.msra.mxu0 %v496
      %530 = vmatprep.subr.mxu0 0.0
      %531 = vmatpush1.msra.mxu0 %v497
      %532 = vmatprep.subr.mxu0 0.0
      %533 = vmatpush1.msra.mxu0 %v498
      %534 = vmatprep.subr.mxu0 0.0
      %535 = vmatpush1.msra.mxu0 0.0
      %536 = vmatprep.subr.mxu0 0.0
      %537 = vmatpush1.msra.mxu0 0.0
      %538 = vmatprep.subr.mxu0 0.0
      %539 = vmatpush1.msra.mxu0 0.0
      %540 = vmatprep.subr.mxu0 0.0
      %541 = vmatpush1.msra.mxu0 0.0
      %542 = vmatprep.subr.mxu0 0.0
      %543 = vmatpush1.msra.mxu0 0.0
      %544 = vmatprep.subr.mxu0 0.0
      %545 = vmatpush1.msra.mxu0 0.0
      %546 = vmatprep.subr.mxu0 0.0
      %547 = vmatpush1.msra.mxu0 0.0
      %548 = vmatprep.subr.mxu0 0.0
      %549 = vmatpush1.msra.mxu0 0.0
      %550 = vmatprep.subr.mxu0 0.0
      %551 = vmatpush1.msra.mxu0 0.0
      %552 = vmatprep.subr.mxu0 0.0
      %553 = vmatpush1.msra.mxu0 0.0
      %554 = vmatprep.subr.mxu0 0.0
      %555 = vmatpush1.msra.mxu0 0.0
      %556 = vmatprep.subr.mxu0 0.0
      %557 = vmatpush1.msra.mxu0 0.0
      %558 = vmatprep.subr.mxu0 0.0
      %559 = vmatpush1.msra.mxu0 0.0
      %560 = vmatprep.subr.mxu0 0.0
      %561 = vmatpush1.msra.mxu0 0.0
      %562 = vmatprep.subr.mxu0 0.0
      %563 = vmatpush1.msra.mxu0 0.0
      %564 = vmatprep.subr.mxu0 0.0
      %565 = vmatpush1.msra.mxu0 0.0
      %566 = vmatprep.subr.mxu0 0.0
      %567 = vmatpush1.msra.mxu0 0.0
      %568 = vmatprep.subr.mxu0 0.0
      %569 = vmatpush1.msra.mxu0 0.0
      %570 = vmatprep.subr.mxu0 0.0
      %571 = vmatpush1.msra.mxu0 0.0
      %572 = vmatprep.subr.mxu0 0.0
      %573 = vmatpush1.msra.mxu0 0.0
      %574 = vmatprep.mubr.f32.mxu0 0.0
      %575 = vmatmul.mubr.f32.gmra.mrb[0].mxu0 %v508
      %v576 = vpop.f32.mrb[0].mxu0
      %v577 = vadd.f32 %v504, %v576
      %v578 = vpop.f32.mrb[0].mxu0
      %579 = vdwg.mxu0
      %v580 = vmax.f32 %v577, 0.0
      %v581 = vld [vmem:[%s3] sm:$0xff]
      %v582 = vld [vmem:[%s3 + $0x8] sm:$0xff]
      %v583 = vld [vmem:[%s3 + $0x10] sm:$0xff]
      %v584 = vld [vmem:[%s3 + $0x18] sm:$0xff]
      %v585 = vld [vmem:[%s4] sm:$0x1]
      %v587 = vlaneseq
      %v588 = vshrl.u32 %v587, 7
      %v589 = vsub.s32 0, %v588
      %v590 = vrot.slane %v585, %v589
      %v593 = vsel %vm483, %v580, 0
      %595 = vmatprep.subr.mxu0 0.0
      %596 = vmatpush1.msra.mxu0 %v581
      %597 = vmatprep.subr.mxu0 0.0
      %598 = vmatpush1.msra.mxu0 %v582
      %599 = vmatprep.subr.mxu0 0.0
      %600 = vmatpush1.msra.mxu0 %v583
      %601 = vmatprep.subr.mxu0 0.0
      %602 = vmatpush1.msra.mxu0 %v584
      %603 = vmatprep.subr.mxu0 0.0
      %604 = vmatpush1.msra.mxu0 0.0
      %605 = vmatprep.subr.mxu0 0.0
      %606 = vmatpush1.msra.mxu0 0.0
      %607 = vmatprep.subr.mxu0 0.0
      %608 = vmatpush1.msra.mxu0 0.0
      %609 = vmatprep.subr.mxu0 0.0
      %610 = vmatpush1.msra.mxu0 0.0
      %611 = vmatprep.subr.mxu0 0.0
      %612 = vmatpush1.msra.mxu0 0.0
      %613 = vmatprep.subr.mxu0 0.0
      %614 = vmatpush1.msra.mxu0 0.0
      %615 = vmatprep.subr.mxu0 0.0
      %616 = vmatpush1.msra.mxu0 0.0
      %617 = vmatprep.subr.mxu0 0.0
      %618 = vmatpush1.msra.mxu0 0.0
      %619 = vmatprep.subr.mxu0 0.0
      %620 = vmatpush1.msra.mxu0 0.0
      %621 = vmatprep.subr.mxu0 0.0
      %622 = vmatpush1.msra.mxu0 0.0
      %623 = vmatprep.subr.mxu0 0.0
      %624 = vmatpush1.msra.mxu0 0.0
      %625 = vmatprep.subr.mxu0 0.0
      %626 = vmatpush1.msra.mxu0 0.0
      %627 = vmatprep.subr.mxu0 0.0
      %628 = vmatpush1.msra.mxu0 0.0
      %629 = vmatprep.subr.mxu0 0.0
      %630 = vmatpush1.msra.mxu0 0.0
      %631 = vmatprep.subr.mxu0 0.0
      %632 = vmatpush1.msra.mxu0 0.0
      %633 = vmatprep.subr.mxu0 0.0
      %634 = vmatpush1.msra.mxu0 0.0
      %635 = vmatprep.subr.mxu0 0.0
      %636 = vmatpush1.msra.mxu0 0.0
      %637 = vmatprep.subr.mxu0 0.0
      %638 = vmatpush1.msra.mxu0 0.0
      %639 = vmatprep.subr.mxu0 0.0
      %640 = vmatpush1.msra.mxu0 0.0
      %641 = vmatprep.subr.mxu0 0.0
      %642 = vmatpush1.msra.mxu0 0.0
      %643 = vmatprep.subr.mxu0 0.0
      %644 = vmatpush1.msra.mxu0 0.0
      %645 = vmatprep.subr.mxu0 0.0
      %646 = vmatpush1.msra.mxu0 0.0
      %647 = vmatprep.subr.mxu0 0.0
      %648 = vmatpush1.msra.mxu0 0.0
      %649 = vmatprep.subr.mxu0 0.0
      %650 = vmatpush1.msra.mxu0 0.0
      %651 = vmatprep.subr.mxu0 0.0
      %652 = vmatpush1.msra.mxu0 0.0
      %653 = vmatprep.subr.mxu0 0.0
      %654 = vmatpush1.msra.mxu0 0.0
      %655 = vmatprep.subr.mxu0 0.0
      %656 = vmatpush1.msra.mxu0 0.0
      %657 = vmatprep.subr.mxu0 0.0
      %658 = vmatpush1.msra.mxu0 0.0
      %659 = vmatprep.mubr.f32.mxu0 0.0
      %660 = vmatmul.mubr.f32.gmra.mrb[0].mxu0 %v593
      %v661 = vpop.f32.mrb[0].mxu0
      %v662 = vadd.f32 %v590, %v661
      %v663 = vpop.f32.mrb[0].mxu0
      %664 = vdwg.mxu0
      %v665 = vmax.f32 %v662, 0.0
      %v666 = vld [vmem:[%s5] sm:$0xff]
      %v667 = vld [vmem:[%s5 + $0x8] sm:$0xff]
      %v668 = vld [vmem:[%s5 + $0x10] sm:$0xff]
      %v669 = vld [vmem:[%s5 + $0x18] sm:$0xff]
      %v670 = vld [vmem:[%s6] sm:$0x1]
      %v672 = vlaneseq
      %v673 = vshrl.u32 %v672, 7
      %v674 = vsub.s32 0, %v673
      %v675 = vrot.slane %v670, %v674
      %v678 = vsel %vm483, %v665, 0
      %680 = vmatprep.subr.mxu0 0.0
      %681 = vmatpush1.msra.mxu0 %v666
      %682 = vmatprep.subr.mxu0 0.0
      %683 = vmatpush1.msra.mxu0 %v667
      %684 = vmatprep.subr.mxu0 0.0
      %685 = vmatpush1.msra.mxu0 %v668
      %686 = vmatprep.subr.mxu0 0.0
      %687 = vmatpush1.msra.mxu0 %v669
      %688 = vmatprep.subr.mxu0 0.0
      %689 = vmatpush1.msra.mxu0 0.0
      %690 = vmatprep.subr.mxu0 0.0
      %691 = vmatpush1.msra.mxu0 0.0
      %692 = vmatprep.subr.mxu0 0.0
      %693 = vmatpush1.msra.mxu0 0.0
      %694 = vmatprep.subr.mxu0 0.0
      %695 = vmatpush1.msra.mxu0 0.0
      %696 = vmatprep.subr.mxu0 0.0
      %697 = vmatpush1.msra.mxu0 0.0
      %698 = vmatprep.subr.mxu0 0.0
      %699 = vmatpush1.msra.mxu0 0.0
      %700 = vmatprep.subr.mxu0 0.0
      %701 = vmatpush1.msra.mxu0 0.0
      %702 = vmatprep.subr.mxu0 0.0
      %703 = vmatpush1.msra.mxu0 0.0
      %704 = vmatprep.subr.mxu0 0.0
      %705 = vmatpush1.msra.mxu0 0.0
      %706 = vmatprep.subr.mxu0 0.0
      %707 = vmatpush1.msra.mxu0 0.0
      %708 = vmatprep.subr.mxu0 0.0
      %709 = vmatpush1.msra.mxu0 0.0
      %710 = vmatprep.subr.mxu0 0.0
      %711 = vmatpush1.msra.mxu0 0.0
      %712 = vmatprep.subr.mxu0 0.0
      %713 = vmatpush1.msra.mxu0 0.0
      %714 = vmatprep.subr.mxu0 0.0
      %715 = vmatpush1.msra.mxu0 0.0
      %716 = vmatprep.subr.mxu0 0.0
      %717 = vmatpush1.msra.mxu0 0.0
      %718 = vmatprep.subr.mxu0 0.0
      %719 = vmatpush1.msra.mxu0 0.0
      %720 = vmatprep.subr.mxu0 0.0
      %721 = vmatpush1.msra.mxu0 0.0
      %722 = vmatprep.subr.mxu0 0.0
      %723 = vmatpush1.msra.mxu0 0.0
      %724 = vmatprep.subr.mxu0 0.0
      %725 = vmatpush1.msra.mxu0 0.0
      %726 = vmatprep.subr.mxu0 0.0
      %727 = vmatpush1.msra.mxu0 0.0
      %728 = vmatprep.subr.mxu0 0.0
      %729 = vmatpush1.msra.mxu0 0.0
      %730 = vmatprep.subr.mxu0 0.0
      %731 = vmatpush1.msra.mxu0 0.0
      %732 = vmatprep.subr.mxu0 0.0
      %733 = vmatpush1.msra.mxu0 0.0
      %734 = vmatprep.subr.mxu0 0.0
      %735 = vmatpush1.msra.mxu0 0.0
      %736 = vmatprep.subr.mxu0 0.0
      %737 = vmatpush1.msra.mxu0 0.0
      %738 = vmatprep.subr.mxu0 0.0
      %739 = vmatpush1.msra.mxu0 0.0
      %740 = vmatprep.subr.mxu0 0.0
      %741 = vmatpush1.msra.mxu0 0.0
      %742 = vmatprep.subr.mxu0 0.0
      %743 = vmatpush1.msra.mxu0 0.0
      %744 = vmatprep.mubr.f32.mxu0 0.0
      %745 = vmatmul.mubr.f32.gmra.mrb[0].mxu0 %v678
      %v746 = vpop.f32.mrb[0].mxu0
      %v747 = vadd.f32 %v675, %v746
      %v748 = vpop.f32.mrb[0].mxu0
      %749 = vdwg.mxu0
      %v750 = vmax.f32 %v747, 0.0
      %v751 = vadd.f32 %v580, %v750
      %v752 = vsel %vm483, %v751, 0.0
      %753 = vadd.xlane.f32.xlu0 %v752
      %v754 = vpop.xlane.xlu0 %753
      %v755 = vrcp.pop 32.0
      %v756 = vmul.f32 %v754, %v755
      %v757 = vsub.f32 %v751, %v756
      %v758 = vmul.f32 %v757, %v757
      %v759 = vsel %vm483, %v758, 0.0
      %760 = vadd.xlane.f32.xlu0 %v759
      %v761 = vpop.xlane.xlu0 %760
      %v762 = vmul.f32 %v761, %v755
      %v763 = vadd.f32 %v762, 1e-05
      %v764 = vrsqrt.pop %v763
      %v765 = vmul.f32 %v757, %v764
      %v766 = vld [vmem:[%s7] sm:$0x1]
      %v768 = vlaneseq
      %v769 = vshrl.u32 %v768, 7
      %v770 = vsub.s32 0, %v769
      %v771 = vrot.slane %v766, %v770
      %v773 = vmul.f32 %v765, %v771
      %v774 = vld [vmem:[%s8] sm:$0x1]
      %v776 = vlaneseq
      %v777 = vshrl.u32 %v776, 7
      %v778 = vsub.s32 0, %v777
      %v779 = vrot.slane %v774, %v778
      %v781 = vadd.f32 %v773, %v779
      %v782 = vld [vmem:[%s9] sm:$0xff]
      %v783 = vld [vmem:[%s9 + $0x8] sm:$0xff]
      %v784 = vld [vmem:[%s9 + $0x10] sm:$0xff]
      %v785 = vld [vmem:[%s9 + $0x18] sm:$0xff]
      %v786 = vld [vmem:[%s10] sm:$0x1]
      %v788 = vlaneseq
      %v789 = vshrl.u32 %v788, 7
      %v790 = vsub.s32 0, %v789
      %v791 = vrot.slane %v786, %v790
      %v794 = vsel %vm483, %v781, 0
      %796 = vmatprep.subr.mxu0 0.0
      %797 = vmatpush1.msra.mxu0 %v782
      %798 = vmatprep.subr.mxu0 0.0
      %799 = vmatpush1.msra.mxu0 %v783
      %800 = vmatprep.subr.mxu0 0.0
      %801 = vmatpush1.msra.mxu0 %v784
      %802 = vmatprep.subr.mxu0 0.0
      %803 = vmatpush1.msra.mxu0 %v785
      %804 = vmatprep.subr.mxu0 0.0
      %805 = vmatpush1.msra.mxu0 0.0
      %806 = vmatprep.subr.mxu0 0.0
      %807 = vmatpush1.msra.mxu0 0.0
      %808 = vmatprep.subr.mxu0 0.0
      %809 = vmatpush1.msra.mxu0 0.0
      %810 = vmatprep.subr.mxu0 0.0
      %811 = vmatpush1.msra.mxu0 0.0
      %812 = vmatprep.subr.mxu0 0.0
      %813 = vmatpush1.msra.mxu0 0.0
      %814 = vmatprep.subr.mxu0 0.0
      %815 = vmatpush1.msra.mxu0 0.0
      %816 = vmatprep.subr.mxu0 0.0
      %817 = vmatpush1.msra.mxu0 0.0
      %818 = vmatprep.subr.mxu0 0.0
      %819 = vmatpush1.msra.mxu0 0.0
      %820 = vmatprep.subr.mxu0 0.0
      %821 = vmatpush1.msra.mxu0 0.0
      %822 = vmatprep.subr.mxu0 0.0
      %823 = vmatpush1.msra.mxu0 0.0
      %824 = vmatprep.subr.mxu0 0.0
      %825 = vmatpush1.msra.mxu0 0.0
      %826 = vmatprep.subr.mxu0 0.0
      %827 = vmatpush1.msra.mxu0 0.0
      %828 = vmatprep.subr.mxu0 0.0
      %829 = vmatpush1.msra.mxu0 0.0
      %830 = vmatprep.subr.mxu0 0.0
      %831 = vmatpush1.msra.mxu0 0.0
      %832 = vmatprep.subr.mxu0 0.0
      %833 = vmatpush1.msra.mxu0 0.0
      %834 = vmatprep.subr.mxu0 0.0
      %835 = vmatpush1.msra.mxu0 0.0
      %836 = vmatprep.subr.mxu0 0.0
      %837 = vmatpush1.msra.mxu0 0.0
      %838 = vmatprep.subr.mxu0 0.0
      %839 = vmatpush1.msra.mxu0 0.0
      %840 = vmatprep.subr.mxu0 0.0
      %841 = vmatpush1.msra.mxu0 0.0
      %842 = vmatprep.subr.mxu0 0.0
      %843 = vmatpush1.msra.mxu0 0.0
      %844 = vmatprep.subr.mxu0 0.0
      %845 = vmatpush1.msra.mxu0 0.0
      %846 = vmatprep.subr.mxu0 0.0
      %847 = vmatpush1.msra.mxu0 0.0
      %848 = vmatprep.subr.mxu0 0.0
      %849 = vmatpush1.msra.mxu0 0.0
      %850 = vmatprep.subr.mxu0 0.0
      %851 = vmatpush1.msra.mxu0 0.0
      %852 = vmatprep.subr.mxu0 0.0
      %853 = vmatpush1.msra.mxu0 0.0
      %854 = vmatprep.subr.mxu0 0.0
      %855 = vmatpush1.msra.mxu0 0.0
      %856 = vmatprep.subr.mxu0 0.0
      %857 = vmatpush1.msra.mxu0 0.0
      %858 = vmatprep.subr.mxu0 0.0
      %859 = vmatpush1.msra.mxu0 0.0
      %860 = vmatprep.mubr.f32.mxu0 0.0
      %861 = vmatmul.mubr.f32.gmra.mrb[0].mxu0 %v794
      %v862 = vpop.f32.mrb[0].mxu0
      %v863 = vadd.f32 %v791, %v862
      %v864 = vpop.f32.mrb[0].mxu0
      %865 = vdwg.mxu0
      %v866 = vmax.f32 %v863, 0.0
      %v867 = vld [vmem:[%s11] sm:$0xff]
      %v868 = vld [vmem:[%s11 + $0x8] sm:$0xff]
      %v869 = vld [vmem:[%s11 + $0x10] sm:$0xff]
      %v870 = vld [vmem:[%s11 + $0x18] sm:$0xff]
      %v871 = vld [vmem:[%s12] sm:$0x1]
      %v873 = vlaneseq
      %v874 = vshrl.u32 %v873, 7
      %v875 = vsub.s32 0, %v874
      %v876 = vrot.slane %v871, %v875
      %v879 = vsel %vm483, %v866, 0
      %881 = vmatprep.subr.mxu0 0.0
      %882 = vmatpush1.msra.mxu0 %v867
      %883 = vmatprep.subr.mxu0 0.0
      %884 = vmatpush1.msra.mxu0 %v868
      %885 = vmatprep.subr.mxu0 0.0
      %886 = vmatpush1.msra.mxu0 %v869
      %887 = vmatprep.subr.mxu0 0.0
      %888 = vmatpush1.msra.mxu0 %v870
      %889 = vmatprep.subr.mxu0 0.0
      %890 = vmatpush1.msra.mxu0 0.0
      %891 = vmatprep.subr.mxu0 0.0
      %892 = vmatpush1.msra.mxu0 0.0
      %893 = vmatprep.subr.mxu0 0.0
      %894 = vmatpush1.msra.mxu0 0.0
      %895 = vmatprep.subr.mxu0 0.0
      %896 = vmatpush1.msra.mxu0 0.0
      %897 = vmatprep.subr.mxu0 0.0
      %898 = vmatpush1.msra.mxu0 0.0
      %899 = vmatprep.subr.mxu0 0.0
      %900 = vmatpush1.msra.mxu0 0.0
      %901 = vmatprep.subr.mxu0 0.0
      %902 = vmatpush1.msra.mxu0 0.0
      %903 = vmatprep.subr.mxu0 0.0
      %904 = vmatpush1.msra.mxu0 0.0
      %905 = vmatprep.subr.mxu0 0.0
      %906 = vmatpush1.msra.mxu0 0.0
      %907 = vmatprep.subr.mxu0 0.0
      %908 = vmatpush1.msra.mxu0 0.0
      %909 = vmatprep.subr.mxu0 0.0
      %910 = vmatpush1.msra.mxu0 0.0
      %911 = vmatprep.subr.mxu0 0.0
      %912 = vmatpush1.msra.mxu0 0.0
      %913 = vmatprep.subr.mxu0 0.0
      %914 = vmatpush1.msra.mxu0 0.0
      %915 = vmatprep.subr.mxu0 0.0
      %916 = vmatpush1.msra.mxu0 0.0
      %917 = vmatprep.subr.mxu0 0.0
      %918 = vmatpush1.msra.mxu0 0.0
      %919 = vmatprep.subr.mxu0 0.0
      %920 = vmatpush1.msra.mxu0 0.0
      %921 = vmatprep.subr.mxu0 0.0
      %922 = vmatpush1.msra.mxu0 0.0
      %923 = vmatprep.subr.mxu0 0.0
      %924 = vmatpush1.msra.mxu0 0.0
      %925 = vmatprep.subr.mxu0 0.0
      %926 = vmatpush1.msra.mxu0 0.0
      %927 = vmatprep.subr.mxu0 0.0
      %928 = vmatpush1.msra.mxu0 0.0
      %929 = vmatprep.subr.mxu0 0.0
      %930 = vmatpush1.msra.mxu0 0.0
      %931 = vmatprep.subr.mxu0 0.0
      %932 = vmatpush1.msra.mxu0 0.0
      %933 = vmatprep.subr.mxu0 0.0
      %934 = vmatpush1.msra.mxu0 0.0
      %935 = vmatprep.subr.mxu0 0.0
      %936 = vmatpush1.msra.mxu0 0.0
      %937 = vmatprep.subr.mxu0 0.0
      %938 = vmatpush1.msra.mxu0 0.0
      %939 = vmatprep.subr.mxu0 0.0
      %940 = vmatpush1.msra.mxu0 0.0
      %941 = vmatprep.subr.mxu0 0.0
      %942 = vmatpush1.msra.mxu0 0.0
      %943 = vmatprep.subr.mxu0 0.0
      %944 = vmatpush1.msra.mxu0 0.0
      %945 = vmatprep.mubr.f32.mxu0 0.0
      %946 = vmatmul.mubr.f32.gmra.mrb[0].mxu0 %v879
      %v947 = vpop.f32.mrb[0].mxu0
      %v948 = vadd.f32 %v876, %v947
      %v949 = vpop.f32.mrb[0].mxu0
      %950 = vdwg.mxu0
      %vm951 = vcmask 23552
      %952 = vst.msk [vmem:[%s469] sm:$0xff] %vm951, %v948
      %p953 = scmp.lt.s32.totalorder %s28, 1
      %s954 = scalar_select %p953, %s28, 1
      %p955 = scmp.lt.s32.totalorder %s29, 0
      %s956 = scalar_select %p955, %s29, 0
      %s957 = sadd.s32 %s956, %s954
      %s958 = smul.addr %s957, 8
      %s959 = scalar_lea.vmem %s13, %s958
      // Predicated region
      $region73: #{segmenter_forward.3} parent=71 // pred_check
        %p960 = pneg %p336
      $region74: #{segmenter_forward.3} parent=71 // pred_check_branch
        %962 = sbr.rel (%p960) target = $region76
      $region75: #{segmenter_forward.3} parent=71 // pred_region
        _
      $region76: #{segmenter_forward.3} parent=71 // pred_fallthru
        _
    $region72: #{segmenter_forward.3} parent=5 // pred_fallthru
      _
    %p963 = scmp.le.s32.totalorder 2, %s19
    // Predicated region
    $region77: #{segmenter_forward.3} parent=5 // pred_check
      %p964 = pneg %p963
    $region78: #{segmenter_forward.3} parent=5 // pred_check_branch
      %966 = sbr.rel (%p964) target = $region80
    $region79: #{segmenter_forward.3} parent=5 // pred_region
      %s967 = ssub.s32 %s19, 2
      // Predicated region
      $region81: #{segmenter_forward.3} parent=79 // pred_check
        %p968 = pneg %p342
      $region82: #{segmenter_forward.3} parent=79 // pred_check_branch
        %970 = sbr.rel (%p968) target = $region84
      $region83: #{segmenter_forward.3} parent=79 // pred_region
        %p971 = scmp.lt.s32.totalorder %s30, 1
        %s972 = scalar_select %p971, %s30, 1
        %p973 = scmp.lt.s32.totalorder %s31, 0
        %s974 = scalar_select %p973, %s31, 0
        %s975 = sadd.s32 %s974, %s972
        %s976 = smul.addr %s975, 8
        %s977 = scalar_lea.vmem %s13, %s976
      $region84: #{segmenter_forward.3} parent=79 // pred_fallthru
        _
    $region80: #{segmenter_forward.3} parent=5 // pred_fallthru
      _
  $region6: #{segmenter_forward.3} parent=0 // loop_footer
    %s23 = sadd.s32 1, %s19
  $region7: #{segmenter_forward.3} parent=0 // loop_footer_branch
    %18 = sbr.rel target = $region3
  $region8: #{segmenter_forward.3} parent=0 // loop_exit
    _

// kernel: segmenter_forward.2
$region0: #{segmenter_forward.2}
  #allocation0 [shape = 'u32[]', space=smem, size = 0x4, offset = 0x4, fixed_abs, tag = 'smem constant byte address 0x4 - core index']
  #allocation1 [shape = 'u32[144,128]{1,0:T(1,128)}', space=vmem, size = 0x12000, scoped, tag = 'internal scratch']
  #allocation2 [shape = 'f32[11,16]{1,0:T(8,128)}', space=vmem, size = 0x2000, scoped, tag = 'scratch operand']
  #allocation3 [shape = 'f32[11,32]{1,0:T(8,128)}', space=vmem, size = 0x2000, scoped, tag = 'scratch operand']
  %s0 = inlined_call_operand.vmem [shape: f32[2,8,16], index: 0, kind: input, shape index: {}]
  %s1 = inlined_call_operand.hbm [shape: f32[32,32], index: 1, kind: input, shape index: {}]
  %s2 = inlined_call_operand.vmem [shape: f32[1,32], index: 2, kind: input, shape index: {}]
  %s3 = inlined_call_operand.hbm [shape: f32[64,32], index: 3, kind: input, shape index: {}]
  %s4 = inlined_call_operand.vmem [shape: f32[1,32], index: 4, kind: input, shape index: {}]
  %s5 = inlined_call_operand.hbm [shape: f32[64,32], index: 5, kind: input, shape index: {}]
  %s6 = inlined_call_operand.hbm [shape: f32[1,32], index: 6, kind: input, shape index: {}]
  %s7 = inlined_call_operand.hbm [shape: f32[48,32], index: 7, kind: input, shape index: {}]
  %s8 = inlined_call_operand.vmem [shape: f32[1,32], index: 8, kind: input, shape index: {}]
  %s9 = inlined_call_operand.vmem [shape: f32[96,32], index: 9, kind: input, shape index: {}]
  %s10 = inlined_call_operand.vmem [shape: f32[1,32], index: 10, kind: input, shape index: {}]
  %s11 = inlined_call_operand.hbm [shape: f32[96,32], index: 11, kind: input, shape index: {}]
  %s12 = inlined_call_operand.vmem [shape: f32[1,32], index: 12, kind: input, shape index: {}]
  %s13 = inlined_call_operand.hbm [shape: f32[64,32], index: 13, kind: input, shape index: {}]
  %s14 = inlined_call_operand.vmem [shape: f32[1,32], index: 14, kind: input, shape index: {}]
  %s15 = inlined_call_operand.vmem [shape: f32[128,32], index: 15, kind: input, shape index: {}]
  %s16 = inlined_call_operand.vmem [shape: f32[1,32], index: 16, kind: input, shape index: {}]
  %s17 = inlined_call_operand.vmem [shape: f32[128,32], index: 17, kind: input, shape index: {}]
  %s18 = inlined_call_operand.vmem [shape: f32[1,32], index: 18, kind: input, shape index: {}]
  %s19 = inlined_call_operand.vmem [shape: f32[2,3,8,32], index: 19, kind: output, shape index: {}]
  %s20 = sld [smem:[#allocation0]]
  $region137: #{segmenter_forward.2} parent=0
    _
  %s22 = ssub.s32 1, %s20
  %s23 = scalar_select 0, %s22, %s20
  $region1: #{segmenter_forward.2} parent=0
    #allocation4 [shape = 'u8[16384]{0}', space=vmem, size = 0x4000, scoped, tag = 'input window, operand 1, single buffered']
    #allocation5 [shape = 's32[2]{0}', space=sflag, size = 0x8, scoped, tag = 'scoped memory for segmenter_forward.2']
    #allocation6 [shape = 'u8[32768]{0}', space=vmem, size = 0x8000, scoped, tag = 'input window, operand 3, single buffered']
    #allocation7 [shape = 's32[1]{0}', space=sflag, size = 0x4, scoped, tag = 'scoped memory for segmenter_forward.2']
    #allocation8 [shape = 'u8[32768]{0}', space=vmem, size = 0x8000, scoped, tag = 'input window, operand 5, single buffered']
    #allocation9 [shape = 'u8[512]{0}', space=vmem, size = 0x400, scoped, tag = 'input window, operand 6, single buffered']
    #allocation10 [shape = 's32[1]{0}', space=sflag, size = 0x4, scoped, tag = 'scoped memory for segmenter_forward.2']
    #allocation11 [shape = 'u8[24576]{0}', space=vmem, size = 0x6000, scoped, tag = 'input window, operand 7, single buffered']
    #allocation12 [shape = 'u8[49152]{0}', space=vmem, size = 0xc000, scoped, tag = 'input window, operand 11, single buffered']
    #allocation13 [shape = 's32[1]{0}', space=sflag, size = 0x4, scoped, tag = 'scoped memory for segmenter_forward.2']
    #allocation14 [shape = 'u8[32768]{0}', space=vmem, size = 0x8000, scoped, tag = 'input window, operand 13, single buffered']
    %24 = vsyncpa [#allocation5], 0
    %25 = vsyncpa [#allocation7], 0
    %26 = vsyncpa [#allocation10], 0
    %27 = vsyncpa [#allocation13], 0
    loop: start=0, step=1, limit=4
    $region2: #{segmenter_forward.2} parent=1 // loop_pre_header
      _
    $region3: #{segmenter_forward.2} parent=1 // loop_header
      %s29 = sphi 0, %s33
      %p30 = scmp.ge.s32.totalorder %s29, 4
      %s39 = sphi 0, %s41
      %s42 = sphi 0, %s39
      %s43 = sphi 0, %s42
      %s59 = sphi 0, %s43
      %s63 = sphi 0, %s63
      %s65 = sphi 0, %s63
      %s66 = sphi 0, %s65
      %s80 = sphi 0, %s66
      %s84 = sphi 0, %s84
      %s86 = sphi 0, %s84
      %s87 = sphi 0, %s86
      %s101 = sphi 0, %s87
      %s105 = sphi 0, %s105
      %s107 = sphi 0, %s105
      %s108 = sphi 0, %s107
      %s122 = sphi 0, %s108
      %s126 = sphi 0, %s126
      %s128 = sphi 0, %s126
      %s129 = sphi 0, %s128
      %s143 = sphi 0, %s129
      %s147 = sphi 0, %s147
      %s149 = sphi 0, %s147
      %s150 = sphi 0, %s149
      %s164 = sphi 0, %s150
      %s168 = sphi 0, %s168
      %s170 = sphi 0, %s168
      %s171 = sphi 0, %s170
      %s185 = sphi 0, %s171
      %s189 = sphi 0, %s189
      %s191 = sphi 0, %s189
      %s192 = sphi 0, %s191
      %s206 = sphi 0, %s192
      %s210 = sphi 0, %s210
      %s212 = sphi 0, %s210
      %s213 = sphi 0, %s212
      %s227 = sphi 0, %s213
      %s231 = sphi 0, %s231
      %s233 = sphi 0, %s231
      %s234 = sphi 0, %s233
      %s248 = sphi 0, %s234
      %s252 = sphi 0, %s252
      %s254 = sphi 0, %s252
      %s255 = sphi 0, %s254
      %s269 = sphi 0, %s255
      %s273 = sphi 0, %s273
      %s275 = sphi 0, %s273
      %s276 = sphi 0, %s275
      %s290 = sphi 0, %s276
      %s294 = sphi 0, %s294
      %s296 = sphi 0, %s294
      %s297 = sphi 0, %s296
      %s311 = sphi 0, %s297
      %s315 = sphi 0, %s315
      %s317 = sphi 0, %s315
      %s318 = sphi 0, %s317
      %s332 = sphi 0, %s318
      %s336 = sphi 0, %s336
      %s338 = sphi 0, %s336
      %s339 = sphi 0, %s338
      %s353 = sphi 0, %s339
      %s357 = sphi 0, %s357
      %s359 = sphi 0, %s357
      %s360 = sphi 0, %s359
      %s374 = sphi 0, %s360
      %s378 = sphi 0, %s378
      %s380 = sphi 0, %s378
      %s381 = sphi 0, %s380
      %s395 = sphi 0, %s381
      %s399 = sphi 0, %s399
      %s401 = sphi 0, %s399
      %s402 = sphi 0, %s401
      %s416 = sphi 0, %s402
      %s420 = sphi 0, %s420
      %s422 = sphi 0, %s420
      %s423 = sphi 0, %s422
      %s437 = sphi 0, %s423
      %s443 = sphi 0, %s445
      %s446 = sphi 0, %s443
      %s447 = sphi 0, %s446
      %s463 = sphi 0, %s447
    $region4: #{segmenter_forward.2} parent=1 // loop_header_branch
      %32 = sbr.rel (%p30) target = $region8
    $region5: #{segmenter_forward.2} parent=1 // loop_body
      %s34 = ssub.s32 %s29, 1
      %s35 = ssub.s32 %s29, 2
      %s36 = sadd.s32 %s29, 1
      %s37 = ssub.s32 %s29, %s36
      %p38 = scmp.eq.s32.totalorder %s37, 0
      %s40 = sadd.s32 %s39, 1
      %s41 = scalar_select %p38, %s39, %s40
      %p44 = pneg %p38
      %p45 = scmp.eq.s32.totalorder %s29, 1
      %p46 = por %p44, %p45
      %p47 = scmp.ne.s32.totalorder %s39, %s42
      %p48 = scmp.eq.s32.totalorder %s29, 0
      %p49 = por %p47, %p48
      %p50 = scmp.ne.s32.totalorder %s39, %s42
      %p51 = scmp.eq.s32.totalorder %s34, 1
      %p52 = por %p50, %p51
      %p53 = scmp.ne.s32.totalorder %s42, %s43
      %p54 = scmp.eq.s32.totalorder %s34, 0
      %p55 = por %p53, %p54
      %p56 = scmp.ne.s32.totalorder %s42, %s43
      %p57 = scmp.eq.s32.totalorder %s35, 1
      %p58 = por %p56, %p57
      %p60 = scmp.ne.s32.totalorder %s43, %s59
      %p61 = scmp.eq.s32.totalorder %s35, 0
      %p62 = por %p60, %p61
      %s64 = sadd.s32 %s63, 1
      %p67 = scmp.eq.s32.totalorder %s29, 1
      %p68 = scmp.ne.s32.totalorder %s63, %s65
      %p69 = scmp.eq.s32.totalorder %s29, 0
      %p70 = por %p68, %p69
      %p71 = scmp.ne.s32.totalorder %s63, %s65
      %p72 = scmp.eq.s32.totalorder %s34, 1
      %p73 = por %p71, %p72
      %p74 = scmp.ne.s32.totalorder %s65, %s66
      %p75 = scmp.eq.s32.totalorder %s34, 0
      %p76 = por %p74, %p75
      %p77 = scmp.ne.s32.totalorder %s65, %s66
      %p78 = scmp.eq.s32.totalorder %s35, 1
      %p79 = por %p77, %p78
      %p81 = scmp.ne.s32.totalorder %s66, %s80
      %p82 = scmp.eq.s32.totalorder %s35, 0
      %p83 = por %p81, %p82
      %s85 = sadd.s32 %s84, 1
      %p88 = scmp.eq.s32.totalorder %s29, 1
      %p89 = scmp.ne.s32.totalorder %s84, %s86
      %p90 = scmp.eq.s32.totalorder %s29, 0
      %p91 = por %p89, %p90
      %p92 = scmp.ne.s32.totalorder %s84, %s86
      %p93 = scmp.eq.s32.totalorder %s34, 1
      %p94 = por %p92, %p93
      %p95 = scmp.ne.s32.totalorder %s86, %s87
      %p96 = scmp.eq.s32.totalorder %s34, 0
      %p97 = por %p95, %p96
      %p98 = scmp.ne.s32.totalorder %s86, %s87
      %p99 = scmp.eq.s32.totalorder %s35, 1
      %p100 = por %p98, %p99
      %p102 = scmp.ne.s32.totalorder %s87, %s101
      %p103 = scmp.eq.s32.totalorder %s35, 0
      %p104 = por %p102, %p103
      %s106 = sadd.s32 %s105, 1
      %p109 = scmp.eq.s32.totalorder %s29, 1
      %p110 = scmp.ne.s32.totalorder %s105, %s107
      %p111 = scmp.eq.s32.totalorder %s29, 0
      %p112 = por %p110, %p111
      %p113 = scmp.ne.s32.totalorder %s105, %s107
      %p114 = scmp.eq.s32.totalorder %s34, 1
      %p115 = por %p113, %p114
      %p116 = scmp.ne.s32.totalorder %s107, %s108
      %p117 = scmp.eq.s32.totalorder %s34, 0
      %p118 = por %p116, %p117
      %p119 = scmp.ne.s32.totalorder %s107, %s108
      %p120 = scmp.eq.s32.totalorder %s35, 1
      %p121 = por %p119, %p120
      %p123 = scmp.ne.s32.totalorder %s108, %s122
      %p124 = scmp.eq.s32.totalorder %s35, 0
      %p125 = por %p123, %p124
      %s127 = sadd.s32 %s126, 1
      %p130 = scmp.eq.s32.totalorder %s29, 1
      %p131 = scmp.ne.s32.totalorder %s126, %s128
      %p132 = scmp.eq.s32.totalorder %s29, 0
      %p133 = por %p131, %p132
      %p134 = scmp.ne.s32.totalorder %s126, %s128
      %p135 = scmp.eq.s32.totalorder %s34, 1
      %p136 = por %p134, %p135
      %p137 = scmp.ne.s32.totalorder %s128, %s129
      %p138 = scmp.eq.s32.totalorder %s34, 0
      %p139 = por %p137, %p138
      %p140 = scmp.ne.s32.totalorder %s128, %s129
      %p141 = scmp.eq.s32.totalorder %s35, 1
      %p142 = por %p140, %p141
      %p144 = scmp.ne.s32.totalorder %s129, %s143
      %p145 = scmp.eq.s32.totalorder %s35, 0
      %p146 = por %p144, %p145
      %s148 = sadd.s32 %s147, 1
      %p151 = scmp.eq.s32.totalorder %s29, 1
      %p152 = scmp.ne.s32.totalorder %s147, %s149
      %p153 = scmp.eq.s32.totalorder %s29, 0
      %p154 = por %p152, %p153
      %p155 = scmp.ne.s32.totalorder %s147, %s149
      %p156 = scmp.eq.s32.totalorder %s34, 1
      %p157 = por %p155, %p156
      %p158 = scmp.ne.s32.totalorder %s149, %s150
      %p159 = scmp.eq.s32.totalorder %s34, 0
      %p160 = por %p158, %p159
      %p161 = scmp.ne.s32.totalorder %s149, %s150
      %p162 = scmp.eq.s32.totalorder %s35, 1
      %p163 = por %p161, %p162
      %p165 = scmp.ne.s32.totalorder %s150, %s164
      %p166 = scmp.eq.s32.totalorder %s35, 0
      %p167 = por %p165, %p166
      %s169 = sadd.s32 %s168, 1
      %p172 = scmp.eq.s32.totalorder %s29, 1
      %p173 = scmp.ne.s32.totalorder %s168, %s170
      %p174 = scmp.eq.s32.totalorder %s29, 0
      %p175 = por %p173, %p174
      %p176 = scmp.ne.s32.totalorder %s168, %s170
      %p177 = scmp.eq.s32.totalorder %s34, 1
      %p178 = por %p176, %p177
      %p179 = scmp.ne.s32.totalorder %s170, %s171
      %p180 = scmp.eq.s32.totalorder %s34, 0
      %p181 = por %p179, %p180
      %p182 = scmp.ne.s32.totalorder %s170, %s171
      %p183 = scmp.eq.s32.totalorder %s35, 1
      %p184 = por %p182, %p183
      %p186 = scmp.ne.s32.totalorder %s171, %s185
      %p187 = scmp.eq.s32.totalorder %s35, 0
      %p188 = por %p186, %p187
      %s190 = sadd.s32 %s189, 1
      %p193 = scmp.eq.s32.totalorder %s29, 1
      %p194 = scmp.ne.s32.totalorder %s189, %s191
      %p195 = scmp.eq.s32.totalorder %s29, 0
      %p196 = por %p194, %p195
      %p197 = scmp.ne.s32.totalorder %s189, %s191
      %p198 = scmp.eq.s32.totalorder %s34, 1
      %p199 = por %p197, %p198
      %p200 = scmp.ne.s32.totalorder %s191, %s192
      %p201 = scmp.eq.s32.totalorder %s34, 0
      %p202 = por %p200, %p201
      %p203 = scmp.ne.s32.totalorder %s191, %s192
      %p204 = scmp.eq.s32.totalorder %s35, 1
      %p205 = por %p203, %p204
      %p207 = scmp.ne.s32.totalorder %s192, %s206
      %p208 = scmp.eq.s32.totalorder %s35, 0
      %p209 = por %p207, %p208
      %s211 = sadd.s32 %s210, 1
      %p214 = scmp.eq.s32.totalorder %s29, 1
      %p215 = scmp.ne.s32.totalorder %s210, %s212
      %p216 = scmp.eq.s32.totalorder %s29, 0
      %p217 = por %p215, %p216
      %p218 = scmp.ne.s32.totalorder %s210, %s212
      %p219 = scmp.eq.s32.totalorder %s34, 1
      %p220 = por %p218, %p219
      %p221 = scmp.ne.s32.totalorder %s212, %s213
      %p222 = scmp.eq.s32.totalorder %s34, 0
      %p223 = por %p221, %p222
      %p224 = scmp.ne.s32.totalorder %s212, %s213
      %p225 = scmp.eq.s32.totalorder %s35, 1
      %p226 = por %p224, %p225
      %p228 = scmp.ne.s32.totalorder %s213, %s227
      %p229 = scmp.eq.s32.totalorder %s35, 0
      %p230 = por %p228, %p229
      %s232 = sadd.s32 %s231, 1
      %p235 = scmp.eq.s32.totalorder %s29, 1
      %p236 = scmp.ne.s32.totalorder %s231, %s233
      %p237 = scmp.eq.s32.totalorder %s29, 0
      %p238 = por %p236, %p237
      %p239 = scmp.ne.s32.totalorder %s231, %s233
      %p240 = scmp.eq.s32.totalorder %s34, 1
      %p241 = por %p239, %p240
      %p242 = scmp.ne.s32.totalorder %s233, %s234
      %p243 = scmp.eq.s32.totalorder %s34, 0
      %p244 = por %p242, %p243
      %p245 = scmp.ne.s32.totalorder %s233, %s234
      %p246 = scmp.eq.s32.totalorder %s35, 1
      %p247 = por %p245, %p246
      %p249 = scmp.ne.s32.totalorder %s234, %s248
      %p250 = scmp.eq.s32.totalorder %s35, 0
      %p251 = por %p249, %p250
      %s253 = sadd.s32 %s252, 1
      %p256 = scmp.eq.s32.totalorder %s29, 1
      %p257 = scmp.ne.s32.totalorder %s252, %s254
      %p258 = scmp.eq.s32.totalorder %s29, 0
      %p259 = por %p257, %p258
      %p260 = scmp.ne.s32.totalorder %s252, %s254
      %p261 = scmp.eq.s32.totalorder %s34, 1
      %p262 = por %p260, %p261
      %p263 = scmp.ne.s32.totalorder %s254, %s255
      %p264 = scmp.eq.s32.totalorder %s34, 0
      %p265 = por %p263, %p264
      %p266 = scmp.ne.s32.totalorder %s254, %s255
      %p267 = scmp.eq.s32.totalorder %s35, 1
      %p268 = por %p266, %p267
      %p270 = scmp.ne.s32.totalorder %s255, %s269
      %p271 = scmp.eq.s32.totalorder %s35, 0
      %p272 = por %p270, %p271
      %s274 = sadd.s32 %s273, 1
      %p277 = scmp.eq.s32.totalorder %s29, 1
      %p278 = scmp.ne.s32.totalorder %s273, %s275
      %p279 = scmp.eq.s32.totalorder %s29, 0
      %p280 = por %p278, %p279
      %p281 = scmp.ne.s32.totalorder %s273, %s275
      %p282 = scmp.eq.s32.totalorder %s34, 1
      %p283 = por %p281, %p282
      %p284 = scmp.ne.s32.totalorder %s275, %s276
      %p285 = scmp.eq.s32.totalorder %s34, 0
      %p286 = por %p284, %p285
      %p287 = scmp.ne.s32.totalorder %s275, %s276
      %p288 = scmp.eq.s32.totalorder %s35, 1
      %p289 = por %p287, %p288
      %p291 = scmp.ne.s32.totalorder %s276, %s290
      %p292 = scmp.eq.s32.totalorder %s35, 0
      %p293 = por %p291, %p292
      %s295 = sadd.s32 %s294, 1
      %p298 = scmp.eq.s32.totalorder %s29, 1
      %p299 = scmp.ne.s32.totalorder %s294, %s296
      %p300 = scmp.eq.s32.totalorder %s29, 0
      %p301 = por %p299, %p300
      %p302 = scmp.ne.s32.totalorder %s294, %s296
      %p303 = scmp.eq.s32.totalorder %s34, 1
      %p304 = por %p302, %p303
      %p305 = scmp.ne.s32.totalorder %s296, %s297
      %p306 = scmp.eq.s32.totalorder %s34, 0
      %p307 = por %p305, %p306
      %p308 = scmp.ne.s32.totalorder %s296, %s297
      %p309 = scmp.eq.s32.totalorder %s35, 1
      %p310 = por %p308, %p309
      %p312 = scmp.ne.s32.totalorder %s297, %s311
      %p313 = scmp.eq.s32.totalorder %s35, 0
      %p314 = por %p312, %p313
      %s316 = sadd.s32 %s315, 1
      %p319 = scmp.eq.s32.totalorder %s29, 1
      %p320 = scmp.ne.s32.totalorder %s315, %s317
      %p321 = scmp.eq.s32.totalorder %s29, 0
      %p322 = por %p320, %p321
      %p323 = scmp.ne.s32.totalorder %s315, %s317
      %p324 = scmp.eq.s32.totalorder %s34, 1
      %p325 = por %p323, %p324
      %p326 = scmp.ne.s32.totalorder %s317, %s318
      %p327 = scmp.eq.s32.totalorder %s34, 0
      %p328 = por %p326, %p327
      %p329 = scmp.ne.s32.totalorder %s317, %s318
      %p330 = scmp.eq.s32.totalorder %s35, 1
      %p331 = por %p329, %p330
      %p333 = scmp.ne.s32.totalorder %s318, %s332
      %p334 = scmp.eq.s32.totalorder %s35, 0
      %p335 = por %p333, %p334
      %s337 = sadd.s32 %s336, 1
      %p340 = scmp.eq.s32.totalorder %s29, 1
      %p341 = scmp.ne.s32.totalorder %s336, %s338
      %p342 = scmp.eq.s32.totalorder %s29, 0
      %p343 = por %p341, %p342
      %p344 = scmp.ne.s32.totalorder %s336, %s338
      %p345 = scmp.eq.s32.totalorder %s34, 1
      %p346 = por %p344, %p345
      %p347 = scmp.ne.s32.totalorder %s338, %s339
      %p348 = scmp.eq.s32.totalorder %s34, 0
      %p349 = por %p347, %p348
      %p350 = scmp.ne.s32.totalorder %s338, %s339
      %p351 = scmp.eq.s32.totalorder %s35, 1
      %p352 = por %p350, %p351
      %p354 = scmp.ne.s32.totalorder %s339, %s353
      %p355 = scmp.eq.s32.totalorder %s35, 0
      %p356 = por %p354, %p355
      %s358 = sadd.s32 %s357, 1
      %p361 = scmp.eq.s32.totalorder %s29, 1
      %p362 = scmp.ne.s32.totalorder %s357, %s359
      %p363 = scmp.eq.s32.totalorder %s29, 0
      %p364 = por %p362, %p363
      %p365 = scmp.ne.s32.totalorder %s357, %s359
      %p366 = scmp.eq.s32.totalorder %s34, 1
      %p367 = por %p365, %p366
      %p368 = scmp.ne.s32.totalorder %s359, %s360
      %p369 = scmp.eq.s32.totalorder %s34, 0
      %p370 = por %p368, %p369
      %p371 = scmp.ne.s32.totalorder %s359, %s360
      %p372 = scmp.eq.s32.totalorder %s35, 1
      %p373 = por %p371, %p372
      %p375 = scmp.ne.s32.totalorder %s360, %s374
      %p376 = scmp.eq.s32.totalorder %s35, 0
      %p377 = por %p375, %p376
      %s379 = sadd.s32 %s378, 1
      %p382 = scmp.eq.s32.totalorder %s29, 1
      %p383 = scmp.ne.s32.totalorder %s378, %s380
      %p384 = scmp.eq.s32.totalorder %s29, 0
      %p385 = por %p383, %p384
      %p386 = scmp.ne.s32.totalorder %s378, %s380
      %p387 = scmp.eq.s32.totalorder %s34, 1
      %p388 = por %p386, %p387
      %p389 = scmp.ne.s32.totalorder %s380, %s381
      %p390 = scmp.eq.s32.totalorder %s34, 0
      %p391 = por %p389, %p390
      %p392 = scmp.ne.s32.totalorder %s380, %s381
      %p393 = scmp.eq.s32.totalorder %s35, 1
      %p394 = por %p392, %p393
      %p396 = scmp.ne.s32.totalorder %s381, %s395
      %p397 = scmp.eq.s32.totalorder %s35, 0
      %p398 = por %p396, %p397
      %s400 = sadd.s32 %s399, 1
      %p403 = scmp.eq.s32.totalorder %s29, 1
      %p404 = scmp.ne.s32.totalorder %s399, %s401
      %p405 = scmp.eq.s32.totalorder %s29, 0
      %p406 = por %p404, %p405
      %p407 = scmp.ne.s32.totalorder %s399, %s401
      %p408 = scmp.eq.s32.totalorder %s34, 1
      %p409 = por %p407, %p408
      %p410 = scmp.ne.s32.totalorder %s401, %s402
      %p411 = scmp.eq.s32.totalorder %s34, 0
      %p412 = por %p410, %p411
      %p413 = scmp.ne.s32.totalorder %s401, %s402
      %p414 = scmp.eq.s32.totalorder %s35, 1
      %p415 = por %p413, %p414
      %p417 = scmp.ne.s32.totalorder %s402, %s416
      %p418 = scmp.eq.s32.totalorder %s35, 0
      %p419 = por %p417, %p418
      %s421 = sadd.s32 %s420, 1
      %p424 = scmp.eq.s32.totalorder %s29, 1
      %p425 = scmp.ne.s32.totalorder %s420, %s422
      %p426 = scmp.eq.s32.totalorder %s29, 0
      %p427 = por %p425, %p426
      %p428 = scmp.ne.s32.totalorder %s420, %s422
      %p429 = scmp.eq.s32.totalorder %s34, 1
      %p430 = por %p428, %p429
      %p431 = scmp.ne.s32.totalorder %s422, %s423
      %p432 = scmp.eq.s32.totalorder %s34, 0
      %p433 = por %p431, %p432
      %p434 = scmp.ne.s32.totalorder %s422, %s423
      %p435 = scmp.eq.s32.totalorder %s35, 1
      %p436 = por %p434, %p435
      %p438 = scmp.ne.s32.totalorder %s423, %s437
      %p439 = scmp.eq.s32.totalorder %s35, 0
      %p440 = por %p438, %p439
      %s441 = ssub.s32 %s29, %s36
      %p442 = scmp.eq.s32.totalorder %s441, 0
      %s444 = sadd.s32 %s443, 1
      %s445 = scalar_select %p442, %s443, %s444
      %p448 = pneg %p442
      %p449 = scmp.eq.s32.totalorder %s29, 1
      %p450 = por %p448, %p449
      %p451 = scmp.ne.s32.totalorder %s443, %s446
      %p452 = scmp.eq.s32.totalorder %s29, 0
      %p453 = por %p451, %p452
      %p454 = scmp.ne.s32.totalorder %s443, %s446
      %p455 = scmp.eq.s32.totalorder %s34, 1
      %p456 = por %p454, %p455
      %p457 = scmp.ne.s32.totalorder %s446, %s447
      %p458 = scmp.eq.s32.totalorder %s34, 0
      %p459 = por %p457, %p458
      %p460 = scmp.ne.s32.totalorder %s446, %s447
      %p461 = scmp.eq.s32.totalorder %s35, 1
      %p462 = por %p460, %p461
      %p464 = scmp.ne.s32.totalorder %s447, %s463
      %p465 = scmp.eq.s32.totalorder %s35, 0
      %p466 = por %p464, %p465
      %p467 = scmp.le.s32.totalorder 1, %s29
      %p468 = scmp.lt.s32.totalorder %s29, 3
      %p469 = pnand %p467, %p468
      %p470 = pneg %p469
      // Predicated region
      $region9: #{segmenter_forward.2} parent=5 // pred_check
        _
      $region10: #{segmenter_forward.2} parent=5 // pred_check_branch
        %472 = sbr.rel (%p469) target = $region12
      $region11: #{segmenter_forward.2} parent=5 // pred_region
        %s473 = ssub.s32 %s29, 1
        // Predicated region
        $region13: #{segmenter_forward.2} parent=11 // pred_check
          %p474 = pneg %p76
        $region14: #{segmenter_forward.2} parent=11 // pred_check_branch
          %476 = sbr.rel (%p474) target = $region16
        $region15: #{segmenter_forward.2} parent=11 // pred_region
          %s478 = ssub.s32 512, 512
          %479 = vsyncadd [#allocation5], %s478
          %s480 = sshll.u32 [#allocation4], 4
          %s481 = int_to_ptr.vmem [resolvable:$true] %s480
          %486 = dma.hbm_to_vmem [thread:$0]  %s1, 512, %s481, [#allocation5], 128, 128, 8
        $region16: #{segmenter_forward.2} parent=11 // pred_fallthru
          _
        // Predicated region
        $region17: #{segmenter_forward.2} parent=11 // pred_check
          %p487 = pneg %p97
        $region18: #{segmenter_forward.2} parent=11 // pred_check_branch
          %489 = sbr.rel (%p487) target = $region20
        $region19: #{segmenter_forward.2} parent=11 // pred_region
          _
        $region20: #{segmenter_forward.2} parent=11 // pred_fallthru
          _
        // Predicated region
        $region21: #{segmenter_forward.2} parent=11 // pred_check
          %p490 = pneg %p118
        $region22: #{segmenter_forward.2} parent=11 // pred_check_branch
          %492 = sbr.rel (%p490) target = $region24
        $region23: #{segmenter_forward.2} parent=11 // pred_region
          %s494 = ssub.s32 1024, 1024
          %495 = vsyncadd [#allocation7], %s494
          %s496 = sshll.u32 [#allocation6], 4
          %s497 = int_to_ptr.vmem [resolvable:$true] %s496
          %502 = dma.hbm_to_vmem [thread:$0]  %s3, 1024, %s497, [#allocation7], 128, 128, 8
        $region24: #{segmenter_forward.2} parent=11 // pred_fallthru
          _
        // Predicated region
        $region25: #{segmenter_forward.2} parent=11 // pred_check
          %p503 = pneg %p139
        $region26: #{segmenter_forward.2} parent=11 // pred_check_branch
          %505 = sbr.rel (%p503) target = $region28
        $region27: #{segmenter_forward.2} parent=11 // pred_region
          _
        $region28: #{segmenter_forward.2} parent=11 // pred_fallthru
          _
        // Predicated region
        $region29: #{segmenter_forward.2} parent=11 // pred_check
          %p506 = pneg %p160
        $region30: #{segmenter_forward.2} parent=11 // pred_check_branch
          %508 = sbr.rel (%p506) target = $region32
        $region31: #{segmenter_forward.2} parent=11 // pred_region
          %s510 = ssub.s32 1024, 1024
          %511 = vsyncadd [#allocation7], %s510
          %s512 = sshll.u32 [#allocation8], 4
          %s513 = int_to_ptr.vmem [resolvable:$true] %s512
          %518 = dma.hbm_to_vmem [thread:$0]  %s5, 1024, %s513, [#allocation7], 128, 128, 8
        $region32: #{segmenter_forward.2} parent=11 // pred_fallthru
          _
        // Predicated region
        $region33: #{segmenter_forward.2} parent=11 // pred_check
          %p519 = pneg %p181
        $region34: #{segmenter_forward.2} parent=11 // pred_check_branch
          %521 = sbr.rel (%p519) target = $region36
        $region35: #{segmenter_forward.2} parent=11 // pred_region
          %s523 = ssub.s32 16, 16
          %524 = vsyncadd [#allocation10], %s523
          %s526 = sshll.u32 [#allocation9], 4
          %s527 = int_to_ptr.vmem [resolvable:$true] %s526
          %529 = dma.hbm_to_vmem [thread:$0]  %s6, 16, %s527, [#allocation10]
        $region36: #{segmenter_forward.2} parent=11 // pred_fallthru
          _
        // Predicated region
        $region37: #{segmenter_forward.2} parent=11 // pred_check
          %p530 = pneg %p202
        $region38: #{segmenter_forward.2} parent=11 // pred_check_branch
          %532 = sbr.rel (%p530) target = $region40
        $region39: #{segmenter_forward.2} parent=11 // pred_region
          %s534 = ssub.s32 768, 768
          %535 = vsyncadd [#allocation10], %s534
          %s536 = sshll.u32 [#allocation11], 4
          %s537 = int_to_ptr.vmem [resolvable:$true] %s536
          %542 = dma.hbm_to_vmem [thread:$0]  %s7, 768, %s537, [#allocation10], 128, 128, 8
        $region40: #{segmenter_forward.2} parent=11 // pred_fallthru
          _
        // Predicated region
        $region41: #{segmenter_forward.2} parent=11 // pred_check
          %p543 = pneg %p223
        $region42: #{segmenter_forward.2} parent=11 // pred_check_branch
          %545 = sbr.rel (%p543) target = $region44
        $region43: #{segmenter_forward.2} parent=11 // pred_region
          _
        $region44: #{segmenter_forward.2} parent=11 // pred_fallthru
          _
        // Predicated region
        $region45: #{segmenter_forward.2} parent=11 // pred_check
          %p546 = pneg %p244
        $region46: #{segmenter_forward.2} parent=11 // pred_check_branch
          %548 = sbr.rel (%p546) target = $region48
        $region47: #{segmenter_forward.2} parent=11 // pred_region
          _
        $region48: #{segmenter_forward.2} parent=11 // pred_fallthru
          _
        // Predicated region
        $region49: #{segmenter_forward.2} parent=11 // pred_check
          %p549 = pneg %p265
        $region50: #{segmenter_forward.2} parent=11 // pred_check_branch
          %551 = sbr.rel (%p549) target = $region52
        $region51: #{segmenter_forward.2} parent=11 // pred_region
          _
        $region52: #{segmenter_forward.2} parent=11 // pred_fallthru
          _
        // Predicated region
        $region53: #{segmenter_forward.2} parent=11 // pred_check
          %p552 = pneg %p286
        $region54: #{segmenter_forward.2} parent=11 // pred_check_branch
          %554 = sbr.rel (%p552) target = $region56
        $region55: #{segmenter_forward.2} parent=11 // pred_region
          %s556 = ssub.s32 1536, 1536
          %557 = vsyncadd [#allocation13], %s556
          %s558 = sshll.u32 [#allocation12], 4
          %s559 = int_to_ptr.vmem [resolvable:$true] %s558
          %564 = dma.hbm_to_vmem [thread:$0]  %s11, 1536, %s559, [#allocation13], 128, 128, 8
        $region56: #{segmenter_forward.2} parent=11 // pred_fallthru
          _
        // Predicated region
        $region57: #{segmenter_forward.2} parent=11 // pred_check
          %p565 = pneg %p307
        $region58: #{segmenter_forward.2} parent=11 // pred_check_branch
          %567 = sbr.rel (%p565) target = $region60
        $region59: #{segmenter_forward.2} parent=11 // pred_region
          _
        $region60: #{segmenter_forward.2} parent=11 // pred_fallthru
          _
        // Predicated region
        $region61: #{segmenter_forward.2} parent=11 // pred_check
          %p568 = pneg %p328
        $region62: #{segmenter_forward.2} parent=11 // pred_check_branch
          %570 = sbr.rel (%p568) target = $region64
        $region63: #{segmenter_forward.2} parent=11 // pred_region
          %s572 = ssub.s32 1024, 1024
          %573 = vsyncadd [#allocation13], %s572
          %s574 = sshll.u32 [#allocation14], 4
          %s575 = int_to_ptr.vmem [resolvable:$true] %s574
          %580 = dma.hbm_to_vmem [thread:$0]  %s13, 1024, %s575, [#allocation13], 128, 128, 8
        $region64: #{segmenter_forward.2} parent=11 // pred_fallthru
          _
        // Predicated region
        $region65: #{segmenter_forward.2} parent=11 // pred_check
          %p581 = pneg %p349
        $region66: #{segmenter_forward.2} parent=11 // pred_check_branch
          %583 = sbr.rel (%p581) target = $region68
        $region67: #{segmenter_forward.2} parent=11 // pred_region
          _
        $region68: #{segmenter_forward.2} parent=11 // pred_fallthru
          _
        // Predicated region
        $region69: #{segmenter_forward.2} parent=11 // pred_check
          %p584 = pneg %p370
        $region70: #{segmenter_forward.2} parent=11 // pred_check_branch
          %586 = sbr.rel (%p584) target = $region72
        $region71: #{segmenter_forward.2} parent=11 // pred_region
          _
        $region72: #{segmenter_forward.2} parent=11 // pred_fallthru
          _
        // Predicated region
        $region73: #{segmenter_forward.2} parent=11 // pred_check
          %p587 = pneg %p391
        $region74: #{segmenter_forward.2} parent=11 // pred_check_branch
          %589 = sbr.rel (%p587) target = $region76
        $region75: #{segmenter_forward.2} parent=11 // pred_region
          _
        $region76: #{segmenter_forward.2} parent=11 // pred_fallthru
          _
        // Predicated region
        $region77: #{segmenter_forward.2} parent=11 // pred_check
          %p590 = pneg %p412
        $region78: #{segmenter_forward.2} parent=11 // pred_check_branch
          %592 = sbr.rel (%p590) target = $region80
        $region79: #{segmenter_forward.2} parent=11 // pred_region
          _
        $region80: #{segmenter_forward.2} parent=11 // pred_fallthru
          _
        // Predicated region
        $region81: #{segmenter_forward.2} parent=11 // pred_check
          %p593 = pneg %p433
        $region82: #{segmenter_forward.2} parent=11 // pred_check_branch
          %595 = sbr.rel (%p593) target = $region84
        $region83: #{segmenter_forward.2} parent=11 // pred_region
          _
        $region84: #{segmenter_forward.2} parent=11 // pred_fallthru
          _
      $region12: #{segmenter_forward.2} parent=5 // pred_fallthru
        _
      %p596 = scmp.lt.s32.totalorder %s29, 2
      // Predicated region
      $region85: #{segmenter_forward.2} parent=5 // pred_check
        %p597 = pneg %p596
      $region86: #{segmenter_forward.2} parent=5 // pred_check_branch
        %599 = sbr.rel (%p597) target = $region88
      $region87: #{segmenter_forward.2} parent=5 // pred_region
        // Predicated region
        $region89: #{segmenter_forward.2} parent=87 // pred_check
          %p600 = pneg %p49
        $region90: #{segmenter_forward.2} parent=87 // pred_check_branch
          %602 = sbr.rel (%p600) target = $region92
        $region91: #{segmenter_forward.2} parent=87 // pred_region
          %p603 = scmp.lt.s32.totalorder %s29, 1
          %s604 = scalar_select %p603, %s29, 1
          %s605 = smul.addr %s604, 8
          %s606 = scalar_lea.vmem %s0, %s605
        $region92: #{segmenter_forward.2} parent=87 // pred_fallthru
          _
      $region88: #{segmenter_forward.2} parent=5 // pred_fallthru
        _
      %p607 = scmp.le.s32.totalorder 1, %s29
      %p608 = scmp.lt.s32.totalorder %s29, 3
      %p609 = pnand %p607, %p608
      %p610 = pneg %p609
      // Predicated region
      $region93: #{segmenter_forward.2} parent=5 // pred_check
        _
      $region94: #{segmenter_forward.2} parent=5 // pred_check_branch
        %612 = sbr.rel (%p609) target = $region96
      $region95: #{segmenter_forward.2} parent=5 // pred_region
        %s613 = ssub.s32 %s29, 1
        // Predicated region
        $region97: #{segmenter_forward.2} parent=95 // pred_check
          %p614 = pneg %p76
        $region98: #{segmenter_forward.2} parent=95 // pred_check_branch
          %616 = sbr.rel (%p614) target = $region100
        $region99: #{segmenter_forward.2} parent=95 // pred_region
          %617 = dma.done [#allocation5], 512
        $region100: #{segmenter_forward.2} parent=95 // pred_fallthru
          _
        // Predicated region
        $region101: #{segmenter_forward.2} parent=95 // pred_check
          %p618 = pneg %p118
        $region102: #{segmenter_forward.2} parent=95 // pred_check_branch
          %620 = sbr.rel (%p618) target = $region104
        $region103: #{segmenter_forward.2} parent=95 // pred_region
          %621 = dma.done [#allocation7], 1024
        $region104: #{segmenter_forward.2} parent=95 // pred_fallthru
          _
        // Predicated region
        $region105: #{segmenter_forward.2} parent=95 // pred_check
          %p622 = pneg %p160
        $region106: #{segmenter_forward.2} parent=95 // pred_check_branch
          %624 = sbr.rel (%p622) target = $region108
        $region107: #{segmenter_forward.2} parent=95 // pred_region
          %625 = dma.done [#allocation7], 1024
        $region108: #{segmenter_forward.2} parent=95 // pred_fallthru
          _
        // Predicated region
        $region109: #{segmenter_forward.2} parent=95 // pred_check
          %p626 = pneg %p181
        $region110: #{segmenter_forward.2} parent=95 // pred_check_branch
          %628 = sbr.rel (%p626) target = $region112
        $region111: #{segmenter_forward.2} parent=95 // pred_region
          %629 = dma.done [#allocation10], 16
        $region112: #{segmenter_forward.2} parent=95 // pred_fallthru
          _
        // Predicated region
        $region113: #{segmenter_forward.2} parent=95 // pred_check
          %p630 = pneg %p202
        $region114: #{segmenter_forward.2} parent=95 // pred_check_branch
          %632 = sbr.rel (%p630) target = $region116
        $region115: #{segmenter_forward.2} parent=95 // pred_region
          %633 = dma.done [#allocation10], 768
        $region116: #{segmenter_forward.2} parent=95 // pred_fallthru
          _
        // Predicated region
        $region117: #{segmenter_forward.2} parent=95 // pred_check
          %p634 = pneg %p286
        $region118: #{segmenter_forward.2} parent=95 // pred_check_branch
          %636 = sbr.rel (%p634) target = $region120
        $region119: #{segmenter_forward.2} parent=95 // pred_region
          %637 = dma.done [#allocation13], 1536
        $region120: #{segmenter_forward.2} parent=95 // pred_fallthru
          _
        // Predicated region
        $region121: #{segmenter_forward.2} parent=95 // pred_check
          %p638 = pneg %p328
        $region122: #{segmenter_forward.2} parent=95 // pred_check_branch
          %640 = sbr.rel (%p638) target = $region124
        $region123: #{segmenter_forward.2} parent=95 // pred_region
          %641 = dma.done [#allocation13], 1024
        $region124: #{segmenter_forward.2} parent=95 // pred_fallthru
          _
        %p642 = scmp.lt.s32.totalorder %s34, 1
        %s643 = scalar_select %p642, %s34, 1
        %s644 = smul.addr %s643, 8
        %s645 = scalar_lea.vmem %s0, %s644
        %p646 = pneg %p55
        %p647 = pneg %p52
        %p648 = pneg %p76
        %p649 = pneg %p73
        %p650 = pneg %p97
        %p651 = pneg %p94
        %p652 = pneg %p118
        %p653 = pneg %p115
        %p654 = pneg %p139
        %p655 = pneg %p136
        %p656 = pneg %p160
        %p657 = pneg %p157
        %p658 = pneg %p181
        %p659 = pneg %p178
        %p660 = pneg %p202
        %p661 = pneg %p199
        %p662 = pneg %p223
        %p663 = pneg %p220
        %p664 = pneg %p244
        %p665 = pneg %p241
        %p666 = pneg %p265
        %p667 = pneg %p262
        %p668 = pneg %p286
        %p669 = pneg %p283
        %p670 = pneg %p307
        %p671 = pneg %p304
        %p672 = pneg %p328
        %p673 = pneg %p325
        %p674 = pneg %p349
        %p675 = pneg %p346
        %p676 = pneg %p370
        %p677 = pneg %p367
        %p678 = pneg %p391
        %p679 = pneg %p388
        %p680 = pneg %p412
        %p681 = pneg %p409
        %p682 = pneg %p433
        %p683 = pneg %p430
        %p684 = pneg %p459
        %p685 = pneg %p456
        %p686 = scmp.lt.s32.totalorder %s34, 1
        %s687 = scalar_select %p686, %s34, 1
        %s688 = smul.addr %s687, 3
        %s689 = smul.addr %s688, 8
        %s690 = scalar_lea.vmem %s19, %s689
        %p691 = scmp.lt.s32.totalorder %s34, 1
        %s692 = scalar_select %p691, %s34, 1
        %s693 = smul.addr %s692, 8
        %s694 = scalar_lea.vmem %s0, %s693
        %p695 = scmp.lt.s32.totalorder %s34, 1
        %s696 = scalar_select %p695, %s34, 1
        %s697 = smul.addr %s696, 3
        %s698 = smul.addr %s697, 8
        %s699 = scalar_lea.vmem %s19, %s698
        %vm700 = vcmask 130048
        %701 = vst.msk [vmem:[#allocation2] sm:$0xff] %vm700, 0.0
        %vm702 = vcmask 124928
        %703 = vst.msk [vmem:[#allocation2 + $0x8] sm:$0x7] %vm702, 0.0
        %vm704 = vcmask 261120
        %705 = vst.msk [vmem:[#allocation3] sm:$0xff] %vm704, 0.0
        %vm706 = vcmask 256000
        %707 = vst.msk [vmem:[#allocation3 + $0x8] sm:$0x7] %vm706, 0.0
        %v708 = vld [vmem:[%s694] sm:$0xff]
        %709 = vst.msk [vmem:[#allocation2 + $0x1] sm:$0xff] %vm700, %v708
        %v710 = vld [vmem:[#allocation4] sm:$0xff]
        %v711 = vld [vmem:[#allocation4 + $0x8] sm:$0xff]
        %v712 = vld [vmem:[#allocation4 + $0x10] sm:$0xff]
        %v713 = vld [vmem:[#allocation4 + $0x18] sm:$0xff]
        %v714 = vld [vmem:[%s2] sm:$0x1]
        %v715 = vld [vmem:[#allocation2 + $0x1] sm:$0xff]
        %v716 = vld [vmem:[#allocation2 + $0x2] sm:$0xff]
        %718 = vrot.lane.b32.xlu0 %v716, 16
        %v719 = vpop.permute.xlu0 %718
        %v721 = vsel %vm700, %v715, %v719
        %v723 = vlaneseq
        %v724 = vshrl.u32 %v723, 7
        %v725 = vsub.s32 0, %v724
        %v726 = vrot.slane %v714, %v725
        %v729 = vsel %vm704, %v721, 0
        %731 = vmatprep.subr.mxu0 0.0
        %732 = vmatpush1.msra.mxu0 %v710
        %733 = vmatprep.subr.mxu0 0.0
        %734 = vmatpush1.msra.mxu0 %v711
        %735 = vmatprep.subr.mxu0 0.0
        %736 = vmatpush1.msra.mxu0 %v712
        %737 = vmatprep.subr.mxu0 0.0
        %738 = vmatpush1.msra.mxu0 %v713
        %739 = vmatprep.subr.mxu0 0.0
        %740 = vmatpush1.msra.mxu0 0.0
        %741 = vmatprep.subr.mxu0 0.0
        %742 = vmatpush1.msra.mxu0 0.0
        %743 = vmatprep.subr.mxu0 0.0
        %744 = vmatpush1.msra.mxu0 0.0
        %745 = vmatprep.subr.mxu0 0.0
        %746 = vmatpush1.msra.mxu0 0.0
        %747 = vmatprep.subr.mxu0 0.0
        %748 = vmatpush1.msra.mxu0 0.0
        %749 = vmatprep.subr.mxu0 0.0
        %750 = vmatpush1.msra.mxu0 0.0
        %751 = vmatprep.subr.mxu0 0.0
        %752 = vmatpush1.msra.mxu0 0.0
        %753 = vmatprep.subr.mxu0 0.0
        %754 = vmatpush1.msra.mxu0 0.0
        %755 = vmatprep.subr.mxu0 0.0
        %756 = vmatpush1.msra.mxu0 0.0
        %757 = vmatprep.subr.mxu0 0.0
        %758 = vmatpush1.msra.mxu0 0.0
        %759 = vmatprep.subr.mxu0 0.0
        %760 = vmatpush1.msra.mxu0 0.0
        %761 = vmatprep.subr.mxu0 0.0
        %762 = vmatpush1.msra.mxu0 0.0
        %763 = vmatprep.subr.mxu0 0.0
        %764 = vmatpush1.msra.mxu0 0.0
        %765 = vmatprep.subr.mxu0 0.0
        %766 = vmatpush1.msra.mxu0 0.0
        %767 = vmatprep.subr.mxu0 0.0
        %768 = vmatpush1.msra.mxu0 0.0
        %769 = vmatprep.subr.mxu0 0.0
        %770 = vmatpush1.msra.mxu0 0.0
        %771 = vmatprep.subr.mxu0 0.0
        %772 = vmatpush1.msra.mxu0 0.0
        %773 = vmatprep.subr.mxu0 0.0
        %774 = vmatpush1.msra.mxu0 0.0
        %775 = vmatprep.subr.mxu0 0.0
        %776 = vmatpush1.msra.mxu0 0.0
        %777 = vmatprep.subr.mxu0 0.0
        %778 = vmatpush1.msra.mxu0 0.0
        %779 = vmatprep.subr.mxu0 0.0
        %780 = vmatpush1.msra.mxu0 0.0
        %781 = vmatprep.subr.mxu0 0.0
        %782 = vmatpush1.msra.mxu0 0.0
        %783 = vmatprep.subr.mxu0 0.0
        %784 = vmatpush1.msra.mxu0 0.0
        %785 = vmatprep.subr.mxu0 0.0
        %786 = vmatpush1.msra.mxu0 0.0
        %787 = vmatprep.subr.mxu0 0.0
        %788 = vmatpush1.msra.mxu0 0.0
        %789 = vmatprep.subr.mxu0 0.0
        %790 = vmatpush1.msra.mxu0 0.0
        %791 = vmatprep.subr.mxu0 0.0
        %792 = vmatpush1.msra.mxu0 0.0
        %793 = vmatprep.subr.mxu0 0.0
        %794 = vmatpush1.msra.mxu0 0.0
        %795 = vmatprep.mubr.f32.mxu0 0.0
        %796 = vmatmul.mubr.f32.gmra.mrb[0].mxu0 %v729
        %v797 = vpop.f32.mrb[0].mxu0
        %v798 = vadd.f32 %v726, %v797
        %v799 = vpop.f32.mrb[0].mxu0
        %800 = vdwg.mxu0
        %v801 = vmax.f32 %v798, 0.0
        %802 = vst.msk [vmem:[#allocation3 + $0x1] sm:$0xff] %vm704, %v801
        %v803 = vld [vmem:[#allocation6] sm:$0xff]
        %v804 = vld [vmem:[#allocation6 + $0x8] sm:$0xff]
        %v805 = vld [vmem:[#allocation6 + $0x10] sm:$0xff]
        %v806 = vld [vmem:[#allocation6 + $0x18] sm:$0xff]
        %v807 = vld [vmem:[#allocation6 + $0x20] sm:$0xff]
        %v808 = vld [vmem:[#allocation6 + $0x28] sm:$0xff]
        %v809 = vld [vmem:[#allocation6 + $0x30] sm:$0xff]
        %v810 = vld [vmem:[#allocation6 + $0x38] sm:$0xff]
        %v811 = vld [vmem:[%s4] sm:$0x1]
        %v812 = vld [vmem:[#allocation3 + $0x1] sm:$0xff]
        %v813 = vld [vmem:[#allocation3 + $0x2] sm:$0xff]
        %815 = vrot.lane.b32.xlu0 %v813, 32
        %v816 = vpop.permute.xlu0 %815
        %v818 = vsel %vm704, %v812, %v816
        %v820 = vlaneseq
        %v821 = vshrl.u32 %v820, 7
        %v822 = vsub.s32 0, %v821
        %v823 = vrot.slane %v811, %v822
        %vm825 = vcmask 523264
        %v827 = vsel %vm825, %v818, 0
        %829 = vmatprep.subr.mxu0 0.0
        %830 = vmatpush1.msra.mxu0 %v803
        %831 = vmatprep.subr.mxu0 0.0
        %832 = vmatpush1.msra.mxu0 %v804
        %833 = vmatprep.subr.mxu0 0.0
        %834 = vmatpush1.msra.mxu0 %v805
        %835 = vmatprep.subr.mxu0 0.0
        %836 = vmatpush1.msra.mxu0 %v806
        %837 = vmatprep.subr.mxu0 0.0
        %838 = vmatpush1.msra.mxu0 %v807
        %839 = vmatprep.subr.mxu0 0.0
        %840 = vmatpush1.msra.mxu0 %v808
        %841 = vmatprep.subr.mxu0 0.0
        %842 = vmatpush1.msra.mxu0 %v809
        %843 = vmatprep.subr.mxu0 0.0
        %844 = vmatpush1.msra.mxu0 %v810
        %845 = vmatprep.subr.mxu0 0.0
        %846 = vmatpush1.msra.mxu0 0.0
        %847 = vmatprep.subr.mxu0 0.0
        %848 = vmatpush1.msra.mxu0 0.0
        %849 = vmatprep.subr.mxu0 0.0
        %850 = vmatpush1.msra.mxu0 0.0
        %851 = vmatprep.subr.mxu0 0.0
        %852 = vmatpush1.msra.mxu0 0.0
        %853 = vmatprep.subr.mxu0 0.0
        %854 = vmatpush1.msra.mxu0 0.0
        %855 = vmatprep.subr.mxu0 0.0
        %856 = vmatpush1.msra.mxu0 0.0
        %857 = vmatprep.subr.mxu0 0.0
        %858 = vmatpush1.msra.mxu0 0.0
        %859 = vmatprep.subr.mxu0 0.0
        %860 = vmatpush1.msra.mxu0 0.0
        %861 = vmatprep.subr.mxu0 0.0
        %862 = vmatpush1.msra.mxu0 0.0
        %863 = vmatprep.subr.mxu0 0.0
        %864 = vmatpush1.msra.mxu0 0.0
        %865 = vmatprep.subr.mxu0 0.0
        %866 = vmatpush1.msra.mxu0 0.0
        %867 = vmatprep.subr.mxu0 0.0
        %868 = vmatpush1.msra.mxu0 0.0
        %869 = vmatprep.subr.mxu0 0.0
        %870 = vmatpush1.msra.mxu0 0.0
        %871 = vmatprep.subr.mxu0 0.0
        %872 = vmatpush1.msra.mxu0 0.0
        %873 = vmatprep.subr.mxu0 0.0
        %874 = vmatpush1.msra.mxu0 0.0
        %875 = vmatprep.subr.mxu0 0.0
        %876 = vmatpush1.msra.mxu0 0.0
        %877 = vmatprep.subr.mxu0 0.0
        %878 = vmatpush1.msra.mxu0 0.0
        %879 = vmatprep.subr.mxu0 0.0
        %880 = vmatpush1.msra.mxu0 0.0
        %881 = vmatprep.subr.mxu0 0.0
        %882 = vmatpush1.msra.mxu0 0.0
        %883 = vmatprep.subr.mxu0 0.0
        %884 = vmatpush1.msra.mxu0 0.0
        %885 = vmatprep.subr.mxu0 0.0
        %886 = vmatpush1.msra.mxu0 0.0
        %887 = vmatprep.subr.mxu0 0.0
        %888 = vmatpush1.msra.mxu0 0.0
        %889 = vmatprep.subr.mxu0 0.0
        %890 = vmatpush1.msra.mxu0 0.0
        %891 = vmatprep.subr.mxu0 0.0
        %892 = vmatpush1.msra.mxu0 0.0
        %893 = vmatprep.mubr.f32.mxu0 0.0
        %894 = vmatmul.mubr.f32.gmra.mrb[0].mxu0 %v827
        %v895 = vpop.f32.mrb[0].mxu0
        %v896 = vadd.f32 %v823, %v895
        %v897 = vpop.f32.mrb[0].mxu0
        %898 = vdwg.mxu0
        %v899 = vmax.f32 %v896, 0.0
        %900 = vst.msk [vmem:[#allocation3 + $0x1] sm:$0xff] %vm704, %v899
        %v901 = vld [vmem:[#allocation8] sm:$0xff]
        %v902 = vld [vmem:[#allocation8 + $0x8] sm:$0xff]
        %v903 = vld [vmem:[#allocation8 + $0x10] sm:$0xff]
        %v904 = vld [vmem:[#allocation8 + $0x18] sm:$0xff]
        %v905 = vld [vmem:[#allocation8 + $0x20] sm:$0xff]
        %v906 = vld [vmem:[#allocation8 + $0x28] sm:$0xff]
        %v907 = vld [vmem:[#allocation8 + $0x30] sm:$0xff]
        %v908 = vld [vmem:[#allocation8 + $0x38] sm:$0xff]
        %v909 = vld [vmem:[#allocation9] sm:$0x1]
        %v910 = vld [vmem:[#allocation3 + $0x1] sm:$0xff]
        %v911 = vld [vmem:[#allocation3 + $0x2] sm:$0xff]
        %913 = vrot.lane.b32.xlu0 %v911, 32
        %v914 = vpop.permute.xlu0 %913
        %v916 = vsel %vm704, %v910, %v914
        %v918 = vlaneseq
        %v919 = vshrl.u32 %v918, 7
        %v920 = vsub.s32 0, %v919
        %v921 = vrot.slane %v909, %v920
        %v924 = vsel %vm825, %v916, 0
        %926 = vmatprep.subr.mxu0 0.0
        %927 = vmatpush1.msra.mxu0 %v901
        %928 = vmatprep.subr.mxu0 0.0
        %929 = vmatpush1.msra.mxu0 %v902
        %930 = vmatprep.subr.mxu0 0.0
        %931 = vmatpush1.msra.mxu0 %v903
        %932 = vmatprep.subr.mxu0 0.0
        %933 = vmatpush1.msra.mxu0 %v904
        %934 = vmatprep.subr.mxu0 0.0
        %935 = vmatpush1.msra.mxu0 %v905
        %936 = vmatprep.subr.mxu0 0.0
        %937 = vmatpush1.msra.mxu0 %v906
        %938 = vmatprep.subr.mxu0 0.0
        %939 = vmatpush1.msra.mxu0 %v907
        %940 = vmatprep.subr.mxu0 0.0
        %941 = vmatpush1.msra.mxu0 %v908
        %942 = vmatprep.subr.mxu0 0.0
        %943 = vmatpush1.msra.mxu0 0.0
        %944 = vmatprep.subr.mxu0 0.0
        %945 = vmatpush1.msra.mxu0 0.0
        %946 = vmatprep.subr.mxu0 0.0
        %947 = vmatpush1.msra.mxu0 0.0
        %948 = vmatprep.subr.mxu0 0.0
        %949 = vmatpush1.msra.mxu0 0.0
        %950 = vmatprep.subr.mxu0 0.0
        %951 = vmatpush1.msra.mxu0 0.0
        %952 = vmatprep.subr.mxu0 0.0
        %953 = vmatpush1.msra.mxu0 0.0
        %954 = vmatprep.subr.mxu0 0.0
        %955 = vmatpush1.msra.mxu0 0.0
        %956 = vmatprep.subr.mxu0 0.0
        %957 = vmatpush1.msra.mxu0 0.0
        %958 = vmatprep.subr.mxu0 0.0
        %959 = vmatpush1.msra.mxu0 0.0
        %960 = vmatprep.subr.mxu0 0.0
        %961 = vmatpush1.msra.mxu0 0.0
        %962 = vmatprep.subr.mxu0 0.0
        %963 = vmatpush1.msra.mxu0 0.0
        %964 = vmatprep.subr.mxu0 0.0
        %965 = vmatpush1.msra.mxu0 0.0
        %966 = vmatprep.subr.mxu0 0.0
        %967 = vmatpush1.msra.mxu0 0.0
        %968 = vmatprep.subr.mxu0 0.0
        %969 = vmatpush1.msra.mxu0 0.0
        %970 = vmatprep.subr.mxu0 0.0
        %971 = vmatpush1.msra.mxu0 0.0
        %972 = vmatprep.subr.mxu0 0.0
        %973 = vmatpush1.msra.mxu0 0.0
        %974 = vmatprep.subr.mxu0 0.0
        %975 = vmatpush1.msra.mxu0 0.0
        %976 = vmatprep.subr.mxu0 0.0
        %977 = vmatpush1.msra.mxu0 0.0
        %978 = vmatprep.subr.mxu0 0.0
        %979 = vmatpush1.msra.mxu0 0.0
        %980 = vmatprep.subr.mxu0 0.0
        %981 = vmatpush1.msra.mxu0 0.0
        %982 = vmatprep.subr.mxu0 0.0
        %983 = vmatpush1.msra.mxu0 0.0
        %984 = vmatprep.subr.mxu0 0.0
        %985 = vmatpush1.msra.mxu0 0.0
        %986 = vmatprep.subr.mxu0 0.0
        %987 = vmatpush1.msra.mxu0 0.0
        %988 = vmatprep.subr.mxu0 0.0
        %989 = vmatpush1.msra.mxu0 0.0
        %990 = vmatprep.mubr.f32.mxu0 0.0
        %991 = vmatmul.mubr.f32.gmra.mrb[0].mxu0 %v924
        %v992 = vpop.f32.mrb[0].mxu0
        %v993 = vadd.f32 %v921, %v992
        %v994 = vpop.f32.mrb[0].mxu0
        %995 = vdwg.mxu0
        %v996 = vmax.f32 %v993, 0.0
        %v997 = vadd.f32 %v801, %v996
        %998 = vst.msk [vmem:[%s699] sm:$0xff] %vm704, %v997
        %v999 = vld [vmem:[#allocation11] sm:$0xff]
        %v1000 = vld [vmem:[#allocation11 + $0x8] sm:$0xff]
        %v1001 = vld [vmem:[#allocation11 + $0x10] sm:$0xff]
        %v1002 = vld [vmem:[#allocation11 + $0x18] sm:$0xff]
        %v1003 = vld [vmem:[#allocation11 + $0x20] sm:$0xff]
        %v1004 = vld [vmem:[#allocation11 + $0x28] sm:$0xff]
        %v1005 = vld [vmem:[%s8] sm:$0x1]
        %v1006 = vld [vmem:[#allocation2] sm:$0xff]
        %v1007 = vld [vmem:[#allocation2 + $0x1] sm:$0xff]
        %v1008 = vld [vmem:[#allocation2 + $0x2] sm:$0xff]
        %1010 = vrot.lane.b32.xlu0 %v1007, 16
        %v1011 = vpop.permute.xlu0 %1010
        %1014 = vrot.lane.b32.xlu0 %v1008, 32
        %v1015 = vpop.permute.xlu0 %1014
        %v1017 = vsel %vm700, %v1006, %v1011
        %v1018 = vsel %vm704, %v1017, %v1015
        %v1020 = vlaneseq
        %v1021 = vshrl.u32 %v1020, 7
        %v1022 = vsub.s32 0, %v1021
        %v1023 = vrot.slane %v1005, %v1022
        %vm1025 = vcmask 392192
        %v1027 = vsel %vm1025, %v1018, 0
        %1029 = vmatprep.subr.mxu0 0.0
        %1030 = vmatpush1.msra.mxu0 %v999
        %1031 = vmatprep.subr.mxu0 0.0
        %1032 = vmatpush1.msra.mxu0 %v1000
        %1033 = vmatprep.subr.mxu0 0.0
        %1034 = vmatpush1.msra.mxu0 %v1001
        %1035 = vmatprep.subr.mxu0 0.0
        %1036 = vmatpush1.msra.mxu0 %v1002
        %1037 = vmatprep.subr.mxu0 0.0
        %1038 = vmatpush1.msra.mxu0 %v1003
        %1039 = vmatprep.subr.mxu0 0.0
        %1040 = vmatpush1.msra.mxu0 %v1004
        %1041 = vmatprep.subr.mxu0 0.0
        %1042 = vmatpush1.msra.mxu0 0.0
        %1043 = vmatprep.subr.mxu0 0.0
        %1044 = vmatpush1.msra.mxu0 0.0
        %1045 = vmatprep.subr.mxu0 0.0
        %1046 = vmatpush1.msra.mxu0 0.0
        %1047 = vmatprep.subr.mxu0 0.0
        %1048 = vmatpush1.msra.mxu0 0.0
        %1049 = vmatprep.subr.mxu0 0.0
        %1050 = vmatpush1.msra.mxu0 0.0
        %1051 = vmatprep.subr.mxu0 0.0
        %1052 = vmatpush1.msra.mxu0 0.0
        %1053 = vmatprep.subr.mxu0 0.0
        %1054 = vmatpush1.msra.mxu0 0.0
        %1055 = vmatprep.subr.mxu0 0.0
        %1056 = vmatpush1.msra.mxu0 0.0
        %1057 = vmatprep.subr.mxu0 0.0
        %1058 = vmatpush1.msra.mxu0 0.0
        %1059 = vmatprep.subr.mxu0 0.0
        %1060 = vmatpush1.msra.mxu0 0.0
        %1061 = vmatprep.subr.mxu0 0.0
        %1062 = vmatpush1.msra.mxu0 0.0
        %1063 = vmatprep.subr.mxu0 0.0
        %1064 = vmatpush1.msra.mxu0 0.0
        %1065 = vmatprep.subr.mxu0 0.0
        %1066 = vmatpush1.msra.mxu0 0.0
        %1067 = vmatprep.subr.mxu0 0.0
        %1068 = vmatpush1.msra.mxu0 0.0
        %1069 = vmatprep.subr.mxu0 0.0
        %1070 = vmatpush1.msra.mxu0 0.0
        %1071 = vmatprep.subr.mxu0 0.0
        %1072 = vmatpush1.msra.mxu0 0.0
        %1073 = vmatprep.subr.mxu0 0.0
        %1074 = vmatpush1.msra.mxu0 0.0
        %1075 = vmatprep.subr.mxu0 0.0
        %1076 = vmatpush1.msra.mxu0 0.0
        %1077 = vmatprep.subr.mxu0 0.0
        %1078 = vmatpush1.msra.mxu0 0.0
        %1079 = vmatprep.subr.mxu0 0.0
        %1080 = vmatpush1.msra.mxu0 0.0
        %1081 = vmatprep.subr.mxu0 0.0
        %1082 = vmatpush1.msra.mxu0 0.0
        %1083 = vmatprep.subr.mxu0 0.0
        %1084 = vmatpush1.msra.mxu0 0.0
        %1085 = vmatprep.subr.mxu0 0.0
        %1086 = vmatpush1.msra.mxu0 0.0
        %1087 = vmatprep.subr.mxu0 0.0
        %1088 = vmatpush1.msra.mxu0 0.0
        %1089 = vmatprep.subr.mxu0 0.0
        %1090 = vmatpush1.msra.mxu0 0.0
        %1091 = vmatprep.subr.mxu0 0.0
        %1092 = vmatpush1.msra.mxu0 0.0
        %1093 = vmatprep.mubr.f32.mxu0 0.0
        %1094 = vmatmul.mubr.f32.gmra.mrb[0].mxu0 %v1027
        %v1095 = vpop.f32.mrb[0].mxu0
        %v1096 = vadd.f32 %v1023, %v1095
        %v1097 = vpop.f32.mrb[0].mxu0
        %1098 = vdwg.mxu0
        %v1099 = vmax.f32 %v1096, 0.0
        %1100 = vst.msk [vmem:[#allocation3 + $0x1] sm:$0xff] %vm704, %v1099
        %v1101 = vld [vmem:[%s9] sm:$0xff]
        %v1102 = vld [vmem:[%s9 + $0x8] sm:$0xff]
        %v1103 = vld [vmem:[%s9 + $0x10] sm:$0xff]
        %v1104 = vld [vmem:[%s9 + $0x18] sm:$0xff]
        %v1105 = vld [vmem:[%s9 + $0x20] sm:$0xff]
        %v1106 = vld [vmem:[%s9 + $0x28] sm:$0xff]
        %v1107 = vld [vmem:[%s9 + $0x30] sm:$0xff]
        %v1108 = vld [vmem:[%s9 + $0x38] sm:$0xff]
        %v1109 = vld [vmem:[%s9 + $0x40] sm:$0xff]
        %v1110 = vld [vmem:[%s9 + $0x48] sm:$0xff]
        %v1111 = vld [vmem:[%s9 + $0x50] sm:$0xff]
        %v1112 = vld [vmem:[%s9 + $0x58] sm:$0xff]
        %v1113 = vld [vmem:[%s10] sm:$0x1]
        %v1114 = vld [vmem:[#allocation3] sm:$0xff]
        %v1115 = vld [vmem:[#allocation3 + $0x1] sm:$0xff]
        %v1116 = vld [vmem:[#allocation3 + $0x2] sm:$0xff]
        %1118 = vrot.lane.b32.xlu0 %v1115, 32
        %v1119 = vpop.permute.xlu0 %1118
        %1122 = vrot.lane.b32.xlu0 %v1116, 64
        %v1123 = vpop.permute.xlu0 %1122
        %v1125 = vsel %vm704, %v1114, %v1119
        %v1126 = vsel %vm825, %v1125, %v1123
        %v1128 = vlaneseq
        %v1129 = vshrl.u32 %v1128, 7
        %v1130 = vsub.s32 0, %v1129
        %v1131 = vrot.slane %v1113, %v1130
        %vm1133 = vcmask 785408
        %v1135 = vsel %vm1133, %v1126, 0
        %1137 = vmatprep.subr.mxu0 0.0
        %1138 = vmatpush1.msra.mxu0 %v1101
        %1139 = vmatprep.subr.mxu0 0.0
        %1140 = vmatpush1.msra.mxu0 %v1102
        %1141 = vmatprep.subr.mxu0 0.0
        %1142 = vmatpush1.msra.mxu0 %v1103
        %1143 = vmatprep.subr.mxu0 0.0
        %1144 = vmatpush1.msra.mxu0 %v1104
        %1145 = vmatprep.subr.mxu0 0.0
        %1146 = vmatpush1.msra.mxu0 %v1105
        %1147 = vmatprep.subr.mxu0 0.0
        %1148 = vmatpush1.msra.mxu0 %v1106
        %1149 = vmatprep.subr.mxu0 0.0
        %1150 = vmatpush1.msra.mxu0 %v1107
        %1151 = vmatprep.subr.mxu0 0.0
        %1152 = vmatpush1.msra.mxu0 %v1108
        %1153 = vmatprep.subr.mxu0 0.0
        %1154 = vmatpush1.msra.mxu0 %v1109
        %1155 = vmatprep.subr.mxu0 0.0
        %1156 = vmatpush1.msra.mxu0 %v1110
        %1157 = vmatprep.subr.mxu0 0.0
        %1158 = vmatpush1.msra.mxu0 %v1111
        %1159 = vmatprep.subr.mxu0 0.0
        %1160 = vmatpush1.msra.mxu0 %v1112
        %1161 = vmatprep.subr.mxu0 0.0
        %1162 = vmatpush1.msra.mxu0 0.0
        %1163 = vmatprep.subr.mxu0 0.0
        %1164 = vmatpush1.msra.mxu0 0.0
        %1165 = vmatprep.subr.mxu0 0.0
        %1166 = vmatpush1.msra.mxu0 0.0
        %1167 = vmatprep.subr.mxu0 0.0
        %1168 = vmatpush1.msra.mxu0 0.0
        %1169 = vmatprep.subr.mxu0 0.0
        %1170 = vmatpush1.msra.mxu0 0.0
        %1171 = vmatprep.subr.mxu0 0.0
        %1172 = vmatpush1.msra.mxu0 0.0
        %1173 = vmatprep.subr.mxu0 0.0
        %1174 = vmatpush1.msra.mxu0 0.0
        %1175 = vmatprep.subr.mxu0 0.0
        %1176 = vmatpush1.msra.mxu0 0.0
        %1177 = vmatprep.subr.mxu0 0.0
        %1178 = vmatpush1.msra.mxu0 0.0
        %1179 = vmatprep.subr.mxu0 0.0
        %1180 = vmatpush1.msra.mxu0 0.0
        %1181 = vmatprep.subr.mxu0 0.0
        %1182 = vmatpush1.msra.mxu0 0.0
        %1183 = vmatprep.subr.mxu0 0.0
        %1184 = vmatpush1.msra.mxu0 0.0
        %1185 = vmatprep.subr.mxu0 0.0
        %1186 = vmatpush1.msra.mxu0 0.0
        %1187 = vmatprep.subr.mxu0 0.0
        %1188 = vmatpush1.msra.mxu0 0.0
        %1189 = vmatprep.subr.mxu0 0.0
        %1190 = vmatpush1.msra.mxu0 0.0
        %1191 = vmatprep.subr.mxu0 0.0
        %1192 = vmatpush1.msra.mxu0 0.0
        %1193 = vmatprep.subr.mxu0 0.0
        %1194 = vmatpush1.msra.mxu0 0.0
        %1195 = vmatprep.subr.mxu0 0.0
        %1196 = vmatpush1.msra.mxu0 0.0
        %1197 = vmatprep.subr.mxu0 0.0
        %1198 = vmatpush1.msra.mxu0 0.0
        %1199 = vmatprep.subr.mxu0 0.0
        %1200 = vmatpush1.msra.mxu0 0.0
        %1201 = vmatprep.mubr.f32.mxu0 0.0
        %1202 = vmatmul.mubr.f32.gmra.mrb[0].mxu0 %v1135
        %v1203 = vpop.f32.mrb[0].mxu0
        %v1204 = vadd.f32 %v1131, %v1203
        %v1205 = vpop.f32.mrb[0].mxu0
        %1206 = vdwg.mxu0
        %v1207 = vmax.f32 %v1204, 0.0
        %1208 = vst.msk [vmem:[#allocation3 + $0x1] sm:$0xff] %vm704, %v1207
        %v1209 = vld [vmem:[#allocation12] sm:$0xff]
        %v1210 = vld [vmem:[#allocation12 + $0x8] sm:$0xff]
        %v1211 = vld [vmem:[#allocation12 + $0x10] sm:$0xff]
        %v1212 = vld [vmem:[#allocation12 + $0x18] sm:$0xff]
        %v1213 = vld [vmem:[#allocation12 + $0x20] sm:$0xff]
        %v1214 = vld [vmem:[#allocation12 + $0x28] sm:$0xff]
        %v1215 = vld [vmem:[#allocation12 + $0x30] sm:$0xff]
        %v1216 = vld [vmem:[#allocation12 + $0x38] sm:$0xff]
        %v1217 = vld [vmem:[#allocation12 + $0x40] sm:$0xff]
        %v1218 = vld [vmem:[#allocation12 + $0x48] sm:$0xff]
        %v1219 = vld [vmem:[#allocation12 + $0x50] sm:$0xff]
        %v1220 = vld [vmem:[#allocation12 + $0x58] sm:$0xff]
        %v1221 = vld [vmem:[%s12] sm:$0x1]
        %v1222 = vld [vmem:[#allocation3] sm:$0xff]
        %v1223 = vld [vmem:[#allocation3 + $0x1] sm:$0xff]
        %v1224 = vld [vmem:[#allocation3 + $0x2] sm:$0xff]
        %1226 = vrot.lane.b32.xlu0 %v1223, 32
        %v1227 = vpop.permute.xlu0 %1226
        %1230 = vrot.lane.b32.xlu0 %v1224, 64
        %v1231 = vpop.permute.xlu0 %1230
        %v1233 = vsel %vm704, %v1222, %v1227
        %v1234 = vsel %vm825, %v1233, %v1231
        %v1236 = vlaneseq
        %v1237 = vshrl.u32 %v1236, 7
        %v1238 = vsub.s32 0, %v1237
        %v1239 = vrot.slane %v1221, %v1238
        %v1242 = vsel %vm1133, %v1234, 0
        %1244 = vmatprep.subr.mxu0 0.0
        %1245 = vmatpush1.msra.mxu0 %v1209
        %1246 = vmatprep.subr.mxu0 0.0
        %1247 = vmatpush1.msra.mxu0 %v1210
        %1248 = vmatprep.subr.mxu0 0.0
        %1249 = vmatpush1.msra.mxu0 %v1211
        %1250 = vmatprep.subr.mxu0 0.0
        %1251 = vmatpush1.msra.mxu0 %v1212
        %1252 = vmatprep.subr.mxu0 0.0
        %1253 = vmatpush1.msra.mxu0 %v1213
        %1254 = vmatprep.subr.mxu0 0.0
        %1255 = vmatpush1.msra.mxu0 %v1214
        %1256 = vmatprep.subr.mxu0 0.0
        %1257 = vmatpush1.msra.mxu0 %v1215
        %1258 = vmatprep.subr.mxu0 0.0
        %1259 = vmatpush1.msra.mxu0 %v1216
        %1260 = vmatprep.subr.mxu0 0.0
        %1261 = vmatpush1.msra.mxu0 %v1217
        %1262 = vmatprep.subr.mxu0 0.0
        %1263 = vmatpush1.msra.mxu0 %v1218
        %1264 = vmatprep.subr.mxu0 0.0
        %1265 = vmatpush1.msra.mxu0 %v1219
        %1266 = vmatprep.subr.mxu0 0.0
        %1267 = vmatpush1.msra.mxu0 %v1220
        %1268 = vmatprep.subr.mxu0 0.0
        %1269 = vmatpush1.msra.mxu0 0.0
        %1270 = vmatprep.subr.mxu0 0.0
        %1271 = vmatpush1.msra.mxu0 0.0
        %1272 = vmatprep.subr.mxu0 0.0
        %1273 = vmatpush1.msra.mxu0 0.0
        %1274 = vmatprep.subr.mxu0 0.0
        %1275 = vmatpush1.msra.mxu0 0.0
        %1276 = vmatprep.subr.mxu0 0.0
        %1277 = vmatpush1.msra.mxu0 0.0
        %1278 = vmatprep.subr.mxu0 0.0
        %1279 = vmatpush1.msra.mxu0 0.0
        %1280 = vmatprep.subr.mxu0 0.0
        %1281 = vmatpush1.msra.mxu0 0.0
        %1282 = vmatprep.subr.mxu0 0.0
        %1283 = vmatpush1.msra.mxu0 0.0
        %1284 = vmatprep.subr.mxu0 0.0
        %1285 = vmatpush1.msra.mxu0 0.0
        %1286 = vmatprep.subr.mxu0 0.0
        %1287 = vmatpush1.msra.mxu0 0.0
        %1288 = vmatprep.subr.mxu0 0.0
        %1289 = vmatpush1.msra.mxu0 0.0
        %1290 = vmatprep.subr.mxu0 0.0
        %1291 = vmatpush1.msra.mxu0 0.0
        %1292 = vmatprep.subr.mxu0 0.0
        %1293 = vmatpush1.msra.mxu0 0.0
        %1294 = vmatprep.subr.mxu0 0.0
        %1295 = vmatpush1.msra.mxu0 0.0
        %1296 = vmatprep.subr.mxu0 0.0
        %1297 = vmatpush1.msra.mxu0 0.0
        %1298 = vmatprep.subr.mxu0 0.0
        %1299 = vmatpush1.msra.mxu0 0.0
        %1300 = vmatprep.subr.mxu0 0.0
        %1301 = vmatpush1.msra.mxu0 0.0
        %1302 = vmatprep.subr.mxu0 0.0
        %1303 = vmatpush1.msra.mxu0 0.0
        %1304 = vmatprep.subr.mxu0 0.0
        %1305 = vmatpush1.msra.mxu0 0.0
        %1306 = vmatprep.subr.mxu0 0.0
        %1307 = vmatpush1.msra.mxu0 0.0
        %1308 = vmatprep.mubr.f32.mxu0 0.0
        %1309 = vmatmul.mubr.f32.gmra.mrb[0].mxu0 %v1242
        %v1310 = vpop.f32.mrb[0].mxu0
        %v1311 = vadd.f32 %v1239, %v1310
        %v1312 = vpop.f32.mrb[0].mxu0
        %1313 = vdwg.mxu0
        %v1314 = vmax.f32 %v1311, 0.0
        %v1315 = vadd.f32 %v1099, %v1314
        %s1316 = scalar_lea.vmem %s699, 8
        %1317 = vst.msk [vmem:[%s1316] sm:$0xff] %vm704, %v1315
        %v1318 = vld [vmem:[#allocation14] sm:$0xff]
        %v1319 = vld [vmem:[#allocation14 + $0x8] sm:$0xff]
        %v1320 = vld [vmem:[#allocation14 + $0x10] sm:$0xff]
        %v1321 = vld [vmem:[#allocation14 + $0x18] sm:$0xff]
        %v1322 = vld [vmem:[#allocation14 + $0x20] sm:$0xff]
        %v1323 = vld [vmem:[#allocation14 + $0x28] sm:$0xff]
        %v1324 = vld [vmem:[#allocation14 + $0x30] sm:$0xff]
        %v1325 = vld [vmem:[#allocation14 + $0x38] sm:$0xff]
        %v1326 = vld [vmem:[%s14] sm:$0x1]
        %v1327 = vld [vmem:[#allocation2] sm:$0xff]
        %v1328 = vld [vmem:[#allocation2 + $0x1] sm:$0xff]
        %v1329 = vld [vmem:[#allocation2 + $0x2] sm:$0xff]
        %v1330 = vld [vmem:[#allocation2 + $0x3] sm:$0xff]
        %1332 = vrot.lane.b32.xlu0 %v1328, 16
        %v1333 = vpop.permute.xlu0 %1332
        %1336 = vrot.lane.b32.xlu0 %v1329, 32
        %v1337 = vpop.permute.xlu0 %1336
        %1340 = vrot.lane.b32.xlu0 %v1330, 48
        %v1341 = vpop.permute.xlu0 %1340
        %v1343 = vsel %vm700, %v1327, %v1333
        %v1344 = vsel %vm704, %v1343, %v1337
        %v1345 = vsel %vm1025, %v1344, %v1341
        %v1347 = vlaneseq
        %v1348 = vshrl.u32 %v1347, 7
        %v1349 = vsub.s32 0, %v1348
        %v1350 = vrot.slane %v1326, %v1349
        %v1353 = vsel %vm825, %v1345, 0
        %1355 = vmatprep.subr.mxu0 0.0
        %1356 = vmatpush1.msra.mxu0 %v1318
        %1357 = vmatprep.subr.mxu0 0.0
        %1358 = vmatpush1.msra.mxu0 %v1319
        %1359 = vmatprep.subr.mxu0 0.0
        %1360 = vmatpush1.msra.mxu0 %v1320
        %1361 = vmatprep.subr.mxu0 0.0
        %1362 = vmatpush1.msra.mxu0 %v1321
        %1363 = vmatprep.subr.mxu0 0.0
        %1364 = vmatpush1.msra.mxu0 %v1322
        %1365 = vmatprep.subr.mxu0 0.0
        %1366 = vmatpush1.msra.mxu0 %v1323
        %1367 = vmatprep.subr.mxu0 0.0
        %1368 = vmatpush1.msra.mxu0 %v1324
        %1369 = vmatprep.subr.mxu0 0.0
        %1370 = vmatpush1.msra.mxu0 %v1325
        %1371 = vmatprep.subr.mxu0 0.0
        %1372 = vmatpush1.msra.mxu0 0.0
        %1373 = vmatprep.subr.mxu0 0.0
        %1374 = vmatpush1.msra.mxu0 0.0
        %1375 = vmatprep.subr.mxu0 0.0
        %1376 = vmatpush1.msra.mxu0 0.0
        %1377 = vmatprep.subr.mxu0 0.0
        %1378 = vmatpush1.msra.mxu0 0.0
        %1379 = vmatprep.subr.mxu0 0.0
        %1380 = vmatpush1.msra.mxu0 0.0
        %1381 = vmatprep.subr.mxu0 0.0
        %1382 = vmatpush1.msra.mxu0 0.0
        %1383 = vmatprep.subr.mxu0 0.0
        %1384 = vmatpush1.msra.mxu0 0.0
        %1385 = vmatprep.subr.mxu0 0.0
        %1386 = vmatpush1.msra.mxu0 0.0
        %1387 = vmatprep.subr.mxu0 0.0
        %1388 = vmatpush1.msra.mxu0 0.0
        %1389 = vmatprep.subr.mxu0 0.0
        %1390 = vmatpush1.msra.mxu0 0.0
        %1391 = vmatprep.subr.mxu0 0.0
        %1392 = vmatpush1.msra.mxu0 0.0
        %1393 = vmatprep.subr.mxu0 0.0
        %1394 = vmatpush1.msra.mxu0 0.0
        %1395 = vmatprep.subr.mxu0 0.0
        %1396 = vmatpush1.msra.mxu0 0.0
        %1397 = vmatprep.subr.mxu0 0.0
        %1398 = vmatpush1.msra.mxu0 0.0
        %1399 = vmatprep.subr.mxu0 0.0
        %1400 = vmatpush1.msra.mxu0 0.0
        %1401 = vmatprep.subr.mxu0 0.0
        %1402 = vmatpush1.msra.mxu0 0.0
        %1403 = vmatprep.subr.mxu0 0.0
        %1404 = vmatpush1.msra.mxu0 0.0
        %1405 = vmatprep.subr.mxu0 0.0
        %1406 = vmatpush1.msra.mxu0 0.0
        %1407 = vmatprep.subr.mxu0 0.0
        %1408 = vmatpush1.msra.mxu0 0.0
        %1409 = vmatprep.subr.mxu0 0.0
        %1410 = vmatpush1.msra.mxu0 0.0
        %1411 = vmatprep.subr.mxu0 0.0
        %1412 = vmatpush1.msra.mxu0 0.0
        %1413 = vmatprep.subr.mxu0 0.0
        %1414 = vmatpush1.msra.mxu0 0.0
        %1415 = vmatprep.subr.mxu0 0.0
        %1416 = vmatpush1.msra.mxu0 0.0
        %1417 = vmatprep.subr.mxu0 0.0
        %1418 = vmatpush1.msra.mxu0 0.0
        %1419 = vmatprep.mubr.f32.mxu0 0.0
        %1420 = vmatmul.mubr.f32.gmra.mrb[0].mxu0 %v1353
        %v1421 = vpop.f32.mrb[0].mxu0
        %v1422 = vadd.f32 %v1350, %v1421
        %v1423 = vpop.f32.mrb[0].mxu0
        %1424 = vdwg.mxu0
        %v1425 = vmax.f32 %v1422, 0.0
        %1426 = vst.msk [vmem:[#allocation3 + $0x1] sm:$0xff] %vm704, %v1425
        %v1427 = vld [vmem:[%s15] sm:$0xff]
        %v1428 = vld [vmem:[%s15 + $0x8] sm:$0xff]
        %v1429 = vld [vmem:[%s15 + $0x10] sm:$0xff]
        %v1430 = vld [vmem:[%s15 + $0x18] sm:$0xff]
        %v1431 = vld [vmem:[%s15 + $0x20] sm:$0xff]
        %v1432 = vld [vmem:[%s15 + $0x28] sm:$0xff]
        %v1433 = vld [vmem:[%s15 + $0x30] sm:$0xff]
        %v1434 = vld [vmem:[%s15 + $0x38] sm:$0xff]
        %v1435 = vld [vmem:[%s15 + $0x40] sm:$0xff]
        %v1436 = vld [vmem:[%s15 + $0x48] sm:$0xff]
        %v1437 = vld [vmem:[%s15 + $0x50] sm:$0xff]
        %v1438 = vld [vmem:[%s15 + $0x58] sm:$0xff]
        %v1439 = vld [vmem:[%s15 + $0x60] sm:$0xff]
        %v1440 = vld [vmem:[%s15 + $0x68] sm:$0xff]
        %v1441 = vld [vmem:[%s15 + $0x70] sm:$0xff]
        %v1442 = vld [vmem:[%s15 + $0x78] sm:$0xff]
        %v1443 = vld [vmem:[%s16] sm:$0x1]
        %v1444 = vld [vmem:[#allocation3] sm:$0xff]
        %v1445 = vld [vmem:[#allocation3 + $0x1] sm:$0xff]
        %v1446 = vld [vmem:[#allocation3 + $0x2] sm:$0xff]
        %v1447 = vld [vmem:[#allocation3 + $0x3] sm:$0xff]
        %1449 = vrot.lane.b32.xlu0 %v1445, 32
        %v1450 = vpop.permute.xlu0 %1449
        %1453 = vrot.lane.b32.xlu0 %v1446, 64
        %v1454 = vpop.permute.xlu0 %1453
        %1457 = vrot.lane.b32.xlu0 %v1447, 96
        %v1458 = vpop.permute.xlu0 %1457
        %v1460 = vsel %vm704, %v1444, %v1450
        %v1461 = vsel %vm825, %v1460, %v1454
        %v1462 = vsel %vm1133, %v1461, %v1458
        %v1464 = vlaneseq
        %v1465 = vshrl.u32 %v1464, 7
        %v1466 = vsub.s32 0, %v1465
        %v1467 = vrot.slane %v1443, %v1466
        %1469 = vmatprep.subr.mxu0 0.0
        %1470 = vmatpush1.msra.mxu0 %v1427
        %1471 = vmatprep.subr.mxu0 0.0
        %1472 = vmatpush1.msra.mxu0 %v1428
        %1473 = vmatprep.subr.mxu0 0.0
        %1474 = vmatpush1.msra.mxu0 %v1429
        %1475 = vmatprep.subr.mxu0 0.0
        %1476 = vmatpush1.msra.mxu0 %v1430
        %1477 = vmatprep.subr.mxu0 0.0
        %1478 = vmatpush1.msra.mxu0 %v1431
        %1479 = vmatprep.subr.mxu0 0.0
        %1480 = vmatpush1.msra.mxu0 %v1432
        %1481 = vmatprep.subr.mxu0 0.0
        %1482 = vmatpush1.msra.mxu0 %v1433
        %1483 = vmatprep.subr.mxu0 0.0
        %1484 = vmatpush1.msra.mxu0 %v1434
        %1485 = vmatprep.subr.mxu0 0.0
        %1486 = vmatpush1.msra.mxu0 %v1435
        %1487 = vmatprep.subr.mxu0 0.0
        %1488 = vmatpush1.msra.mxu0 %v1436
        %1489 = vmatprep.subr.mxu0 0.0
        %1490 = vmatpush1.msra.mxu0 %v1437
        %1491 = vmatprep.subr.mxu0 0.0
        %1492 = vmatpush1.msra.mxu0 %v1438
        %1493 = vmatprep.subr.mxu0 0.0
        %1494 = vmatpush1.msra.mxu0 %v1439
        %1495 = vmatprep.subr.mxu0 0.0
        %1496 = vmatpush1.msra.mxu0 %v1440
        %1497 = vmatprep.subr.mxu0 0.0
        %1498 = vmatpush1.msra.mxu0 %v1441
        %1499 = vmatprep.subr.mxu0 0.0
        %1500 = vmatpush1.msra.mxu0 %v1442
        %1501 = vmatprep.subr.mxu0 0.0
        %1502 = vmatpush1.msra.mxu0 0.0
        %1503 = vmatprep.subr.mxu0 0.0
        %1504 = vmatpush1.msra.mxu0 0.0
        %1505 = vmatprep.subr.mxu0 0.0
        %1506 = vmatpush1.msra.mxu0 0.0
        %1507 = vmatprep.subr.mxu0 0.0
        %1508 = vmatpush1.msra.mxu0 0.0
        %1509 = vmatprep.subr.mxu0 0.0
        %1510 = vmatpush1.msra.mxu0 0.0
        %1511 = vmatprep.subr.mxu0 0.0
        %1512 = vmatpush1.msra.mxu0 0.0
        %1513 = vmatprep.subr.mxu0 0.0
        %1514 = vmatpush1.msra.mxu0 0.0
        %1515 = vmatprep.subr.mxu0 0.0
        %1516 = vmatpush1.msra.mxu0 0.0
        %1517 = vmatprep.subr.mxu0 0.0
        %1518 = vmatpush1.msra.mxu0 0.0
        %1519 = vmatprep.subr.mxu0 0.0
        %1520 = vmatpush1.msra.mxu0 0.0
        %1521 = vmatprep.subr.mxu0 0.0
        %1522 = vmatpush1.msra.mxu0 0.0
        %1523 = vmatprep.subr.mxu0 0.0
        %1524 = vmatpush1.msra.mxu0 0.0
        %1525 = vmatprep.subr.mxu0 0.0
        %1526 = vmatpush1.msra.mxu0 0.0
        %1527 = vmatprep.subr.mxu0 0.0
        %1528 = vmatpush1.msra.mxu0 0.0
        %1529 = vmatprep.subr.mxu0 0.0
        %1530 = vmatpush1.msra.mxu0 0.0
        %1531 = vmatprep.subr.mxu0 0.0
        %1532 = vmatpush1.msra.mxu0 0.0
        %1533 = vmatprep.mubr.f32.mxu0 0.0
        %1534 = vmatmul.mubr.f32.gmra.mrb[0].mxu0 %v1462
        %v1535 = vpop.f32.mrb[0].mxu0
        %v1536 = vadd.f32 %v1467, %v1535
        %v1537 = vpop.f32.mrb[0].mxu0
        %1538 = vdwg.mxu0
        %v1539 = vmax.f32 %v1536, 0.0
        %1540 = vst.msk [vmem:[#allocation3 + $0x1] sm:$0xff] %vm704, %v1539
        %v1541 = vld [vmem:[%s17] sm:$0xff]
        %v1542 = vld [vmem:[%s17 + $0x8] sm:$0xff]
        %v1543 = vld [vmem:[%s17 + $0x10] sm:$0xff]
        %v1544 = vld [vmem:[%s17 + $0x18] sm:$0xff]
        %v1545 = vld [vmem:[%s17 + $0x20] sm:$0xff]
        %v1546 = vld [vmem:[%s17 + $0x28] sm:$0xff]
        %v1547 = vld [vmem:[%s17 + $0x30] sm:$0xff]
        %v1548 = vld [vmem:[%s17 + $0x38] sm:$0xff]
        %v1549 = vld [vmem:[%s17 + $0x40] sm:$0xff]
        %v1550 = vld [vmem:[%s17 + $0x48] sm:$0xff]
        %v1551 = vld [vmem:[%s17 + $0x50] sm:$0xff]
        %v1552 = vld [vmem:[%s17 + $0x58] sm:$0xff]
        %v1553 = vld [vmem:[%s17 + $0x60] sm:$0xff]
        %v1554 = vld [vmem:[%s17 + $0x68] sm:$0xff]
        %v1555 = vld [vmem:[%s17 + $0x70] sm:$0xff]
        %v1556 = vld [vmem:[%s17 + $0x78] sm:$0xff]
        %v1557 = vld [vmem:[%s18] sm:$0x1]
        %v1558 = vld [vmem:[#allocation3] sm:$0xff]
        %v1559 = vld [vmem:[#allocation3 + $0x1] sm:$0xff]
        %v1560 = vld [vmem:[#allocation3 + $0x2] sm:$0xff]
        %v1561 = vld [vmem:[#allocation3 + $0x3] sm:$0xff]
        %1563 = vrot.lane.b32.xlu0 %v1559, 32
        %v1564 = vpop.permute.xlu0 %1563
        %1567 = vrot.lane.b32.xlu0 %v1560, 64
        %v1568 = vpop.permute.xlu0 %1567
        %1571 = vrot.lane.b32.xlu0 %v1561, 96
        %v1572 = vpop.permute.xlu0 %1571
        %v1574 = vsel %vm704, %v1558, %v1564
        %v1575 = vsel %vm825, %v1574, %v1568
        %v1576 = vsel %vm1133, %v1575, %v1572
        %v1578 = vlaneseq
        %v1579 = vshrl.u32 %v1578, 7
        %v1580 = vsub.s32 0, %v1579
        %v1581 = vrot.slane %v1557, %v1580
        %1583 = vmatprep.subr.mxu0 0.0
        %1584 = vmatpush1.msra.mxu0 %v1541
        %1585 = vmatprep.subr.mxu0 0.0
        %1586 = vmatpush1.msra.mxu0 %v1542
        %1587 = vmatprep.subr.mxu0 0.0
        %1588 = vmatpush1.msra.mxu0 %v1543
        %1589 = vmatprep.subr.mxu0 0.0
        %1590 = vmatpush1.msra.mxu0 %v1544
        %1591 = vmatprep.subr.mxu0 0.0
        %1592 = vmatpush1.msra.mxu0 %v1545
        %1593 = vmatprep.subr.mxu0 0.0
        %1594 = vmatpush1.msra.mxu0 %v1546
        %1595 = vmatprep.subr.mxu0 0.0
        %1596 = vmatpush1.msra.mxu0 %v1547
        %1597 = vmatprep.subr.mxu0 0.0
        %1598 = vmatpush1.msra.mxu0 %v1548
        %1599 = vmatprep.subr.mxu0 0.0
        %1600 = vmatpush1.msra.mxu0 %v1549
        %1601 = vmatprep.subr.mxu0 0.0
        %1602 = vmatpush1.msra.mxu0 %v1550
        %1603 = vmatprep.subr.mxu0 0.0
        %1604 = vmatpush1.msra.mxu0 %v1551
        %1605 = vmatprep.subr.mxu0 0.0
        %1606 = vmatpush1.msra.mxu0 %v1552
        %1607 = vmatprep.subr.mxu0 0.0
        %1608 = vmatpush1.msra.mxu0 %v1553
        %1609 = vmatprep.subr.mxu0 0.0
        %1610 = vmatpush1.msra.mxu0 %v1554
        %1611 = vmatprep.subr.mxu0 0.0
        %1612 = vmatpush1.msra.mxu0 %v1555
        %1613 = vmatprep.subr.mxu0 0.0
        %1614 = vmatpush1.msra.mxu0 %v1556
        %1615 = vmatprep.subr.mxu0 0.0
        %1616 = vmatpush1.msra.mxu0 0.0
        %1617 = vmatprep.subr.mxu0 0.0
        %1618 = vmatpush1.msra.mxu0 0.0
        %1619 = vmatprep.subr.mxu0 0.0
        %1620 = vmatpush1.msra.mxu0 0.0
        %1621 = vmatprep.subr.mxu0 0.0
        %1622 = vmatpush1.msra.mxu0 0.0
        %1623 = vmatprep.subr.mxu0 0.0
        %1624 = vmatpush1.msra.mxu0 0.0
        %1625 = vmatprep.subr.mxu0 0.0
        %1626 = vmatpush1.msra.mxu0 0.0
        %1627 = vmatprep.subr.mxu0 0.0
        %1628 = vmatpush1.msra.mxu0 0.0
        %1629 = vmatprep.subr.mxu0 0.0
        %1630 = vmatpush1.msra.mxu0 0.0
        %1631 = vmatprep.subr.mxu0 0.0
        %1632 = vmatpush1.msra.mxu0 0.0
        %1633 = vmatprep.subr.mxu0 0.0
        %1634 = vmatpush1.msra.mxu0 0.0
        %1635 = vmatprep.subr.mxu0 0.0
        %1636 = vmatpush1.msra.mxu0 0.0
        %1637 = vmatprep.subr.mxu0 0.0
        %1638 = vmatpush1.msra.mxu0 0.0
        %1639 = vmatprep.subr.mxu0 0.0
        %1640 = vmatpush1.msra.mxu0 0.0
        %1641 = vmatprep.subr.mxu0 0.0
        %1642 = vmatpush1.msra.mxu0 0.0
        %1643 = vmatprep.subr.mxu0 0.0
        %1644 = vmatpush1.msra.mxu0 0.0
        %1645 = vmatprep.subr.mxu0 0.0
        %1646 = vmatpush1.msra.mxu0 0.0
        %1647 = vmatprep.mubr.f32.mxu0 0.0
        %1648 = vmatmul.mubr.f32.gmra.mrb[0].mxu0 %v1576
        %v1649 = vpop.f32.mrb[0].mxu0
        %v1650 = vadd.f32 %v1581, %v1649
        %v1651 = vpop.f32.mrb[0].mxu0
        %1652 = vdwg.mxu0
        %v1653 = vmax.f32 %v1650, 0.0
        %v1654 = vadd.f32 %v1425, %v1653
        %s1655 = scalar_lea.vmem %s699, 16
        %1656 = vst.msk [vmem:[%s1655] sm:$0xff] %vm704, %v1654
        %p1657 = scmp.lt.s32.totalorder %s34, 1
        %s1658 = scalar_select %p1657, %s34, 1
        %s1659 = smul.addr %s1658, 3
        %s1660 = smul.addr %s1659, 8
        %s1661 = scalar_lea.vmem %s19, %s1660
        // Predicated region
        $region125: #{segmenter_forward.2} parent=95 // pred_check
          %p1662 = pneg %p456
        $region126: #{segmenter_forward.2} parent=95 // pred_check_branch
          %1664 = sbr.rel (%p1662) target = $region128
        $region127: #{segmenter_forward.2} parent=95 // pred_region
          _
        $region128: #{segmenter_forward.2} parent=95 // pred_fallthru
          _
      $region96: #{segmenter_forward.2} parent=5 // pred_fallthru
        _
      %p1665 = scmp.le.s32.totalorder 2, %s29
      // Predicated region
      $region129: #{segmenter_forward.2} parent=5 // pred_check
        %p1666 = pneg %p1665
      $region130: #{segmenter_forward.2} parent=5 // pred_check_branch
        %1668 = sbr.rel (%p1666) target = $region132
      $region131: #{segmenter_forward.2} parent=5 // pred_region
        %s1669 = ssub.s32 %s29, 2
        // Predicated region
        $region133: #{segmenter_forward.2} parent=131 // pred_check
          %p1670 = pneg %p462
        $region134: #{segmenter_forward.2} parent=131 // pred_check_branch
          %1672 = sbr.rel (%p1670) target = $region136
        $region135: #{segmenter_forward.2} parent=131 // pred_region
          %p1673 = scmp.lt.s32.totalorder %s35, 1
          %s1674 = scalar_select %p1673, %s35, 1
          %s1675 = smul.addr %s1674, 3
          %s1676 = smul.addr %s1675, 8
          %s1677 = scalar_lea.vmem %s19, %s1676
        $region136: #{segmenter_forward.2} parent=131 // pred_fallthru
          _
      $region132: #{segmenter_forward.2} parent=5 // pred_fallthru
        _
    $region6: #{segmenter_forward.2} parent=1 // loop_footer
      %s33 = sadd.s32 1, %s29
    $region7: #{segmenter_forward.2} parent=1 // loop_footer_branch
      %28 = sbr.rel target = $region3
    $region8: #{segmenter_forward.2} parent=1 // loop_exit
      _
    %1678 = vsyncpa [#allocation5], 1
    %s1679 = scalar_lea.sflag [#allocation5], 1
    %1680 = vsyncpa %s1679, 1
    %1681 = vsyncpa [#allocation7], 1
    %1682 = vsyncpa [#allocation10], 1
    %1683 = vsyncpa [#allocation13], 1

</llo_original>
